<compile_context>
chip_gen: v6e
topology: v6e:2x2x1
jax: 0.10.0
libtpu: 0.0.40
codegen_flags: <defaults>
</compile_context>

<pallas_src>
import functools

import jax
import jax.numpy as jnp
from jax import lax
from jax.experimental import pallas as pl
from jax.experimental.pallas import tpu as pltpu


def _text_analyzer_kernel(
    x_ref,                  # (rows, D_pad)            bf16   rows = block_b * S
    w1_ref, b1_ref,         # (D_pad, H_pad) bf16, (1, H_pad) f32
    w2_ref, b2_ref,         # (H_pad, H_pad) bf16, (1, H_pad) f32
    ln_g_ref, ln_b_ref,     # (1, H_pad) f32  (zero beyond `hidden`)
    wh_ref, bh_ref,         # (H_pad, HW_pad) bf16, (1, HW_pad) f32  fused [wt1 | ws | wy]
    wt2_ref, bt2_ref,       # (HW_pad, T_pad) bf16 (zero rows >= half), (1, T_pad) f32
    pooled_ref,             # (block_b, H_pad)  f32
    tone_ref,               # (block_b, T_pad)  f32
    heads_ref,              # (block_b, HW_pad) f32  [relu(t1) | tanh(sent) | relu(style)]
    *, seq_len, hidden, half, sent_dim,
):
    rows, _ = x_ref.shape
    h_pad = w1_ref.shape[1]
    b_blk = rows // seq_len

    # ---- text_encoder: Linear -> ReLU -> (Dropout = id) -> Linear -> LayerNorm
    h1 = jnp.dot(x_ref[...], w1_ref[...],
                 preferred_element_type=jnp.float32) + b1_ref[...]
    h1 = jnp.maximum(h1, 0.0)

    h2 = jnp.dot(h1.astype(jnp.bfloat16), w2_ref[...],
                 preferred_element_type=jnp.float32) + b2_ref[...]

    # LayerNorm over the true `hidden` columns only (padded h2 columns are exactly 0).
    # Biased variance, eps inside rsqrt — matches PyTorch.
    if h_pad == hidden:
        mu = jnp.mean(h2, axis=-1, keepdims=True)
        centered = h2 - mu
        var = jnp.mean(jnp.square(centered), axis=-1, keepdims=True)
    else:
        inv_h = 1.0 / hidden
        mu = jnp.sum(h2, axis=-1, keepdims=True) * inv_h
        col = lax.broadcasted_iota(jnp.int32, h2.shape, 1)
        mask = (col < hidden).astype(jnp.float32)
        centered = (h2 - mu) * mask
        var = jnp.sum(jnp.square(centered), axis=-1, keepdims=True) * inv_h
    enc = centered * lax.rsqrt(var + 1e-5) * ln_g_ref[...] + ln_b_ref[...]

    # ---- mean-pool over the sequence (rows laid out as [b0:s0..sS-1, b1:..., ...])
    pooled = enc.reshape(b_blk, seq_len, h_pad).sum(axis=1) * (1.0 / seq_len)
    pooled_ref[...] = pooled.astype(pooled_ref.dtype)

    # ---- fused, lane-dense head matmul: [tone_fc1 | sentiment | style]
    c = jnp.dot(pooled.astype(jnp.bfloat16), wh_ref[...],
                preferred_element_type=jnp.float32) + bh_ref[...]
    col = lax.broadcasted_iota(jnp.int32, c.shape, 1)
    is_tanh = (col >= half) & (col < half + sent_dim)
    act = jnp.where(is_tanh, jnp.tanh(c), jnp.maximum(c, 0.0))
    heads_ref[...] = act.astype(heads_ref.dtype)

    # Tone second matmul: wt2 is zero beyond `half` rows / true tone columns, so feeding the
    # whole fused activation is exactly relu(t1) @ wt2.
    tone = jnp.dot(act.astype(jnp.bfloat16), wt2_ref[...],
                   preferred_element_type=jnp.float32) + bt2_ref[...]
    tone_ref[...] = tone.astype(tone_ref.dtype)


def _round_up(n, m):
    return ((n + m - 1) // m) * m


def _pick_block_b(batch, seq, h_pad):
    """Largest batch tile with block_b % 8 == 0 keeping rows/tile in ~128-512, the live f32
    intermediates (h1/h2/enc) modest, and (if possible) >= 2 batch tiles (v7x dual-TC)."""
    budget = 6 << 20                                        # ~6 MiB live f32 per tile
    target_rows = (budget // (12 * max(h_pad, 1))) // 128 * 128
    target_rows = min(512, max(128, target_rows))
    cap = max(1, target_rows // max(seq, 1))
    if batch >= 2:
        cap = min(cap, max(1, batch // 2))                  # keep >= 2 batch tiles
    cands = [d for d in range(1, batch + 1)
             if batch % d == 0 and d <= cap and d % 8 == 0]
    return max(cands) if cands else batch                   # fallback: single full tile


def _vmem_limit_bytes():
    # v5e/v6e: 128 MiB VMEM -> ~96 MiB budget; v7x: 64 MiB -> ~48 MiB.
    try:
        cap = int(pltpu.get_tpu_info().vmem_capacity_bytes)
    except Exception:
        cap = 64 * 1024 * 1024
    return int(min(96 * 1024 * 1024, max(32 * 1024 * 1024, cap * 3 // 4)))


def text_analyzer_forward(x, params, *, block_b=None):
    """x: (B, S, D_in) float32. params: dict of fp32 weights/biases (see make_params)."""
    B, S, D_in = x.shape
    H = params["w1"].shape[1]
    HALF = params["wt1"].shape[1]
    SENT = params["ws"].shape[1]
    STYLE = params["wy"].shape[1]
    T = params["wt2"].shape[1]

    D_pad = _round_up(D_in, 128)
    H_pad = _round_up(H, 128)
    HW = HALF + SENT + STYLE
    HW_pad = _round_up(HW, 128)
    T_pad = _round_up(T, 128)

    if block_b is None:
        block_b = _pick_block_b(B, S, H_pad)
    assert B % block_b == 0
    assert block_b % 8 == 0 or block_b == B
    rows = block_b * S

    bf16, f32 = jnp.bfloat16, jnp.float32

    # ---- zero-pad + pack parameters (bf16 MXU operands, f32 for adds / LN / activations)
    def pad2(a, r, c):
        return jnp.zeros((r, c), f32).at[:a.shape[0], :a.shape[1]].set(a)

    x_flat = jnp.pad(x, ((0, 0), (0, 0), (0, D_pad - D_in))) \
                .reshape(B * S, D_pad).astype(bf16)
    w1 = pad2(params["w1"], D_pad, H_pad).astype(bf16)
    b1 = pad2(params["b1"], 1, H_pad)
    w2 = pad2(params["w2"], H_pad, H_pad).astype(bf16)
    b2 = pad2(params["b2"], 1, H_pad)
    ln_g = pad2(params["ln_g"], 1, H_pad)
    ln_b = pad2(params["ln_b"], 1, H_pad)
    wh = pad2(jnp.concatenate([params["wt1"], params["ws"], params["wy"]], axis=1),
              H_pad, HW_pad).astype(bf16)
    bh = pad2(jnp.concatenate([params["bt1"], params["bs"], params["by"]], axis=1),
              1, HW_pad)
    wt2 = pad2(params["wt2"], HW_pad, T_pad).astype(bf16)     # nonzero only in [:HALF, :T]
    bt2 = pad2(params["bt2"], 1, T_pad)

    args = [x_flat, w1, b1, w2, b2, ln_g, ln_b, wh, bh, wt2, bt2]

    x_spec = pl.BlockSpec((rows, D_pad), lambda bi: (bi, 0))
    out_shapes = (
        jax.ShapeDtypeStruct((B, H_pad), f32),    # pooled text features (padded lanes)
        jax.ShapeDtypeStruct((B, T_pad), f32),    # tone logits (padded lanes)
        jax.ShapeDtypeStruct((B, HW_pad), f32),   # [t1 | sentiment | style] (padded lanes)
    )
    out_specs = (
        pl.BlockSpec((block_b, H_pad), lambda bi: (bi, 0)),
        pl.BlockSpec((block_b, T_pad), lambda bi: (bi, 0)),
        pl.BlockSpec((block_b, HW_pad), lambda bi: (bi, 0)),
    )
    grid = (B // block_b,)

    flops = (2 * B * S * (D_pad * H_pad + H_pad * H_pad)
             + 2 * B * (H_pad * HW_pad + HW_pad * T_pad))
    transcendentals = B * S + B * HW_pad                      # rsqrt + tanh
    bytes_accessed = (sum(a.size * a.dtype.itemsize for a in args)
                      + 4 * (B * H_pad + B * T_pad + B * HW_pad))
    cost = pl.CostEstimate(flops=flops, transcendentals=transcendentals,
                           bytes_accessed=bytes_accessed)

    kernel = functools.partial(_text_analyzer_kernel, seq_len=S, hidden=H,
                               half=HALF, sent_dim=SENT)

    def run(resident_mode):
        if resident_mode is None:
            resident = lambda a: pl.BlockSpec(a.shape, lambda bi: (0, 0))
        else:
            resident = lambda a: pl.BlockSpec(a.shape, lambda bi: (0, 0),
                                              pipeline_mode=resident_mode)
        in_specs = [x_spec] + [resident(a) for a in args[1:]]
        return pl.pallas_call(
            kernel,
            out_shape=out_shapes,
            grid=grid,
            in_specs=in_specs,
            out_specs=out_specs,
            compiler_params=pltpu.CompilerParams(
                dimension_semantics=("parallel",),
                vmem_limit_bytes=_vmem_limit_bytes(),
            ),
            cost_estimate=cost,
        )(*args)

    try:
        # Resident weights never change block index -> single-buffer them (frees VMEM,
        # most valuable on v7x); x keeps default double-buffering.
        pooled, tone, heads = run(pl.Buffered(1))
    except Exception:
        pooled, tone, heads = run(None)

    return {
        "text_features": pooled[:, :H],
        "tone_logits": tone[:, :T],
        "sentiment_embedding": heads[:, HALF:HALF + SENT],
        "style_embedding": heads[:, HALF + SENT:HALF + SENT + STYLE],
    }


def make_params(key, text_feature_dim, hidden, tone_categories, sentiment_dim,
                style_dim):
    """Deterministic synthetic parameters (PyTorch-like scaling), fp32."""
    def linear(k, fan_in, fan_out):
        kw, kb = jax.random.split(k)
        scale = 1.0 / jnp.sqrt(jnp.float32(fan_in))
        w = jax.random.uniform(kw, (fan_in, fan_out), jnp.float32, -scale, scale)
        b = jax.random.uniform(kb, (1, fan_out), jnp.float32, -scale, scale)
        return w, b

    ks = jax.random.split(key, 6)
    p = {}
    p["w1"], p["b1"] = linear(ks[0], text_feature_dim, hidden)
    p["w2"], p["b2"] = linear(ks[1], hidden, hidden)
    p["ln_g"] = jnp.ones((1, hidden), jnp.float32)
    p["ln_b"] = jnp.zeros((1, hidden), jnp.float32)
    p["wt1"], p["bt1"] = linear(ks[2], hidden, hidden // 2)
    p["wt2"], p["bt2"] = linear(ks[3], hidden // 2, tone_categories)
    p["ws"], p["bs"] = linear(ks[4], hidden, sentiment_dim)
    p["wy"], p["by"] = linear(ks[5], hidden, style_dim)
    return p


def reference_forward(x, p):
    """Pure-JAX fp32 reference matching the PyTorch module (eval mode)."""
    h1 = jnp.maximum(jnp.einsum("bsd,dh->bsh", x, p["w1"]) + p["b1"], 0.0)
    h2 = jnp.einsum("bsh,hk->bsk", h1, p["w2"]) + p["b2"]
    mu = jnp.mean(h2, axis=-1, keepdims=True)
    var = jnp.mean((h2 - mu) ** 2, axis=-1, keepdims=True)
    enc = (h2 - mu) * lax.rsqrt(var + 1e-5) * p["ln_g"] + p["ln_b"]
    pooled = jnp.mean(enc, axis=1)
    t1 = jnp.maximum(pooled @ p["wt1"] + p["bt1"], 0.0)
    tone = t1 @ p["wt2"] + p["bt2"]
    sent = jnp.tanh(pooled @ p["ws"] + p["bs"])
    style = jnp.maximum(pooled @ p["wy"] + p["by"], 0.0)
    return {
        "text_features": pooled,
        "tone_logits": tone,
        "sentiment_embedding": sent,
        "style_embedding": style,
    }


if __name__ == "__main__":
    # Small shapes consistent with the module structure. They deliberately exercise the
    # padding paths (H=64 -> 128, D_in=64 -> 128) and a (2,) "parallel" batch grid with
    # 128-row lane-dense matmul tiles.
    B, S = 16, 16
    TEXT_FEATURE_DIM = 64
    HIDDEN = 64
    TONE_CATEGORIES = 10
    SENTIMENT_DIM = 32
    STYLE_DIM = 64

    key = jax.random.PRNGKey(0)
    kx, kp = jax.random.split(key)
    x = jax.random.normal(kx, (B, S, TEXT_FEATURE_DIM), jnp.float32)
    params = make_params(kp, TEXT_FEATURE_DIM, HIDDEN, TONE_CATEGORIES,
                         SENTIMENT_DIM, STYLE_DIM)

    out = text_analyzer_forward(x, params)
    out = jax.tree_util.tree_map(jax.block_until_ready, out)

    ref = reference_forward(x, params)
    for k in ref:
        err = float(jnp.max(jnp.abs(out[k] - ref[k])))
        # bf16 matmul operands with fp32 MXU accumulation -> relaxed tolerance.
        assert jnp.allclose(out[k], ref[k], atol=3e-2, rtol=3e-2), (k, err)

    print("KERNEL_OK")
</pallas_src>

<mosaic_0001>
module attributes {stable_mosaic.version = 11 : i64} {
  func.func @_text_analyzer_kernel(%arg0: i32, %arg1: memref<128x128xbf16, #tpu.memory_space<vmem>>, %arg2: memref<128x128xbf16, #tpu.memory_space<vmem>>, %arg3: memref<1x128xf32, #tpu.memory_space<vmem>>, %arg4: memref<128x128xbf16, #tpu.memory_space<vmem>>, %arg5: memref<1x128xf32, #tpu.memory_space<vmem>>, %arg6: memref<1x128xf32, #tpu.memory_space<vmem>>, %arg7: memref<1x128xf32, #tpu.memory_space<vmem>>, %arg8: memref<128x128xbf16, #tpu.memory_space<vmem>>, %arg9: memref<1x128xf32, #tpu.memory_space<vmem>>, %arg10: memref<128x128xbf16, #tpu.memory_space<vmem>>, %arg11: memref<1x128xf32, #tpu.memory_space<vmem>>, %arg12: memref<8x128xf32, #tpu.memory_space<vmem>>, %arg13: memref<8x128xf32, #tpu.memory_space<vmem>>, %arg14: memref<8x128xf32, #tpu.memory_space<vmem>>) attributes {dimension_semantics = [#tpu.dimension_semantics<parallel>], iteration_bounds = array<i64: 2>, scalar_prefetch = 0 : i64, scratch_operands = 0 : i64, tpu.core_type = #tpu.core_type<tc>, window_params = [{transform_indices = @transform_0, window_bounds = array<i64: 128, 128>}, {pipeline_mode = #tpu.pipeline_mode<synchronous>, transform_indices = @transform_1, window_bounds = array<i64: 128, 128>}, {pipeline_mode = #tpu.pipeline_mode<synchronous>, transform_indices = @transform_2, window_bounds = array<i64: 1, 128>}, {pipeline_mode = #tpu.pipeline_mode<synchronous>, transform_indices = @transform_3, window_bounds = array<i64: 128, 128>}, {pipeline_mode = #tpu.pipeline_mode<synchronous>, transform_indices = @transform_4, window_bounds = array<i64: 1, 128>}, {pipeline_mode = #tpu.pipeline_mode<synchronous>, transform_indices = @transform_5, window_bounds = array<i64: 1, 128>}, {pipeline_mode = #tpu.pipeline_mode<synchronous>, transform_indices = @transform_6, window_bounds = array<i64: 1, 128>}, {pipeline_mode = #tpu.pipeline_mode<synchronous>, transform_indices = @transform_7, window_bounds = array<i64: 128, 128>}, {pipeline_mode = #tpu.pipeline_mode<synchronous>, transform_indices = @transform_8, window_bounds = array<i64: 1, 128>}, {pipeline_mode = #tpu.pipeline_mode<synchronous>, transform_indices = @transform_9, window_bounds = array<i64: 128, 128>}, {pipeline_mode = #tpu.pipeline_mode<synchronous>, transform_indices = @transform_10, window_bounds = array<i64: 1, 128>}, {transform_indices = @transform_11, window_bounds = array<i64: 8, 128>}, {transform_indices = @transform_12, window_bounds = array<i64: 8, 128>}, {transform_indices = @transform_13, window_bounds = array<i64: 8, 128>}]} {
    %c0 = arith.constant 0 : index
    %c0_0 = arith.constant 0 : index
    %0 = vector.load %arg1[%c0, %c0_0] : memref<128x128xbf16, #tpu.memory_space<vmem>>, vector<128x128xbf16>
    %c0_1 = arith.constant 0 : index
    %c0_2 = arith.constant 0 : index
    %1 = vector.load %arg2[%c0_1, %c0_2] : memref<128x128xbf16, #tpu.memory_space<vmem>>, vector<128x128xbf16>
    %cst = arith.constant dense<0.000000e+00> : vector<128x128xf32>
    %2 = tpu.matmul %0, %1, %cst {dimension_numbers = #tpu.dot_dimension_numbers<[1], [0], [0], [1], [0, 0, 1, 1], [], []>} : vector<128x128xbf16>, vector<128x128xbf16>, vector<128x128xf32> -> vector<128x128xf32>
    %c0_3 = arith.constant 0 : index
    %c0_4 = arith.constant 0 : index
    %3 = vector.load %arg3[%c0_3, %c0_4] : memref<1x128xf32, #tpu.memory_space<vmem>>, vector<1x128xf32>
    %4 = vector.broadcast %3 : vector<1x128xf32> to vector<128x128xf32>
    %5 = arith.addf %2, %4 : vector<128x128xf32>
    %cst_5 = arith.constant 0.000000e+00 : f32
    %6 = vector.broadcast %cst_5 : f32 to vector<128x128xf32>
    %7 = arith.maximumf %5, %6 : vector<128x128xf32>
    %8 = arith.truncf %7 : vector<128x128xf32> to vector<128x128xbf16>
    %c0_6 = arith.constant 0 : index
    %c0_7 = arith.constant 0 : index
    %9 = vector.load %arg4[%c0_6, %c0_7] : memref<128x128xbf16, #tpu.memory_space<vmem>>, vector<128x128xbf16>
    %cst_8 = arith.constant dense<0.000000e+00> : vector<128x128xf32>
    %10 = tpu.matmul %8, %9, %cst_8 {dimension_numbers = #tpu.dot_dimension_numbers<[1], [0], [0], [1], [0, 0, 1, 1], [], []>} : vector<128x128xbf16>, vector<128x128xbf16>, vector<128x128xf32> -> vector<128x128xf32>
    %c0_9 = arith.constant 0 : index
    %c0_10 = arith.constant 0 : index
    %11 = vector.load %arg5[%c0_9, %c0_10] : memref<1x128xf32, #tpu.memory_space<vmem>>, vector<1x128xf32>
    %12 = vector.broadcast %11 : vector<1x128xf32> to vector<128x128xf32>
    %13 = arith.addf %10, %12 : vector<128x128xf32>
    %cst_11 = arith.constant dense<0.000000e+00> : vector<128xf32>
    %14 = vector.multi_reduction <add>, %13, %cst_11 [1] : vector<128x128xf32> to vector<128xf32>
    %15 = vector.shape_cast %14 : vector<128xf32> to vector<128x1xf32>
    %cst_12 = arith.constant 1.562500e-02 : f32
    %16 = vector.broadcast %cst_12 : f32 to vector<128x1xf32>
    %17 = arith.mulf %15, %16 : vector<128x1xf32>
    %18 = tpu.iota {dimensions = array<i32: 1>} : vector<128x128xi32>
    %c64_i32 = arith.constant 64 : i32
    %19 = vector.broadcast %c64_i32 : i32 to vector<128x128xi32>
    %20 = arith.cmpi slt, %18, %19 : vector<128x128xi32>
    %21 = arith.extui %20 : vector<128x128xi1> to vector<128x128xi32>
    %22 = arith.sitofp %21 : vector<128x128xi32> to vector<128x128xf32>
    %23 = vector.broadcast %17 : vector<128x1xf32> to vector<128x128xf32>
    %24 = arith.subf %13, %23 : vector<128x128xf32>
    %25 = arith.mulf %24, %22 : vector<128x128xf32>
    %26 = arith.mulf %25, %25 : vector<128x128xf32>
    %cst_13 = arith.constant dense<0.000000e+00> : vector<128xf32>
    %27 = vector.multi_reduction <add>, %26, %cst_13 [1] : vector<128x128xf32> to vector<128xf32>
    %28 = vector.shape_cast %27 : vector<128xf32> to vector<128x1xf32>
    %cst_14 = arith.constant 1.562500e-02 : f32
    %29 = vector.broadcast %cst_14 : f32 to vector<128x1xf32>
    %30 = arith.mulf %28, %29 : vector<128x1xf32>
    %cst_15 = arith.constant 9.99999974E-6 : f32
    %31 = vector.broadcast %cst_15 : f32 to vector<128x1xf32>
    %32 = arith.addf %30, %31 : vector<128x1xf32>
    %33 = math.rsqrt %32 : vector<128x1xf32>
    %34 = vector.broadcast %33 : vector<128x1xf32> to vector<128x128xf32>
    %35 = arith.mulf %25, %34 : vector<128x128xf32>
    %c0_16 = arith.constant 0 : index
    %c0_17 = arith.constant 0 : index
    %36 = vector.load %arg6[%c0_16, %c0_17] : memref<1x128xf32, #tpu.memory_space<vmem>>, vector<1x128xf32>
    %37 = vector.broadcast %36 : vector<1x128xf32> to vector<128x128xf32>
    %38 = arith.mulf %35, %37 : vector<128x128xf32>
    %c0_18 = arith.constant 0 : index
    %c0_19 = arith.constant 0 : index
    %39 = vector.load %arg7[%c0_18, %c0_19] : memref<1x128xf32, #tpu.memory_space<vmem>>, vector<1x128xf32>
    %40 = vector.broadcast %39 : vector<1x128xf32> to vector<128x128xf32>
    %41 = arith.addf %38, %40 : vector<128x128xf32>
    %42 = vector.shape_cast %41 : vector<128x128xf32> to vector<8x16x128xf32>
    %cst_20 = arith.constant dense<0.000000e+00> : vector<8x128xf32>
    %43 = vector.multi_reduction <add>, %42, %cst_20 [1] : vector<8x16x128xf32> to vector<8x128xf32>
    %cst_21 = arith.constant 6.250000e-02 : f32
    %44 = vector.broadcast %cst_21 : f32 to vector<8x128xf32>
    %45 = arith.mulf %43, %44 : vector<8x128xf32>
    %c0_22 = arith.constant 0 : index
    %c0_23 = arith.constant 0 : index
    %46 = vector.load %arg12[%c0_22, %c0_23] : memref<8x128xf32, #tpu.memory_space<vmem>>, vector<8x128xf32>
    tpu.vector_store %arg12[%c0_22, %c0_23], %45 {strides = array<i32>} : memref<8x128xf32, #tpu.memory_space<vmem>>, vector<8x128xf32>,
    %47 = arith.truncf %45 : vector<8x128xf32> to vector<8x128xbf16>
    %c0_24 = arith.constant 0 : index
    %c0_25 = arith.constant 0 : index
    %48 = vector.load %arg8[%c0_24, %c0_25] : memref<128x128xbf16, #tpu.memory_space<vmem>>, vector<128x128xbf16>
    %cst_26 = arith.constant dense<0.000000e+00> : vector<8x128xf32>
    %49 = tpu.matmul %47, %48, %cst_26 {dimension_numbers = #tpu.dot_dimension_numbers<[1], [0], [0], [1], [0, 0, 1, 1], [], []>} : vector<8x128xbf16>, vector<128x128xbf16>, vector<8x128xf32> -> vector<8x128xf32>
    %c0_27 = arith.constant 0 : index
    %c0_28 = arith.constant 0 : index
    %50 = vector.load %arg9[%c0_27, %c0_28] : memref<1x128xf32, #tpu.memory_space<vmem>>, vector<1x128xf32>
    %51 = vector.broadcast %50 : vector<1x128xf32> to vector<8x128xf32>
    %52 = arith.addf %49, %51 : vector<8x128xf32>
    %53 = tpu.iota {dimensions = array<i32: 1>} : vector<8x128xi32>
    %c32_i32 = arith.constant 32 : i32
    %54 = vector.broadcast %c32_i32 : i32 to vector<8x128xi32>
    %55 = arith.cmpi sge, %53, %54 : vector<8x128xi32>
    %c64_i32_29 = arith.constant 64 : i32
    %56 = vector.broadcast %c64_i32_29 : i32 to vector<8x128xi32>
    %57 = arith.cmpi slt, %53, %56 : vector<8x128xi32>
    %58 = arith.andi %55, %57 : vector<8x128xi1>
    %59 = math.tanh %52 : vector<8x128xf32>
    %cst_30 = arith.constant 0.000000e+00 : f32
    %60 = vector.broadcast %cst_30 : f32 to vector<8x128xf32>
    %61 = arith.maximumf %52, %60 : vector<8x128xf32>
    %62 = arith.select %58, %59, %61 : vector<8x128xi1>, vector<8x128xf32>
    %c0_31 = arith.constant 0 : index
    %c0_32 = arith.constant 0 : index
    %63 = vector.load %arg14[%c0_31, %c0_32] : memref<8x128xf32, #tpu.memory_space<vmem>>, vector<8x128xf32>
    tpu.vector_store %arg14[%c0_31, %c0_32], %62 {strides = array<i32>} : memref<8x128xf32, #tpu.memory_space<vmem>>, vector<8x128xf32>,
    %64 = arith.truncf %62 : vector<8x128xf32> to vector<8x128xbf16>
    %c0_33 = arith.constant 0 : index
    %c0_34 = arith.constant 0 : index
    %65 = vector.load %arg10[%c0_33, %c0_34] : memref<128x128xbf16, #tpu.memory_space<vmem>>, vector<128x128xbf16>
    %cst_35 = arith.constant dense<0.000000e+00> : vector<8x128xf32>
    %66 = tpu.matmul %64, %65, %cst_35 {dimension_numbers = #tpu.dot_dimension_numbers<[1], [0], [0], [1], [0, 0, 1, 1], [], []>} : vector<8x128xbf16>, vector<128x128xbf16>, vector<8x128xf32> -> vector<8x128xf32>
    %c0_36 = arith.constant 0 : index
    %c0_37 = arith.constant 0 : index
    %67 = vector.load %arg11[%c0_36, %c0_37] : memref<1x128xf32, #tpu.memory_space<vmem>>, vector<1x128xf32>
    %68 = vector.broadcast %67 : vector<1x128xf32> to vector<8x128xf32>
    %69 = arith.addf %66, %68 : vector<8x128xf32>
    %c0_38 = arith.constant 0 : index
    %c0_39 = arith.constant 0 : index
    %70 = vector.load %arg13[%c0_38, %c0_39] : memref<8x128xf32, #tpu.memory_space<vmem>>, vector<8x128xf32>
    tpu.vector_store %arg13[%c0_38, %c0_39], %69 {strides = array<i32>} : memref<8x128xf32, #tpu.memory_space<vmem>>, vector<8x128xf32>,
    return
  }
  func.func @transform_0(%arg0: i32) -> (i32, i32) {
    %c0_i32 = arith.constant 0 : i32
    %c0_i32_0 = arith.constant 0 : i32
    return %arg0, %c0_i32 : i32, i32
  }
  func.func @transform_1(%arg0: i32) -> (i32, i32) {
    %c0_i32 = arith.constant 0 : i32
    %c0_i32_0 = arith.constant 0 : i32
    %c0_i32_1 = arith.constant 0 : i32
    return %c0_i32, %c0_i32_0 : i32, i32
  }
  func.func @transform_2(%arg0: i32) -> (i32, i32) {
    %c0_i32 = arith.constant 0 : i32
    %c0_i32_0 = arith.constant 0 : i32
    %c0_i32_1 = arith.constant 0 : i32
    return %c0_i32, %c0_i32_0 : i32, i32
  }
  func.func @transform_3(%arg0: i32) -> (i32, i32) {
    %c0_i32 = arith.constant 0 : i32
    %c0_i32_0 = arith.constant 0 : i32
    %c0_i32_1 = arith.constant 0 : i32
    return %c0_i32, %c0_i32_0 : i32, i32
  }
  func.func @transform_4(%arg0: i32) -> (i32, i32) {
    %c0_i32 = arith.constant 0 : i32
    %c0_i32_0 = arith.constant 0 : i32
    %c0_i32_1 = arith.constant 0 : i32
    return %c0_i32, %c0_i32_0 : i32, i32
  }
  func.func @transform_5(%arg0: i32) -> (i32, i32) {
    %c0_i32 = arith.constant 0 : i32
    %c0_i32_0 = arith.constant 0 : i32
    %c0_i32_1 = arith.constant 0 : i32
    return %c0_i32, %c0_i32_0 : i32, i32
  }
  func.func @transform_6(%arg0: i32) -> (i32, i32) {
    %c0_i32 = arith.constant 0 : i32
    %c0_i32_0 = arith.constant 0 : i32
    %c0_i32_1 = arith.constant 0 : i32
    return %c0_i32, %c0_i32_0 : i32, i32
  }
  func.func @transform_7(%arg0: i32) -> (i32, i32) {
    %c0_i32 = arith.constant 0 : i32
    %c0_i32_0 = arith.constant 0 : i32
    %c0_i32_1 = arith.constant 0 : i32
    return %c0_i32, %c0_i32_0 : i32, i32
  }
  func.func @transform_8(%arg0: i32) -> (i32, i32) {
    %c0_i32 = arith.constant 0 : i32
    %c0_i32_0 = arith.constant 0 : i32
    %c0_i32_1 = arith.constant 0 : i32
    return %c0_i32, %c0_i32_0 : i32, i32
  }
  func.func @transform_9(%arg0: i32) -> (i32, i32) {
    %c0_i32 = arith.constant 0 : i32
    %c0_i32_0 = arith.constant 0 : i32
    %c0_i32_1 = arith.constant 0 : i32
    return %c0_i32, %c0_i32_0 : i32, i32
  }
  func.func @transform_10(%arg0: i32) -> (i32, i32) {
    %c0_i32 = arith.constant 0 : i32
    %c0_i32_0 = arith.constant 0 : i32
    %c0_i32_1 = arith.constant 0 : i32
    return %c0_i32, %c0_i32_0 : i32, i32
  }
  func.func @transform_11(%arg0: i32) -> (i32, i32) {
    %c0_i32 = arith.constant 0 : i32
    %c0_i32_0 = arith.constant 0 : i32
    return %arg0, %c0_i32 : i32, i32
  }
  func.func @transform_12(%arg0: i32) -> (i32, i32) {
    %c0_i32 = arith.constant 0 : i32
    %c0_i32_0 = arith.constant 0 : i32
    return %arg0, %c0_i32 : i32, i32
  }
  func.func @transform_13(%arg0: i32) -> (i32, i32) {
    %c0_i32 = arith.constant 0 : i32
    %c0_i32_0 = arith.constant 0 : i32
    return %arg0, %c0_i32 : i32, i32
  }
}

module attributes {stable_mosaic.version = 11 : i64} {
  func.func @_text_analyzer_kernel(%arg0: i32, %arg1: memref<128x128xbf16, #tpu.memory_space<vmem>>, %arg2: memref<128x128xbf16, #tpu.memory_space<vmem>>, %arg3: memref<1x128xf32, #tpu.memory_space<vmem>>, %arg4: memref<128x128xbf16, #tpu.memory_space<vmem>>, %arg5: memref<1x128xf32, #tpu.memory_space<vmem>>, %arg6: memref<1x128xf32, #tpu.memory_space<vmem>>, %arg7: memref<1x128xf32, #tpu.memory_space<vmem>>, %arg8: memref<128x128xbf16, #tpu.memory_space<vmem>>, %arg9: memref<1x128xf32, #tpu.memory_space<vmem>>, %arg10: memref<128x128xbf16, #tpu.memory_space<vmem>>, %arg11: memref<1x128xf32, #tpu.memory_space<vmem>>, %arg12: memref<8x128xf32, #tpu.memory_space<vmem>>, %arg13: memref<8x128xf32, #tpu.memory_space<vmem>>, %arg14: memref<8x128xf32, #tpu.memory_space<vmem>>) attributes {dimension_semantics = [#tpu.dimension_semantics<parallel>], iteration_bounds = array<i64: 2>, scalar_prefetch = 0 : i64, scratch_operands = 0 : i64, tpu.core_type = #tpu.core_type<tc>, window_params = [{transform_indices = @transform_0, window_bounds = array<i64: 128, 128>}, {pipeline_mode = #tpu.pipeline_mode<synchronous>, transform_indices = @transform_1, window_bounds = array<i64: 128, 128>}, {pipeline_mode = #tpu.pipeline_mode<synchronous>, transform_indices = @transform_2, window_bounds = array<i64: 1, 128>}, {pipeline_mode = #tpu.pipeline_mode<synchronous>, transform_indices = @transform_3, window_bounds = array<i64: 128, 128>}, {pipeline_mode = #tpu.pipeline_mode<synchronous>, transform_indices = @transform_4, window_bounds = array<i64: 1, 128>}, {pipeline_mode = #tpu.pipeline_mode<synchronous>, transform_indices = @transform_5, window_bounds = array<i64: 1, 128>}, {pipeline_mode = #tpu.pipeline_mode<synchronous>, transform_indices = @transform_6, window_bounds = array<i64: 1, 128>}, {pipeline_mode = #tpu.pipeline_mode<synchronous>, transform_indices = @transform_7, window_bounds = array<i64: 128, 128>}, {pipeline_mode = #tpu.pipeline_mode<synchronous>, transform_indices = @transform_8, window_bounds = array<i64: 1, 128>}, {pipeline_mode = #tpu.pipeline_mode<synchronous>, transform_indices = @transform_9, window_bounds = array<i64: 128, 128>}, {pipeline_mode = #tpu.pipeline_mode<synchronous>, transform_indices = @transform_10, window_bounds = array<i64: 1, 128>}, {transform_indices = @transform_11, window_bounds = array<i64: 8, 128>}, {transform_indices = @transform_12, window_bounds = array<i64: 8, 128>}, {transform_indices = @transform_13, window_bounds = array<i64: 8, 128>}]} {
    %c0 = arith.constant 0 : index
    %c0_0 = arith.constant 0 : index
    %0 = vector.load %arg1[%c0, %c0_0] : memref<128x128xbf16, #tpu.memory_space<vmem>>, vector<128x128xbf16>
    %c0_1 = arith.constant 0 : index
    %c0_2 = arith.constant 0 : index
    %1 = vector.load %arg2[%c0_1, %c0_2] : memref<128x128xbf16, #tpu.memory_space<vmem>>, vector<128x128xbf16>
    %cst = arith.constant dense<0.000000e+00> : vector<128x128xf32>
    %2 = tpu.matmul %0, %1, %cst {dimension_numbers = #tpu.dot_dimension_numbers<[1], [0], [0], [1], [0, 0, 1, 1], [], []>} : vector<128x128xbf16>, vector<128x128xbf16>, vector<128x128xf32> -> vector<128x128xf32>
    %c0_3 = arith.constant 0 : index
    %c0_4 = arith.constant 0 : index
    %3 = vector.load %arg3[%c0_3, %c0_4] : memref<1x128xf32, #tpu.memory_space<vmem>>, vector<1x128xf32>
    %4 = vector.broadcast %3 : vector<1x128xf32> to vector<128x128xf32>
    %5 = arith.addf %2, %4 : vector<128x128xf32>
    %cst_5 = arith.constant 0.000000e+00 : f32
    %6 = vector.broadcast %cst_5 : f32 to vector<128x128xf32>
    %7 = arith.maximumf %5, %6 : vector<128x128xf32>
    %8 = arith.truncf %7 : vector<128x128xf32> to vector<128x128xbf16>
    %c0_6 = arith.constant 0 : index
    %c0_7 = arith.constant 0 : index
    %9 = vector.load %arg4[%c0_6, %c0_7] : memref<128x128xbf16, #tpu.memory_space<vmem>>, vector<128x128xbf16>
    %cst_8 = arith.constant dense<0.000000e+00> : vector<128x128xf32>
    %10 = tpu.matmul %8, %9, %cst_8 {dimension_numbers = #tpu.dot_dimension_numbers<[1], [0], [0], [1], [0, 0, 1, 1], [], []>} : vector<128x128xbf16>, vector<128x128xbf16>, vector<128x128xf32> -> vector<128x128xf32>
    %c0_9 = arith.constant 0 : index
    %c0_10 = arith.constant 0 : index
    %11 = vector.load %arg5[%c0_9, %c0_10] : memref<1x128xf32, #tpu.memory_space<vmem>>, vector<1x128xf32>
    %12 = vector.broadcast %11 : vector<1x128xf32> to vector<128x128xf32>
    %13 = arith.addf %10, %12 : vector<128x128xf32>
    %cst_11 = arith.constant dense<0.000000e+00> : vector<128xf32>
    %14 = vector.multi_reduction <add>, %13, %cst_11 [1] : vector<128x128xf32> to vector<128xf32>
    %15 = vector.shape_cast %14 : vector<128xf32> to vector<128x1xf32>
    %cst_12 = arith.constant 1.562500e-02 : f32
    %16 = vector.broadcast %cst_12 : f32 to vector<128x1xf32>
    %17 = arith.mulf %15, %16 : vector<128x1xf32>
    %18 = tpu.iota {dimensions = array<i32: 1>} : vector<128x128xi32>
    %c64_i32 = arith.constant 64 : i32
    %19 = vector.broadcast %c64_i32 : i32 to vector<128x128xi32>
    %20 = arith.cmpi slt, %18, %19 : vector<128x128xi32>
    %21 = arith.extui %20 : vector<128x128xi1> to vector<128x128xi32>
    %22 = arith.sitofp %21 : vector<128x128xi32> to vector<128x128xf32>
    %23 = vector.broadcast %17 : vector<128x1xf32> to vector<128x128xf32>
    %24 = arith.subf %13, %23 : vector<128x128xf32>
    %25 = arith.mulf %24, %22 : vector<128x128xf32>
    %26 = arith.mulf %25, %25 : vector<128x128xf32>
    %cst_13 = arith.constant dense<0.000000e+00> : vector<128xf32>
    %27 = vector.multi_reduction <add>, %26, %cst_13 [1] : vector<128x128xf32> to vector<128xf32>
    %28 = vector.shape_cast %27 : vector<128xf32> to vector<128x1xf32>
    %cst_14 = arith.constant 1.562500e-02 : f32
    %29 = vector.broadcast %cst_14 : f32 to vector<128x1xf32>
    %30 = arith.mulf %28, %29 : vector<128x1xf32>
    %cst_15 = arith.constant 9.99999974E-6 : f32
    %31 = vector.broadcast %cst_15 : f32 to vector<128x1xf32>
    %32 = arith.addf %30, %31 : vector<128x1xf32>
    %33 = math.rsqrt %32 : vector<128x1xf32>
    %34 = vector.broadcast %33 : vector<128x1xf32> to vector<128x128xf32>
    %35 = arith.mulf %25, %34 : vector<128x128xf32>
    %c0_16 = arith.constant 0 : index
    %c0_17 = arith.constant 0 : index
    %36 = vector.load %arg6[%c0_16, %c0_17] : memref<1x128xf32, #tpu.memory_space<vmem>>, vector<1x128xf32>
    %37 = vector.broadcast %36 : vector<1x128xf32> to vector<128x128xf32>
    %38 = arith.mulf %35, %37 : vector<128x128xf32>
    %c0_18 = arith.constant 0 : index
    %c0_19 = arith.constant 0 : index
    %39 = vector.load %arg7[%c0_18, %c0_19] : memref<1x128xf32, #tpu.memory_space<vmem>>, vector<1x128xf32>
    %40 = vector.broadcast %39 : vector<1x128xf32> to vector<128x128xf32>
    %41 = arith.addf %38, %40 : vector<128x128xf32>
    %42 = vector.shape_cast %41 : vector<128x128xf32> to vector<8x16x128xf32>
    %cst_20 = arith.constant dense<0.000000e+00> : vector<8x128xf32>
    %43 = vector.multi_reduction <add>, %42, %cst_20 [1] : vector<8x16x128xf32> to vector<8x128xf32>
    %cst_21 = arith.constant 6.250000e-02 : f32
    %44 = vector.broadcast %cst_21 : f32 to vector<8x128xf32>
    %45 = arith.mulf %43, %44 : vector<8x128xf32>
    %c0_22 = arith.constant 0 : index
    %c0_23 = arith.constant 0 : index
    %46 = vector.load %arg12[%c0_22, %c0_23] : memref<8x128xf32, #tpu.memory_space<vmem>>, vector<8x128xf32>
    tpu.vector_store %arg12[%c0_22, %c0_23], %45 {strides = array<i32>} : memref<8x128xf32, #tpu.memory_space<vmem>>, vector<8x128xf32>,
    %47 = arith.truncf %45 : vector<8x128xf32> to vector<8x128xbf16>
    %c0_24 = arith.constant 0 : index
    %c0_25 = arith.constant 0 : index
    %48 = vector.load %arg8[%c0_24, %c0_25] : memref<128x128xbf16, #tpu.memory_space<vmem>>, vector<128x128xbf16>
    %cst_26 = arith.constant dense<0.000000e+00> : vector<8x128xf32>
    %49 = tpu.matmul %47, %48, %cst_26 {dimension_numbers = #tpu.dot_dimension_numbers<[1], [0], [0], [1], [0, 0, 1, 1], [], []>} : vector<8x128xbf16>, vector<128x128xbf16>, vector<8x128xf32> -> vector<8x128xf32>
    %c0_27 = arith.constant 0 : index
    %c0_28 = arith.constant 0 : index
    %50 = vector.load %arg9[%c0_27, %c0_28] : memref<1x128xf32, #tpu.memory_space<vmem>>, vector<1x128xf32>
    %51 = vector.broadcast %50 : vector<1x128xf32> to vector<8x128xf32>
    %52 = arith.addf %49, %51 : vector<8x128xf32>
    %53 = tpu.iota {dimensions = array<i32: 1>} : vector<8x128xi32>
    %c32_i32 = arith.constant 32 : i32
    %54 = vector.broadcast %c32_i32 : i32 to vector<8x128xi32>
    %55 = arith.cmpi sge, %53, %54 : vector<8x128xi32>
    %c64_i32_29 = arith.constant 64 : i32
    %56 = vector.broadcast %c64_i32_29 : i32 to vector<8x128xi32>
    %57 = arith.cmpi slt, %53, %56 : vector<8x128xi32>
    %58 = arith.andi %55, %57 : vector<8x128xi1>
    %59 = math.tanh %52 : vector<8x128xf32>
    %cst_30 = arith.constant 0.000000e+00 : f32
    %60 = vector.broadcast %cst_30 : f32 to vector<8x128xf32>
    %61 = arith.maximumf %52, %60 : vector<8x128xf32>
    %62 = arith.select %58, %59, %61 : vector<8x128xi1>, vector<8x128xf32>
    %c0_31 = arith.constant 0 : index
    %c0_32 = arith.constant 0 : index
    %63 = vector.load %arg14[%c0_31, %c0_32] : memref<8x128xf32, #tpu.memory_space<vmem>>, vector<8x128xf32>
    tpu.vector_store %arg14[%c0_31, %c0_32], %62 {strides = array<i32>} : memref<8x128xf32, #tpu.memory_space<vmem>>, vector<8x128xf32>,
    %64 = arith.truncf %62 : vector<8x128xf32> to vector<8x128xbf16>
    %c0_33 = arith.constant 0 : index
    %c0_34 = arith.constant 0 : index
    %65 = vector.load %arg10[%c0_33, %c0_34] : memref<128x128xbf16, #tpu.memory_space<vmem>>, vector<128x128xbf16>
    %cst_35 = arith.constant dense<0.000000e+00> : vector<8x128xf32>
    %66 = tpu.matmul %64, %65, %cst_35 {dimension_numbers = #tpu.dot_dimension_numbers<[1], [0], [0], [1], [0, 0, 1, 1], [], []>} : vector<8x128xbf16>, vector<128x128xbf16>, vector<8x128xf32> -> vector<8x128xf32>
    %c0_36 = arith.constant 0 : index
    %c0_37 = arith.constant 0 : index
    %67 = vector.load %arg11[%c0_36, %c0_37] : memref<1x128xf32, #tpu.memory_space<vmem>>, vector<1x128xf32>
    %68 = vector.broadcast %67 : vector<1x128xf32> to vector<8x128xf32>
    %69 = arith.addf %66, %68 : vector<8x128xf32>
    %c0_38 = arith.constant 0 : index
    %c0_39 = arith.constant 0 : index
    %70 = vector.load %arg13[%c0_38, %c0_39] : memref<8x128xf32, #tpu.memory_space<vmem>>, vector<8x128xf32>
    tpu.vector_store %arg13[%c0_38, %c0_39], %69 {strides = array<i32>} : memref<8x128xf32, #tpu.memory_space<vmem>>, vector<8x128xf32>,
    return
  }
  func.func @transform_0(%arg0: i32) -> (i32, i32) {
    %c0_i32 = arith.constant 0 : i32
    %c0_i32_0 = arith.constant 0 : i32
    return %arg0, %c0_i32 : i32, i32
  }
  func.func @transform_1(%arg0: i32) -> (i32, i32) {
    %c0_i32 = arith.constant 0 : i32
    %c0_i32_0 = arith.constant 0 : i32
    %c0_i32_1 = arith.constant 0 : i32
    return %c0_i32, %c0_i32_0 : i32, i32
  }
  func.func @transform_2(%arg0: i32) -> (i32, i32) {
    %c0_i32 = arith.constant 0 : i32
    %c0_i32_0 = arith.constant 0 : i32
    %c0_i32_1 = arith.constant 0 : i32
    return %c0_i32, %c0_i32_0 : i32, i32
  }
  func.func @transform_3(%arg0: i32) -> (i32, i32) {
    %c0_i32 = arith.constant 0 : i32
    %c0_i32_0 = arith.constant 0 : i32
    %c0_i32_1 = arith.constant 0 : i32
    return %c0_i32, %c0_i32_0 : i32, i32
  }
  func.func @transform_4(%arg0: i32) -> (i32, i32) {
    %c0_i32 = arith.constant 0 : i32
    %c0_i32_0 = arith.constant 0 : i32
    %c0_i32_1 = arith.constant 0 : i32
    return %c0_i32, %c0_i32_0 : i32, i32
  }
  func.func @transform_5(%arg0: i32) -> (i32, i32) {
    %c0_i32 = arith.constant 0 : i32
    %c0_i32_0 = arith.constant 0 : i32
    %c0_i32_1 = arith.constant 0 : i32
    return %c0_i32, %c0_i32_0 : i32, i32
  }
  func.func @transform_6(%arg0: i32) -> (i32, i32) {
    %c0_i32 = arith.constant 0 : i32
    %c0_i32_0 = arith.constant 0 : i32
    %c0_i32_1 = arith.constant 0 : i32
    return %c0_i32, %c0_i32_0 : i32, i32
  }
  func.func @transform_7(%arg0: i32) -> (i32, i32) {
    %c0_i32 = arith.constant 0 : i32
    %c0_i32_0 = arith.constant 0 : i32
    %c0_i32_1 = arith.constant 0 : i32
    return %c0_i32, %c0_i32_0 : i32, i32
  }
  func.func @transform_8(%arg0: i32) -> (i32, i32) {
    %c0_i32 = arith.constant 0 : i32
    %c0_i32_0 = arith.constant 0 : i32
    %c0_i32_1 = arith.constant 0 : i32
    return %c0_i32, %c0_i32_0 : i32, i32
  }
  func.func @transform_9(%arg0: i32) -> (i32, i32) {
    %c0_i32 = arith.constant 0 : i32
    %c0_i32_0 = arith.constant 0 : i32
    %c0_i32_1 = arith.constant 0 : i32
    return %c0_i32, %c0_i32_0 : i32, i32
  }
  func.func @transform_10(%arg0: i32) -> (i32, i32) {
    %c0_i32 = arith.constant 0 : i32
    %c0_i32_0 = arith.constant 0 : i32
    %c0_i32_1 = arith.constant 0 : i32
    return %c0_i32, %c0_i32_0 : i32, i32
  }
  func.func @transform_11(%arg0: i32) -> (i32, i32) {
    %c0_i32 = arith.constant 0 : i32
    %c0_i32_0 = arith.constant 0 : i32
    return %arg0, %c0_i32 : i32, i32
  }
  func.func @transform_12(%arg0: i32) -> (i32, i32) {
    %c0_i32 = arith.constant 0 : i32
    %c0_i32_0 = arith.constant 0 : i32
    return %arg0, %c0_i32 : i32, i32
  }
  func.func @transform_13(%arg0: i32) -> (i32, i32) {
    %c0_i32 = arith.constant 0 : i32
    %c0_i32_0 = arith.constant 0 : i32
    return %arg0, %c0_i32 : i32, i32
  }
}

</mosaic_0001>

<llo_original>
// kernel: tpu_custom_call.1
$region0: #{tpu_custom_call.1}
  #allocation0 [shape = 'u32[]', space=smem, size = 0x4, offset = 0x4, fixed_abs, tag = 'smem constant byte address 0x4 - core index']
  #allocation1 [shape = 'u32[144,128]{1,0:T(1,128)}', space=vmem, size = 0x12000, scoped, tag = 'internal scratch']
  %s0 = inlined_call_operand.hbm [shape: bf16[256,128], index: 0, kind: input, shape index: {}]
  %s1 = inlined_call_operand.hbm [shape: bf16[128,128], index: 1, kind: input, shape index: {}]
  %s2 = inlined_call_operand.vmem [shape: f32[1,128], index: 2, kind: input, shape index: {}]
  %s3 = inlined_call_operand.hbm [shape: bf16[128,128], index: 3, kind: input, shape index: {}]
  %s4 = inlined_call_operand.vmem [shape: f32[1,128], index: 4, kind: input, shape index: {}]
  %s5 = inlined_call_operand.vmem [shape: f32[1,128], index: 5, kind: input, shape index: {}]
  %s6 = inlined_call_operand.vmem [shape: f32[1,128], index: 6, kind: input, shape index: {}]
  %s7 = inlined_call_operand.hbm [shape: bf16[128,128], index: 7, kind: input, shape index: {}]
  %s8 = inlined_call_operand.vmem [shape: f32[1,128], index: 8, kind: input, shape index: {}]
  %s9 = inlined_call_operand.hbm [shape: bf16[128,128], index: 9, kind: input, shape index: {}]
  %s10 = inlined_call_operand.vmem [shape: f32[1,128], index: 10, kind: input, shape index: {}]
  %s11 = inlined_call_operand.hbm [shape: f32[16,128], index: 11, kind: output, shape index: {0}]
  %s12 = inlined_call_operand.hbm [shape: f32[16,128], index: 12, kind: output, shape index: {1}]
  %s13 = inlined_call_operand.hbm [shape: f32[16,128], index: 13, kind: output, shape index: {2}]
  %14 = xla_tuple %s11, %s12, %s13
  %s15 = sld [smem:[#allocation0]]
  $region113: #{tpu_custom_call.1} parent=0
    _
  %s17 = ssub.s32 1, %s15
  %s18 = scalar_select 0, %s17, %s15
  $region1: #{tpu_custom_call.1} parent=0
    #allocation2 [shape = 'u8[65536]{0}', space=vmem, size = 0x10000, scoped, tag = 'input window, operand 0']
    #allocation3 [shape = 's32[2]{0}', space=sflag, size = 0x8, scoped, tag = 'scoped memory for tpu_custom_call.1']
    #allocation4 [shape = 's32[2]{0}', space=sflag, size = 0x8, scoped, tag = 'scoped memory for tpu_custom_call.1']
    #allocation5 [shape = 'u8[32768]{0}', space=vmem, size = 0x8000, scoped, tag = 'input window, operand 1, single buffered']
    #allocation6 [shape = 's32[1]{0}', space=sflag, size = 0x4, scoped, tag = 'scoped memory for tpu_custom_call.1']
    #allocation7 [shape = 'u8[32768]{0}', space=vmem, size = 0x8000, scoped, tag = 'input window, operand 3, single buffered']
    #allocation8 [shape = 'u8[32768]{0}', space=vmem, size = 0x8000, scoped, tag = 'input window, operand 7, single buffered']
    #allocation9 [shape = 's32[1]{0}', space=sflag, size = 0x4, scoped, tag = 'scoped memory for tpu_custom_call.1']
    #allocation10 [shape = 'u8[32768]{0}', space=vmem, size = 0x8000, scoped, tag = 'input window, operand 9, single buffered']
    #allocation11 [shape = 'u8[8192]{0}', space=vmem, size = 0x2000, scoped, tag = 'output window, operand 0']
    #allocation12 [shape = 'u8[8192]{0}', space=vmem, size = 0x2000, scoped, tag = 'output window, operand 1']
    #allocation13 [shape = 's32[2]{0}', space=sflag, size = 0x8, scoped, tag = 'scoped memory for tpu_custom_call.1']
    #allocation14 [shape = 'u8[8192]{0}', space=vmem, size = 0x2000, scoped, tag = 'output window, operand 2']
    %19 = vsyncpa [#allocation3], 0
    %s20 = scalar_lea.sflag [#allocation3], 1
    %21 = vsyncpa %s20, 0
    %22 = vsyncpa [#allocation6], 0
    %23 = vsyncpa [#allocation9], 0
    %24 = vsyncpa [#allocation4], 0
    %s25 = scalar_lea.sflag [#allocation4], 1
    %26 = vsyncpa %s25, 0
    %27 = vsyncpa [#allocation13], 0
    %s28 = scalar_lea.sflag [#allocation13], 1
    %29 = vsyncpa %s28, 0
    loop: start=0, step=1, limit=4
    $region2: #{tpu_custom_call.1} parent=1 // loop_pre_header
      _
    $region3: #{tpu_custom_call.1} parent=1 // loop_header
      %s31 = sphi 0, %s35
      %p32 = scmp.ge.s32.totalorder %s31, 4
      %s41 = sphi 0, %s43
      %s44 = sphi 0, %s41
      %s45 = sphi 0, %s44
      %s61 = sphi 0, %s45
      %s65 = sphi 0, %s65
      %s67 = sphi 0, %s65
      %s68 = sphi 0, %s67
      %s82 = sphi 0, %s68
      %s86 = sphi 0, %s86
      %s88 = sphi 0, %s86
      %s89 = sphi 0, %s88
      %s103 = sphi 0, %s89
      %s107 = sphi 0, %s107
      %s109 = sphi 0, %s107
      %s110 = sphi 0, %s109
      %s124 = sphi 0, %s110
      %s128 = sphi 0, %s128
      %s130 = sphi 0, %s128
      %s131 = sphi 0, %s130
      %s145 = sphi 0, %s131
      %s149 = sphi 0, %s149
      %s151 = sphi 0, %s149
      %s152 = sphi 0, %s151
      %s166 = sphi 0, %s152
      %s170 = sphi 0, %s170
      %s172 = sphi 0, %s170
      %s173 = sphi 0, %s172
      %s187 = sphi 0, %s173
      %s191 = sphi 0, %s191
      %s193 = sphi 0, %s191
      %s194 = sphi 0, %s193
      %s208 = sphi 0, %s194
      %s212 = sphi 0, %s212
      %s214 = sphi 0, %s212
      %s215 = sphi 0, %s214
      %s229 = sphi 0, %s215
      %s233 = sphi 0, %s233
      %s235 = sphi 0, %s233
      %s236 = sphi 0, %s235
      %s250 = sphi 0, %s236
      %s254 = sphi 0, %s254
      %s256 = sphi 0, %s254
      %s257 = sphi 0, %s256
      %s271 = sphi 0, %s257
      %s277 = sphi 0, %s279
      %s280 = sphi 0, %s277
      %s281 = sphi 0, %s280
      %s297 = sphi 0, %s281
      %s303 = sphi 0, %s305
      %s306 = sphi 0, %s303
      %s307 = sphi 0, %s306
      %s323 = sphi 0, %s307
      %s329 = sphi 0, %s331
      %s332 = sphi 0, %s329
      %s333 = sphi 0, %s332
      %s349 = sphi 0, %s333
    $region4: #{tpu_custom_call.1} parent=1 // loop_header_branch
      %34 = sbr.rel (%p32) target = $region8
    $region5: #{tpu_custom_call.1} parent=1 // loop_body
      %s36 = ssub.s32 %s31, 1
      %s37 = ssub.s32 %s31, 2
      %s38 = sadd.s32 %s31, 1
      %s39 = ssub.s32 %s31, %s38
      %p40 = scmp.eq.s32.totalorder %s39, 0
      %s42 = sadd.s32 %s41, 1
      %s43 = scalar_select %p40, %s41, %s42
      %p46 = pneg %p40
      %p47 = scmp.eq.s32.totalorder %s31, 1
      %p48 = por %p46, %p47
      %p49 = scmp.ne.s32.totalorder %s41, %s44
      %p50 = scmp.eq.s32.totalorder %s31, 0
      %p51 = por %p49, %p50
      %p52 = scmp.ne.s32.totalorder %s41, %s44
      %p53 = scmp.eq.s32.totalorder %s36, 1
      %p54 = por %p52, %p53
      %p55 = scmp.ne.s32.totalorder %s44, %s45
      %p56 = scmp.eq.s32.totalorder %s36, 0
      %p57 = por %p55, %p56
      %p58 = scmp.ne.s32.totalorder %s44, %s45
      %p59 = scmp.eq.s32.totalorder %s37, 1
      %p60 = por %p58, %p59
      %p62 = scmp.ne.s32.totalorder %s45, %s61
      %p63 = scmp.eq.s32.totalorder %s37, 0
      %p64 = por %p62, %p63
      %s66 = sadd.s32 %s65, 1
      %p69 = scmp.eq.s32.totalorder %s31, 1
      %p70 = scmp.ne.s32.totalorder %s65, %s67
      %p71 = scmp.eq.s32.totalorder %s31, 0
      %p72 = por %p70, %p71
      %p73 = scmp.ne.s32.totalorder %s65, %s67
      %p74 = scmp.eq.s32.totalorder %s36, 1
      %p75 = por %p73, %p74
      %p76 = scmp.ne.s32.totalorder %s67, %s68
      %p77 = scmp.eq.s32.totalorder %s36, 0
      %p78 = por %p76, %p77
      %p79 = scmp.ne.s32.totalorder %s67, %s68
      %p80 = scmp.eq.s32.totalorder %s37, 1
      %p81 = por %p79, %p80
      %p83 = scmp.ne.s32.totalorder %s68, %s82
      %p84 = scmp.eq.s32.totalorder %s37, 0
      %p85 = por %p83, %p84
      %s87 = sadd.s32 %s86, 1
      %p90 = scmp.eq.s32.totalorder %s31, 1
      %p91 = scmp.ne.s32.totalorder %s86, %s88
      %p92 = scmp.eq.s32.totalorder %s31, 0
      %p93 = por %p91, %p92
      %p94 = scmp.ne.s32.totalorder %s86, %s88
      %p95 = scmp.eq.s32.totalorder %s36, 1
      %p96 = por %p94, %p95
      %p97 = scmp.ne.s32.totalorder %s88, %s89
      %p98 = scmp.eq.s32.totalorder %s36, 0
      %p99 = por %p97, %p98
      %p100 = scmp.ne.s32.totalorder %s88, %s89
      %p101 = scmp.eq.s32.totalorder %s37, 1
      %p102 = por %p100, %p101
      %p104 = scmp.ne.s32.totalorder %s89, %s103
      %p105 = scmp.eq.s32.totalorder %s37, 0
      %p106 = por %p104, %p105
      %s108 = sadd.s32 %s107, 1
      %p111 = scmp.eq.s32.totalorder %s31, 1
      %p112 = scmp.ne.s32.totalorder %s107, %s109
      %p113 = scmp.eq.s32.totalorder %s31, 0
      %p114 = por %p112, %p113
      %p115 = scmp.ne.s32.totalorder %s107, %s109
      %p116 = scmp.eq.s32.totalorder %s36, 1
      %p117 = por %p115, %p116
      %p118 = scmp.ne.s32.totalorder %s109, %s110
      %p119 = scmp.eq.s32.totalorder %s36, 0
      %p120 = por %p118, %p119
      %p121 = scmp.ne.s32.totalorder %s109, %s110
      %p122 = scmp.eq.s32.totalorder %s37, 1
      %p123 = por %p121, %p122
      %p125 = scmp.ne.s32.totalorder %s110, %s124
      %p126 = scmp.eq.s32.totalorder %s37, 0
      %p127 = por %p125, %p126
      %s129 = sadd.s32 %s128, 1
      %p132 = scmp.eq.s32.totalorder %s31, 1
      %p133 = scmp.ne.s32.totalorder %s128, %s130
      %p134 = scmp.eq.s32.totalorder %s31, 0
      %p135 = por %p133, %p134
      %p136 = scmp.ne.s32.totalorder %s128, %s130
      %p137 = scmp.eq.s32.totalorder %s36, 1
      %p138 = por %p136, %p137
      %p139 = scmp.ne.s32.totalorder %s130, %s131
      %p140 = scmp.eq.s32.totalorder %s36, 0
      %p141 = por %p139, %p140
      %p142 = scmp.ne.s32.totalorder %s130, %s131
      %p143 = scmp.eq.s32.totalorder %s37, 1
      %p144 = por %p142, %p143
      %p146 = scmp.ne.s32.totalorder %s131, %s145
      %p147 = scmp.eq.s32.totalorder %s37, 0
      %p148 = por %p146, %p147
      %s150 = sadd.s32 %s149, 1
      %p153 = scmp.eq.s32.totalorder %s31, 1
      %p154 = scmp.ne.s32.totalorder %s149, %s151
      %p155 = scmp.eq.s32.totalorder %s31, 0
      %p156 = por %p154, %p155
      %p157 = scmp.ne.s32.totalorder %s149, %s151
      %p158 = scmp.eq.s32.totalorder %s36, 1
      %p159 = por %p157, %p158
      %p160 = scmp.ne.s32.totalorder %s151, %s152
      %p161 = scmp.eq.s32.totalorder %s36, 0
      %p162 = por %p160, %p161
      %p163 = scmp.ne.s32.totalorder %s151, %s152
      %p164 = scmp.eq.s32.totalorder %s37, 1
      %p165 = por %p163, %p164
      %p167 = scmp.ne.s32.totalorder %s152, %s166
      %p168 = scmp.eq.s32.totalorder %s37, 0
      %p169 = por %p167, %p168
      %s171 = sadd.s32 %s170, 1
      %p174 = scmp.eq.s32.totalorder %s31, 1
      %p175 = scmp.ne.s32.totalorder %s170, %s172
      %p176 = scmp.eq.s32.totalorder %s31, 0
      %p177 = por %p175, %p176
      %p178 = scmp.ne.s32.totalorder %s170, %s172
      %p179 = scmp.eq.s32.totalorder %s36, 1
      %p180 = por %p178, %p179
      %p181 = scmp.ne.s32.totalorder %s172, %s173
      %p182 = scmp.eq.s32.totalorder %s36, 0
      %p183 = por %p181, %p182
      %p184 = scmp.ne.s32.totalorder %s172, %s173
      %p185 = scmp.eq.s32.totalorder %s37, 1
      %p186 = por %p184, %p185
      %p188 = scmp.ne.s32.totalorder %s173, %s187
      %p189 = scmp.eq.s32.totalorder %s37, 0
      %p190 = por %p188, %p189
      %s192 = sadd.s32 %s191, 1
      %p195 = scmp.eq.s32.totalorder %s31, 1
      %p196 = scmp.ne.s32.totalorder %s191, %s193
      %p197 = scmp.eq.s32.totalorder %s31, 0
      %p198 = por %p196, %p197
      %p199 = scmp.ne.s32.totalorder %s191, %s193
      %p200 = scmp.eq.s32.totalorder %s36, 1
      %p201 = por %p199, %p200
      %p202 = scmp.ne.s32.totalorder %s193, %s194
      %p203 = scmp.eq.s32.totalorder %s36, 0
      %p204 = por %p202, %p203
      %p205 = scmp.ne.s32.totalorder %s193, %s194
      %p206 = scmp.eq.s32.totalorder %s37, 1
      %p207 = por %p205, %p206
      %p209 = scmp.ne.s32.totalorder %s194, %s208
      %p210 = scmp.eq.s32.totalorder %s37, 0
      %p211 = por %p209, %p210
      %s213 = sadd.s32 %s212, 1
      %p216 = scmp.eq.s32.totalorder %s31, 1
      %p217 = scmp.ne.s32.totalorder %s212, %s214
      %p218 = scmp.eq.s32.totalorder %s31, 0
      %p219 = por %p217, %p218
      %p220 = scmp.ne.s32.totalorder %s212, %s214
      %p221 = scmp.eq.s32.totalorder %s36, 1
      %p222 = por %p220, %p221
      %p223 = scmp.ne.s32.totalorder %s214, %s215
      %p224 = scmp.eq.s32.totalorder %s36, 0
      %p225 = por %p223, %p224
      %p226 = scmp.ne.s32.totalorder %s214, %s215
      %p227 = scmp.eq.s32.totalorder %s37, 1
      %p228 = por %p226, %p227
      %p230 = scmp.ne.s32.totalorder %s215, %s229
      %p231 = scmp.eq.s32.totalorder %s37, 0
      %p232 = por %p230, %p231
      %s234 = sadd.s32 %s233, 1
      %p237 = scmp.eq.s32.totalorder %s31, 1
      %p238 = scmp.ne.s32.totalorder %s233, %s235
      %p239 = scmp.eq.s32.totalorder %s31, 0
      %p240 = por %p238, %p239
      %p241 = scmp.ne.s32.totalorder %s233, %s235
      %p242 = scmp.eq.s32.totalorder %s36, 1
      %p243 = por %p241, %p242
      %p244 = scmp.ne.s32.totalorder %s235, %s236
      %p245 = scmp.eq.s32.totalorder %s36, 0
      %p246 = por %p244, %p245
      %p247 = scmp.ne.s32.totalorder %s235, %s236
      %p248 = scmp.eq.s32.totalorder %s37, 1
      %p249 = por %p247, %p248
      %p251 = scmp.ne.s32.totalorder %s236, %s250
      %p252 = scmp.eq.s32.totalorder %s37, 0
      %p253 = por %p251, %p252
      %s255 = sadd.s32 %s254, 1
      %p258 = scmp.eq.s32.totalorder %s31, 1
      %p259 = scmp.ne.s32.totalorder %s254, %s256
      %p260 = scmp.eq.s32.totalorder %s31, 0
      %p261 = por %p259, %p260
      %p262 = scmp.ne.s32.totalorder %s254, %s256
      %p263 = scmp.eq.s32.totalorder %s36, 1
      %p264 = por %p262, %p263
      %p265 = scmp.ne.s32.totalorder %s256, %s257
      %p266 = scmp.eq.s32.totalorder %s36, 0
      %p267 = por %p265, %p266
      %p268 = scmp.ne.s32.totalorder %s256, %s257
      %p269 = scmp.eq.s32.totalorder %s37, 1
      %p270 = por %p268, %p269
      %p272 = scmp.ne.s32.totalorder %s257, %s271
      %p273 = scmp.eq.s32.totalorder %s37, 0
      %p274 = por %p272, %p273
      %s275 = ssub.s32 %s31, %s38
      %p276 = scmp.eq.s32.totalorder %s275, 0
      %s278 = sadd.s32 %s277, 1
      %s279 = scalar_select %p276, %s277, %s278
      %p282 = pneg %p276
      %p283 = scmp.eq.s32.totalorder %s31, 1
      %p284 = por %p282, %p283
      %p285 = scmp.ne.s32.totalorder %s277, %s280
      %p286 = scmp.eq.s32.totalorder %s31, 0
      %p287 = por %p285, %p286
      %p288 = scmp.ne.s32.totalorder %s277, %s280
      %p289 = scmp.eq.s32.totalorder %s36, 1
      %p290 = por %p288, %p289
      %p291 = scmp.ne.s32.totalorder %s280, %s281
      %p292 = scmp.eq.s32.totalorder %s36, 0
      %p293 = por %p291, %p292
      %p294 = scmp.ne.s32.totalorder %s280, %s281
      %p295 = scmp.eq.s32.totalorder %s37, 1
      %p296 = por %p294, %p295
      %p298 = scmp.ne.s32.totalorder %s281, %s297
      %p299 = scmp.eq.s32.totalorder %s37, 0
      %p300 = por %p298, %p299
      %s301 = ssub.s32 %s31, %s38
      %p302 = scmp.eq.s32.totalorder %s301, 0
      %s304 = sadd.s32 %s303, 1
      %s305 = scalar_select %p302, %s303, %s304
      %p308 = pneg %p302
      %p309 = scmp.eq.s32.totalorder %s31, 1
      %p310 = por %p308, %p309
      %p311 = scmp.ne.s32.totalorder %s303, %s306
      %p312 = scmp.eq.s32.totalorder %s31, 0
      %p313 = por %p311, %p312
      %p314 = scmp.ne.s32.totalorder %s303, %s306
      %p315 = scmp.eq.s32.totalorder %s36, 1
      %p316 = por %p314, %p315
      %p317 = scmp.ne.s32.totalorder %s306, %s307
      %p318 = scmp.eq.s32.totalorder %s36, 0
      %p319 = por %p317, %p318
      %p320 = scmp.ne.s32.totalorder %s306, %s307
      %p321 = scmp.eq.s32.totalorder %s37, 1
      %p322 = por %p320, %p321
      %p324 = scmp.ne.s32.totalorder %s307, %s323
      %p325 = scmp.eq.s32.totalorder %s37, 0
      %p326 = por %p324, %p325
      %s327 = ssub.s32 %s31, %s38
      %p328 = scmp.eq.s32.totalorder %s327, 0
      %s330 = sadd.s32 %s329, 1
      %s331 = scalar_select %p328, %s329, %s330
      %p334 = pneg %p328
      %p335 = scmp.eq.s32.totalorder %s31, 1
      %p336 = por %p334, %p335
      %p337 = scmp.ne.s32.totalorder %s329, %s332
      %p338 = scmp.eq.s32.totalorder %s31, 0
      %p339 = por %p337, %p338
      %p340 = scmp.ne.s32.totalorder %s329, %s332
      %p341 = scmp.eq.s32.totalorder %s36, 1
      %p342 = por %p340, %p341
      %p343 = scmp.ne.s32.totalorder %s332, %s333
      %p344 = scmp.eq.s32.totalorder %s36, 0
      %p345 = por %p343, %p344
      %p346 = scmp.ne.s32.totalorder %s332, %s333
      %p347 = scmp.eq.s32.totalorder %s37, 1
      %p348 = por %p346, %p347
      %p350 = scmp.ne.s32.totalorder %s333, %s349
      %p351 = scmp.eq.s32.totalorder %s37, 0
      %p352 = por %p350, %p351
      %p353 = scmp.le.s32.totalorder 1, %s31
      %p354 = scmp.lt.s32.totalorder %s31, 3
      %p355 = pnand %p353, %p354
      %p356 = pneg %p355
      // Predicated region
      $region9: #{tpu_custom_call.1} parent=5 // pred_check
        _
      $region10: #{tpu_custom_call.1} parent=5 // pred_check_branch
        %358 = sbr.rel (%p355) target = $region12
      $region11: #{tpu_custom_call.1} parent=5 // pred_region
        %s359 = ssub.s32 %s31, 1
        // Predicated region
        $region13: #{tpu_custom_call.1} parent=11 // pred_check
          %p360 = pneg %p78
        $region14: #{tpu_custom_call.1} parent=11 // pred_check_branch
          %362 = sbr.rel (%p360) target = $region16
        $region15: #{tpu_custom_call.1} parent=11 // pred_region
          %s364 = ssub.s32 1024, 1024
          %365 = vsyncadd [#allocation6], %s364
          %s366 = sshll.u32 [#allocation5], 4
          %s367 = int_to_ptr.vmem [resolvable:$true] %s366
          %372 = dma.hbm_to_vmem [thread:$0]  %s1, 1024, %s367, [#allocation6], 64, 64, 4
        $region16: #{tpu_custom_call.1} parent=11 // pred_fallthru
          _
        // Predicated region
        $region17: #{tpu_custom_call.1} parent=11 // pred_check
          %p373 = pneg %p99
        $region18: #{tpu_custom_call.1} parent=11 // pred_check_branch
          %375 = sbr.rel (%p373) target = $region20
        $region19: #{tpu_custom_call.1} parent=11 // pred_region
          _
        $region20: #{tpu_custom_call.1} parent=11 // pred_fallthru
          _
        // Predicated region
        $region21: #{tpu_custom_call.1} parent=11 // pred_check
          %p376 = pneg %p120
        $region22: #{tpu_custom_call.1} parent=11 // pred_check_branch
          %378 = sbr.rel (%p376) target = $region24
        $region23: #{tpu_custom_call.1} parent=11 // pred_region
          %s380 = ssub.s32 1024, 1024
          %381 = vsyncadd [#allocation6], %s380
          %s382 = sshll.u32 [#allocation7], 4
          %s383 = int_to_ptr.vmem [resolvable:$true] %s382
          %388 = dma.hbm_to_vmem [thread:$0]  %s3, 1024, %s383, [#allocation6], 64, 64, 4
        $region24: #{tpu_custom_call.1} parent=11 // pred_fallthru
          _
        // Predicated region
        $region25: #{tpu_custom_call.1} parent=11 // pred_check
          %p389 = pneg %p141
        $region26: #{tpu_custom_call.1} parent=11 // pred_check_branch
          %391 = sbr.rel (%p389) target = $region28
        $region27: #{tpu_custom_call.1} parent=11 // pred_region
          _
        $region28: #{tpu_custom_call.1} parent=11 // pred_fallthru
          _
        // Predicated region
        $region29: #{tpu_custom_call.1} parent=11 // pred_check
          %p392 = pneg %p162
        $region30: #{tpu_custom_call.1} parent=11 // pred_check_branch
          %394 = sbr.rel (%p392) target = $region32
        $region31: #{tpu_custom_call.1} parent=11 // pred_region
          _
        $region32: #{tpu_custom_call.1} parent=11 // pred_fallthru
          _
        // Predicated region
        $region33: #{tpu_custom_call.1} parent=11 // pred_check
          %p395 = pneg %p183
        $region34: #{tpu_custom_call.1} parent=11 // pred_check_branch
          %397 = sbr.rel (%p395) target = $region36
        $region35: #{tpu_custom_call.1} parent=11 // pred_region
          _
        $region36: #{tpu_custom_call.1} parent=11 // pred_fallthru
          _
        // Predicated region
        $region37: #{tpu_custom_call.1} parent=11 // pred_check
          %p398 = pneg %p204
        $region38: #{tpu_custom_call.1} parent=11 // pred_check_branch
          %400 = sbr.rel (%p398) target = $region40
        $region39: #{tpu_custom_call.1} parent=11 // pred_region
          %s402 = ssub.s32 1024, 1024
          %403 = vsyncadd [#allocation9], %s402
          %s404 = sshll.u32 [#allocation8], 4
          %s405 = int_to_ptr.vmem [resolvable:$true] %s404
          %410 = dma.hbm_to_vmem [thread:$0]  %s7, 1024, %s405, [#allocation9], 64, 64, 4
        $region40: #{tpu_custom_call.1} parent=11 // pred_fallthru
          _
        // Predicated region
        $region41: #{tpu_custom_call.1} parent=11 // pred_check
          %p411 = pneg %p225
        $region42: #{tpu_custom_call.1} parent=11 // pred_check_branch
          %413 = sbr.rel (%p411) target = $region44
        $region43: #{tpu_custom_call.1} parent=11 // pred_region
          _
        $region44: #{tpu_custom_call.1} parent=11 // pred_fallthru
          _
        // Predicated region
        $region45: #{tpu_custom_call.1} parent=11 // pred_check
          %p414 = pneg %p246
        $region46: #{tpu_custom_call.1} parent=11 // pred_check_branch
          %416 = sbr.rel (%p414) target = $region48
        $region47: #{tpu_custom_call.1} parent=11 // pred_region
          %s418 = ssub.s32 1024, 1024
          %419 = vsyncadd [#allocation9], %s418
          %s420 = sshll.u32 [#allocation10], 4
          %s421 = int_to_ptr.vmem [resolvable:$true] %s420
          %426 = dma.hbm_to_vmem [thread:$0]  %s9, 1024, %s421, [#allocation9], 64, 64, 4
        $region48: #{tpu_custom_call.1} parent=11 // pred_fallthru
          _
        // Predicated region
        $region49: #{tpu_custom_call.1} parent=11 // pred_check
          %p427 = pneg %p267
        $region50: #{tpu_custom_call.1} parent=11 // pred_check_branch
          %429 = sbr.rel (%p427) target = $region52
        $region51: #{tpu_custom_call.1} parent=11 // pred_region
          _
        $region52: #{tpu_custom_call.1} parent=11 // pred_fallthru
          _
      $region12: #{tpu_custom_call.1} parent=5 // pred_fallthru
        _
      %p430 = scmp.lt.s32.totalorder %s31, 2
      // Predicated region
      $region53: #{tpu_custom_call.1} parent=5 // pred_check
        %p431 = pneg %p430
      $region54: #{tpu_custom_call.1} parent=5 // pred_check_branch
        %433 = sbr.rel (%p431) target = $region56
      $region55: #{tpu_custom_call.1} parent=5 // pred_region
        // Predicated region
        $region57: #{tpu_custom_call.1} parent=55 // pred_check
          %p434 = pneg %p51
        $region58: #{tpu_custom_call.1} parent=55 // pred_check_branch
          %436 = sbr.rel (%p434) target = $region60
        $region59: #{tpu_custom_call.1} parent=55 // pred_region
          %s437 = sand.u32 %s41, 1
          %s438 = scalar_lea.sflag [#allocation3], %s437
          %s439 = sand.u32 %s41, 1
          %s440 = smul.addr %s439, 64
          %s441 = scalar_lea.vmem [#allocation2], %s440
          %s442 = smul.u32 16, %s31
          %s444 = ssub.s32 1024, 1024
          %445 = vsyncadd %s438, %s444
          %s446 = smul.addr %s442, 64
          %s447 = scalar_lea.hbm %s0, %s446
          %s448 = sshll.u32 %s441, 4
          %s449 = int_to_ptr.vmem [resolvable:$true] %s448
          %454 = dma.hbm_to_vmem [thread:$0]  %s447, 1024, %s449, %s438, 64, 64, 4
        $region60: #{tpu_custom_call.1} parent=55 // pred_fallthru
          _
      $region56: #{tpu_custom_call.1} parent=5 // pred_fallthru
        _
      %p455 = scmp.le.s32.totalorder 1, %s31
      %p456 = scmp.lt.s32.totalorder %s31, 3
      %p457 = pnand %p455, %p456
      %p458 = pneg %p457
      // Predicated region
      $region61: #{tpu_custom_call.1} parent=5 // pred_check
        _
      $region62: #{tpu_custom_call.1} parent=5 // pred_check_branch
        %460 = sbr.rel (%p457) target = $region64
      $region63: #{tpu_custom_call.1} parent=5 // pred_region
        %s461 = ssub.s32 %s31, 1
        %s462 = sand.u32 %s44, 1
        %s463 = scalar_lea.sflag [#allocation3], %s462
        %s464 = sand.u32 %s44, 1
        %s465 = smul.addr %s464, 64
        %s466 = scalar_lea.vmem [#allocation2], %s465
        // Predicated region
        $region65: #{tpu_custom_call.1} parent=63 // pred_check
          %p467 = pneg %p57
        $region66: #{tpu_custom_call.1} parent=63 // pred_check_branch
          %469 = sbr.rel (%p467) target = $region68
        $region67: #{tpu_custom_call.1} parent=63 // pred_region
          %470 = dma.done %s463, 1024
        $region68: #{tpu_custom_call.1} parent=63 // pred_fallthru
          _
        // Predicated region
        $region69: #{tpu_custom_call.1} parent=63 // pred_check
          %p471 = pneg %p78
        $region70: #{tpu_custom_call.1} parent=63 // pred_check_branch
          %473 = sbr.rel (%p471) target = $region72
        $region71: #{tpu_custom_call.1} parent=63 // pred_region
          %474 = dma.done [#allocation6], 1024
        $region72: #{tpu_custom_call.1} parent=63 // pred_fallthru
          _
        // Predicated region
        $region73: #{tpu_custom_call.1} parent=63 // pred_check
          %p475 = pneg %p120
        $region74: #{tpu_custom_call.1} parent=63 // pred_check_branch
          %477 = sbr.rel (%p475) target = $region76
        $region75: #{tpu_custom_call.1} parent=63 // pred_region
          %478 = dma.done [#allocation6], 1024
        $region76: #{tpu_custom_call.1} parent=63 // pred_fallthru
          _
        // Predicated region
        $region77: #{tpu_custom_call.1} parent=63 // pred_check
          %p479 = pneg %p204
        $region78: #{tpu_custom_call.1} parent=63 // pred_check_branch
          %481 = sbr.rel (%p479) target = $region80
        $region79: #{tpu_custom_call.1} parent=63 // pred_region
          %482 = dma.done [#allocation9], 1024
        $region80: #{tpu_custom_call.1} parent=63 // pred_fallthru
          _
        // Predicated region
        $region81: #{tpu_custom_call.1} parent=63 // pred_check
          %p483 = pneg %p246
        $region82: #{tpu_custom_call.1} parent=63 // pred_check_branch
          %485 = sbr.rel (%p483) target = $region84
        $region83: #{tpu_custom_call.1} parent=63 // pred_region
          %486 = dma.done [#allocation9], 1024
        $region84: #{tpu_custom_call.1} parent=63 // pred_fallthru
          _
        %s487 = sand.u32 %s44, 1
        %s488 = scalar_lea.sflag [#allocation3], %s487
        %s489 = sand.u32 %s44, 1
        %s490 = smul.addr %s489, 64
        %s491 = scalar_lea.vmem [#allocation2], %s490
        %p492 = pneg %p57
        %p493 = pneg %p54
        %p494 = pneg %p78
        %p495 = pneg %p75
        %p496 = pneg %p99
        %p497 = pneg %p96
        %p498 = pneg %p120
        %p499 = pneg %p117
        %p500 = pneg %p141
        %p501 = pneg %p138
        %p502 = pneg %p162
        %p503 = pneg %p159
        %p504 = pneg %p183
        %p505 = pneg %p180
        %p506 = pneg %p204
        %p507 = pneg %p201
        %p508 = pneg %p225
        %p509 = pneg %p222
        %p510 = pneg %p246
        %p511 = pneg %p243
        %p512 = pneg %p267
        %p513 = pneg %p264
        %p514 = pneg %p293
        %p515 = pneg %p290
        %s516 = sand.u32 %s280, 1
        %s517 = scalar_lea.sflag [#allocation4], %s516
        %s518 = sand.u32 %s280, 1
        %s519 = smul.addr %s518, 8
        %s520 = scalar_lea.vmem [#allocation11], %s519
        %p521 = pneg %p319
        %p522 = pneg %p316
        %s523 = sand.u32 %s36, 1
        %s524 = scalar_lea.sflag [#allocation13], %s523
        %s525 = sand.u32 %s306, 1
        %s526 = smul.addr %s525, 8
        %s527 = scalar_lea.vmem [#allocation12], %s526
        %p528 = pneg %p345
        %p529 = pneg %p342
        %s530 = sand.u32 %s36, 1
        %s531 = scalar_lea.sflag [#allocation13], %s530
        %s532 = sand.u32 %s332, 1
        %s533 = smul.addr %s532, 8
        %s534 = scalar_lea.vmem [#allocation14], %s533
        %s535 = smul.u32 16, %s36
        %v537 = vld [vmem:[%s466] sm:$0xf]
        %v538 = vld [vmem:[%s466 + $0x4] sm:$0xf]
        %v539 = vld [vmem:[%s466 + $0x8] sm:$0xf]
        %v540 = vld [vmem:[%s466 + $0xc] sm:$0xf]
        %v541 = vld [vmem:[%s466 + $0x10] sm:$0xf]
        %v542 = vld [vmem:[%s466 + $0x14] sm:$0xf]
        %v543 = vld [vmem:[%s466 + $0x18] sm:$0xf]
        %v544 = vld [vmem:[%s466 + $0x1c] sm:$0xf]
        %v545 = vld [vmem:[%s466 + $0x20] sm:$0xf]
        %v546 = vld [vmem:[%s466 + $0x24] sm:$0xf]
        %v547 = vld [vmem:[%s466 + $0x28] sm:$0xf]
        %v548 = vld [vmem:[%s466 + $0x2c] sm:$0xf]
        %v549 = vld [vmem:[%s466 + $0x30] sm:$0xf]
        %v550 = vld [vmem:[%s466 + $0x34] sm:$0xf]
        %v551 = vld [vmem:[%s466 + $0x38] sm:$0xf]
        %v552 = vld [vmem:[%s466 + $0x3c] sm:$0xf]
        %v553 = vld [vmem:[#allocation5] sm:$0xf]
        %v554 = vld [vmem:[#allocation5 + $0x4] sm:$0xf]
        %v555 = vld [vmem:[#allocation5 + $0x8] sm:$0xf]
        %v556 = vld [vmem:[#allocation5 + $0xc] sm:$0xf]
        %v557 = vld [vmem:[#allocation5 + $0x10] sm:$0xf]
        %v558 = vld [vmem:[#allocation5 + $0x14] sm:$0xf]
        %v559 = vld [vmem:[#allocation5 + $0x18] sm:$0xf]
        %v560 = vld [vmem:[#allocation5 + $0x1c] sm:$0xf]
        %v561 = vld [vmem:[#allocation5 + $0x20] sm:$0xf]
        %v562 = vld [vmem:[#allocation5 + $0x24] sm:$0xf]
        %v563 = vld [vmem:[#allocation5 + $0x28] sm:$0xf]
        %v564 = vld [vmem:[#allocation5 + $0x2c] sm:$0xf]
        %v565 = vld [vmem:[#allocation5 + $0x30] sm:$0xf]
        %v566 = vld [vmem:[#allocation5 + $0x34] sm:$0xf]
        %v567 = vld [vmem:[#allocation5 + $0x38] sm:$0xf]
        %v568 = vld [vmem:[#allocation5 + $0x3c] sm:$0xf]
        %v569 = vld [vmem:[%s2] sm:$0x1]
        %v571 = vlaneseq
        %v572 = vshrl.u32 %v571, 7
        %v573 = vsub.s32 0, %v572
        %v574 = vrot.slane %v569, %v573
        %v592 = vunpack.c.l.b16 %v537
        %v593 = vunpack.c.l.b16 %v538
        %v594 = vunpack.c.l.b16 %v539
        %v595 = vunpack.c.l.b16 %v540
        %v596 = vunpack.c.l.b16 %v541
        %v597 = vunpack.c.l.b16 %v542
        %v598 = vunpack.c.l.b16 %v543
        %v599 = vunpack.c.l.b16 %v544
        %v600 = vunpack.c.l.b16 %v545
        %v601 = vunpack.c.l.b16 %v546
        %v602 = vunpack.c.l.b16 %v547
        %v603 = vunpack.c.l.b16 %v548
        %v604 = vunpack.c.l.b16 %v549
        %v605 = vunpack.c.l.b16 %v550
        %v606 = vunpack.c.l.b16 %v551
        %v607 = vunpack.c.l.b16 %v552
        %v608 = vpack.c.b16 %v593, %v592
        %v609 = vpack.c.b16 %v595, %v594
        %v610 = vpack.c.b16 %v597, %v596
        %v611 = vpack.c.b16 %v599, %v598
        %v612 = vpack.c.b16 %v601, %v600
        %v613 = vpack.c.b16 %v603, %v602
        %v614 = vpack.c.b16 %v605, %v604
        %v615 = vpack.c.b16 %v607, %v606
        %v640 = vunpack.c.l.b16 %v553
        %v641 = vunpack.c.l.b16 %v554
        %v642 = vunpack.c.l.b16 %v555
        %v643 = vunpack.c.l.b16 %v556
        %v644 = vunpack.c.l.b16 %v557
        %v645 = vunpack.c.l.b16 %v558
        %v646 = vunpack.c.l.b16 %v559
        %v647 = vunpack.c.l.b16 %v560
        %v648 = vunpack.c.l.b16 %v561
        %v649 = vunpack.c.l.b16 %v562
        %v650 = vunpack.c.l.b16 %v563
        %v651 = vunpack.c.l.b16 %v564
        %v652 = vunpack.c.l.b16 %v565
        %v653 = vunpack.c.l.b16 %v566
        %v654 = vunpack.c.l.b16 %v567
        %v655 = vunpack.c.l.b16 %v568
        %v656 = vpack.c.b16 %v641, %v640
        %v657 = vpack.c.b16 %v643, %v642
        %v658 = vpack.c.b16 %v645, %v644
        %v659 = vpack.c.b16 %v647, %v646
        %v660 = vpack.c.b16 %v649, %v648
        %v661 = vpack.c.b16 %v651, %v650
        %v662 = vpack.c.b16 %v653, %v652
        %v663 = vpack.c.b16 %v655, %v654
        %672 = vmatprep.subr.bf16.mxu0 0
        %673 = vmatpush1.bf16.msra.mxu0 %v663
        %674 = vmatprep.subr.bf16.mxu0 0
        %675 = vmatpush1.bf16.msra.mxu0 %v662
        %676 = vmatprep.subr.bf16.mxu0 0
        %677 = vmatpush1.bf16.msra.mxu0 %v661
        %678 = vmatprep.subr.bf16.mxu0 0
        %679 = vmatpush1.bf16.msra.mxu0 %v660
        %680 = vmatprep.subr.bf16.mxu0 0
        %681 = vmatpush1.bf16.msra.mxu0 %v659
        %682 = vmatprep.subr.bf16.mxu0 0
        %683 = vmatpush1.bf16.msra.mxu0 %v658
        %684 = vmatprep.subr.bf16.mxu0 0
        %685 = vmatpush1.bf16.msra.mxu0 %v657
        %686 = vmatprep.subr.bf16.mxu0 0
        %687 = vmatpush1.bf16.msra.mxu0 %v656
        %688 = vmatprep.subr.bf16.mxu0 0
        %689 = vmatpush2.bf16.msra.mxu0 0
        %690 = vmatprep.subr.bf16.mxu0 0
        %691 = vmatpush2.bf16.msra.mxu0 0
        %692 = vmatprep.subr.bf16.mxu0 0
        %693 = vmatpush2.bf16.msra.mxu0 0
        %694 = vmatprep.subr.bf16.mxu0 0
        %695 = vmatpush2.bf16.msra.mxu0 0
        %696 = vmatprep.subr.bf16.mxu0 0
        %697 = vmatpush2.bf16.msra.mxu0 0
        %698 = vmatprep.subr.bf16.mxu0 0
        %699 = vmatpush2.bf16.msra.mxu0 0
        %700 = vmatprep.subr.bf16.mxu0 0
        %701 = vmatpush2.bf16.msra.mxu0 0
        %702 = vmatprep.subr.bf16.mxu0 0
        %703 = vmatpush2.bf16.msra.mxu0 0
        %704 = vmatprep.mubr.bf16.mxu0 0
        %705 = vmatmul.mubr.bf16.gmra.mxu0 %v608
        %v706 = vpop.f32.mrf.mxu0
        %v707 = vadd.f32 %v574, %v706
        %v708 = vpop.f32.mrf.mxu0
        %v709 = vpop.f32.mrf.mxu0
        %v710 = vadd.f32 %v574, %v709
        %v711 = vpop.f32.mrf.mxu0
        %712 = vmatprep.mubr.bf16.mxu0 0
        %713 = vmatmul.mubr.bf16.gmra.mxu0 %v609
        %v714 = vpop.f32.mrf.mxu0
        %v715 = vadd.f32 %v574, %v714
        %v716 = vpop.f32.mrf.mxu0
        %v717 = vpop.f32.mrf.mxu0
        %v718 = vadd.f32 %v574, %v717
        %v719 = vpop.f32.mrf.mxu0
        %720 = vmatprep.mubr.bf16.mxu0 0
        %721 = vmatmul.mubr.bf16.gmra.mxu0 %v610
        %v722 = vpop.f32.mrf.mxu0
        %v723 = vadd.f32 %v574, %v722
        %v724 = vpop.f32.mrf.mxu0
        %v725 = vpop.f32.mrf.mxu0
        %v726 = vadd.f32 %v574, %v725
        %v727 = vpop.f32.mrf.mxu0
        %728 = vmatprep.mubr.bf16.mxu0 0
        %729 = vmatmul.mubr.bf16.gmra.mxu0 %v611
        %v730 = vpop.f32.mrf.mxu0
        %v731 = vadd.f32 %v574, %v730
        %v732 = vpop.f32.mrf.mxu0
        %v733 = vpop.f32.mrf.mxu0
        %v734 = vadd.f32 %v574, %v733
        %v735 = vpop.f32.mrf.mxu0
        %736 = vmatprep.mubr.bf16.mxu0 0
        %737 = vmatmul.mubr.bf16.gmra.mxu0 %v612
        %v738 = vpop.f32.mrf.mxu0
        %v739 = vadd.f32 %v574, %v738
        %v740 = vpop.f32.mrf.mxu0
        %v741 = vpop.f32.mrf.mxu0
        %v742 = vadd.f32 %v574, %v741
        %v743 = vpop.f32.mrf.mxu0
        %744 = vmatprep.mubr.bf16.mxu0 0
        %745 = vmatmul.mubr.bf16.gmra.mxu0 %v613
        %v746 = vpop.f32.mrf.mxu0
        %v747 = vadd.f32 %v574, %v746
        %v748 = vpop.f32.mrf.mxu0
        %v749 = vpop.f32.mrf.mxu0
        %v750 = vadd.f32 %v574, %v749
        %v751 = vpop.f32.mrf.mxu0
        %752 = vmatprep.mubr.bf16.mxu0 0
        %753 = vmatmul.mubr.bf16.gmra.mxu0 %v614
        %v754 = vpop.f32.mrf.mxu0
        %v755 = vadd.f32 %v574, %v754
        %v756 = vpop.f32.mrf.mxu0
        %v757 = vpop.f32.mrf.mxu0
        %v758 = vadd.f32 %v574, %v757
        %v759 = vpop.f32.mrf.mxu0
        %760 = vmatprep.mubr.bf16.mxu0 0
        %761 = vmatmul.mubr.bf16.gmra.mxu0 %v615
        %v762 = vpop.f32.mrf.mxu0
        %v763 = vadd.f32 %v574, %v762
        %v764 = vpop.f32.mrf.mxu0
        %v765 = vpop.f32.mrf.mxu0
        %v766 = vadd.f32 %v574, %v765
        %v767 = vpop.f32.mrf.mxu0
        %768 = vdwg.mxu0
        %v769 = vmax.f32 %v707, 0.0
        %v770 = vmax.f32 %v710, 0.0
        %v771 = vmax.f32 %v715, 0.0
        %v772 = vmax.f32 %v718, 0.0
        %v773 = vmax.f32 %v723, 0.0
        %v774 = vmax.f32 %v726, 0.0
        %v775 = vmax.f32 %v731, 0.0
        %v776 = vmax.f32 %v734, 0.0
        %v777 = vmax.f32 %v739, 0.0
        %v778 = vmax.f32 %v742, 0.0
        %v779 = vmax.f32 %v747, 0.0
        %v780 = vmax.f32 %v750, 0.0
        %v781 = vmax.f32 %v755, 0.0
        %v782 = vmax.f32 %v758, 0.0
        %v783 = vmax.f32 %v763, 0.0
        %v784 = vmax.f32 %v766, 0.0
        %v785 = vpack.c.bf16 %v770, %v769
        %v786 = vpack.c.bf16 %v772, %v771
        %v787 = vpack.c.bf16 %v774, %v773
        %v788 = vpack.c.bf16 %v776, %v775
        %v789 = vpack.c.bf16 %v778, %v777
        %v790 = vpack.c.bf16 %v780, %v779
        %v791 = vpack.c.bf16 %v782, %v781
        %v792 = vpack.c.bf16 %v784, %v783
        %v793 = vld [vmem:[#allocation7] sm:$0xf]
        %v794 = vld [vmem:[#allocation7 + $0x4] sm:$0xf]
        %v795 = vld [vmem:[#allocation7 + $0x8] sm:$0xf]
        %v796 = vld [vmem:[#allocation7 + $0xc] sm:$0xf]
        %v797 = vld [vmem:[#allocation7 + $0x10] sm:$0xf]
        %v798 = vld [vmem:[#allocation7 + $0x14] sm:$0xf]
        %v799 = vld [vmem:[#allocation7 + $0x18] sm:$0xf]
        %v800 = vld [vmem:[#allocation7 + $0x1c] sm:$0xf]
        %v801 = vld [vmem:[#allocation7 + $0x20] sm:$0xf]
        %v802 = vld [vmem:[#allocation7 + $0x24] sm:$0xf]
        %v803 = vld [vmem:[#allocation7 + $0x28] sm:$0xf]
        %v804 = vld [vmem:[#allocation7 + $0x2c] sm:$0xf]
        %v805 = vld [vmem:[#allocation7 + $0x30] sm:$0xf]
        %v806 = vld [vmem:[#allocation7 + $0x34] sm:$0xf]
        %v807 = vld [vmem:[#allocation7 + $0x38] sm:$0xf]
        %v808 = vld [vmem:[#allocation7 + $0x3c] sm:$0xf]
        %v809 = vld [vmem:[%s4] sm:$0x1]
        %v811 = vlaneseq
        %v812 = vshrl.u32 %v811, 7
        %v813 = vsub.s32 0, %v812
        %v814 = vrot.slane %v809, %v813
        %v832 = vunpack.c.l.b16 %v793
        %v833 = vunpack.c.l.b16 %v794
        %v834 = vunpack.c.l.b16 %v795
        %v835 = vunpack.c.l.b16 %v796
        %v836 = vunpack.c.l.b16 %v797
        %v837 = vunpack.c.l.b16 %v798
        %v838 = vunpack.c.l.b16 %v799
        %v839 = vunpack.c.l.b16 %v800
        %v840 = vunpack.c.l.b16 %v801
        %v841 = vunpack.c.l.b16 %v802
        %v842 = vunpack.c.l.b16 %v803
        %v843 = vunpack.c.l.b16 %v804
        %v844 = vunpack.c.l.b16 %v805
        %v845 = vunpack.c.l.b16 %v806
        %v846 = vunpack.c.l.b16 %v807
        %v847 = vunpack.c.l.b16 %v808
        %v848 = vpack.c.b16 %v833, %v832
        %v849 = vpack.c.b16 %v835, %v834
        %v850 = vpack.c.b16 %v837, %v836
        %v851 = vpack.c.b16 %v839, %v838
        %v852 = vpack.c.b16 %v841, %v840
        %v853 = vpack.c.b16 %v843, %v842
        %v854 = vpack.c.b16 %v845, %v844
        %v855 = vpack.c.b16 %v847, %v846
        %864 = vmatprep.subr.bf16.mxu0 0
        %865 = vmatpush1.bf16.msra.mxu0 %v855
        %866 = vmatprep.subr.bf16.mxu0 0
        %867 = vmatpush1.bf16.msra.mxu0 %v854
        %868 = vmatprep.subr.bf16.mxu0 0
        %869 = vmatpush1.bf16.msra.mxu0 %v853
        %870 = vmatprep.subr.bf16.mxu0 0
        %871 = vmatpush1.bf16.msra.mxu0 %v852
        %872 = vmatprep.subr.bf16.mxu0 0
        %873 = vmatpush1.bf16.msra.mxu0 %v851
        %874 = vmatprep.subr.bf16.mxu0 0
        %875 = vmatpush1.bf16.msra.mxu0 %v850
        %876 = vmatprep.subr.bf16.mxu0 0
        %877 = vmatpush1.bf16.msra.mxu0 %v849
        %878 = vmatprep.subr.bf16.mxu0 0
        %879 = vmatpush1.bf16.msra.mxu0 %v848
        %880 = vmatprep.subr.bf16.mxu0 0
        %881 = vmatpush2.bf16.msra.mxu0 0
        %882 = vmatprep.subr.bf16.mxu0 0
        %883 = vmatpush2.bf16.msra.mxu0 0
        %884 = vmatprep.subr.bf16.mxu0 0
        %885 = vmatpush2.bf16.msra.mxu0 0
        %886 = vmatprep.subr.bf16.mxu0 0
        %887 = vmatpush2.bf16.msra.mxu0 0
        %888 = vmatprep.subr.bf16.mxu0 0
        %889 = vmatpush2.bf16.msra.mxu0 0
        %890 = vmatprep.subr.bf16.mxu0 0
        %891 = vmatpush2.bf16.msra.mxu0 0
        %892 = vmatprep.subr.bf16.mxu0 0
        %893 = vmatpush2.bf16.msra.mxu0 0
        %894 = vmatprep.subr.bf16.mxu0 0
        %895 = vmatpush2.bf16.msra.mxu0 0
        %896 = vmatprep.mubr.bf16.mxu0 0
        %897 = vmatmul.mubr.bf16.gmra.mxu0 %v785
        %v898 = vpop.f32.mrf.mxu0
        %v899 = vadd.f32 %v814, %v898
        %v900 = vpop.f32.mrf.mxu0
        %v901 = vpop.f32.mrf.mxu0
        %v902 = vadd.f32 %v814, %v901
        %v903 = vpop.f32.mrf.mxu0
        %904 = vmatprep.mubr.bf16.mxu0 0
        %905 = vmatmul.mubr.bf16.gmra.mxu0 %v786
        %v906 = vpop.f32.mrf.mxu0
        %v907 = vadd.f32 %v814, %v906
        %v908 = vpop.f32.mrf.mxu0
        %v909 = vpop.f32.mrf.mxu0
        %v910 = vadd.f32 %v814, %v909
        %v911 = vpop.f32.mrf.mxu0
        %912 = vmatprep.mubr.bf16.mxu0 0
        %913 = vmatmul.mubr.bf16.gmra.mxu0 %v787
        %v914 = vpop.f32.mrf.mxu0
        %v915 = vadd.f32 %v814, %v914
        %v916 = vpop.f32.mrf.mxu0
        %v917 = vpop.f32.mrf.mxu0
        %v918 = vadd.f32 %v814, %v917
        %v919 = vpop.f32.mrf.mxu0
        %920 = vmatprep.mubr.bf16.mxu0 0
        %921 = vmatmul.mubr.bf16.gmra.mxu0 %v788
        %v922 = vpop.f32.mrf.mxu0
        %v923 = vadd.f32 %v814, %v922
        %v924 = vpop.f32.mrf.mxu0
        %v925 = vpop.f32.mrf.mxu0
        %v926 = vadd.f32 %v814, %v925
        %v927 = vpop.f32.mrf.mxu0
        %928 = vmatprep.mubr.bf16.mxu0 0
        %929 = vmatmul.mubr.bf16.gmra.mxu0 %v789
        %v930 = vpop.f32.mrf.mxu0
        %v931 = vadd.f32 %v814, %v930
        %v932 = vpop.f32.mrf.mxu0
        %v933 = vpop.f32.mrf.mxu0
        %v934 = vadd.f32 %v814, %v933
        %v935 = vpop.f32.mrf.mxu0
        %936 = vmatprep.mubr.bf16.mxu0 0
        %937 = vmatmul.mubr.bf16.gmra.mxu0 %v790
        %v938 = vpop.f32.mrf.mxu0
        %v939 = vadd.f32 %v814, %v938
        %v940 = vpop.f32.mrf.mxu0
        %v941 = vpop.f32.mrf.mxu0
        %v942 = vadd.f32 %v814, %v941
        %v943 = vpop.f32.mrf.mxu0
        %944 = vmatprep.mubr.bf16.mxu0 0
        %945 = vmatmul.mubr.bf16.gmra.mxu0 %v791
        %v946 = vpop.f32.mrf.mxu0
        %v947 = vadd.f32 %v814, %v946
        %v948 = vpop.f32.mrf.mxu0
        %v949 = vpop.f32.mrf.mxu0
        %v950 = vadd.f32 %v814, %v949
        %v951 = vpop.f32.mrf.mxu0
        %952 = vmatprep.mubr.bf16.mxu0 0
        %953 = vmatmul.mubr.bf16.gmra.mxu0 %v792
        %v954 = vpop.f32.mrf.mxu0
        %v955 = vadd.f32 %v814, %v954
        %v956 = vpop.f32.mrf.mxu0
        %v957 = vpop.f32.mrf.mxu0
        %v958 = vadd.f32 %v814, %v957
        %v959 = vpop.f32.mrf.mxu0
        %960 = vdwg.mxu0
        %961 = vadd.xlane.f32.xlu0 %v899
        %v962 = vpop.xlane.xlu0 %961
        %963 = vadd.xlane.f32.xlu0 %v902
        %v964 = vpop.xlane.xlu0 %963
        %965 = vadd.xlane.f32.xlu0 %v907
        %v966 = vpop.xlane.xlu0 %965
        %967 = vadd.xlane.f32.xlu0 %v910
        %v968 = vpop.xlane.xlu0 %967
        %969 = vadd.xlane.f32.xlu0 %v915
        %v970 = vpop.xlane.xlu0 %969
        %971 = vadd.xlane.f32.xlu0 %v918
        %v972 = vpop.xlane.xlu0 %971
        %973 = vadd.xlane.f32.xlu0 %v923
        %v974 = vpop.xlane.xlu0 %973
        %975 = vadd.xlane.f32.xlu0 %v926
        %v976 = vpop.xlane.xlu0 %975
        %977 = vadd.xlane.f32.xlu0 %v931
        %v978 = vpop.xlane.xlu0 %977
        %979 = vadd.xlane.f32.xlu0 %v934
        %v980 = vpop.xlane.xlu0 %979
        %981 = vadd.xlane.f32.xlu0 %v939
        %v982 = vpop.xlane.xlu0 %981
        %983 = vadd.xlane.f32.xlu0 %v942
        %v984 = vpop.xlane.xlu0 %983
        %985 = vadd.xlane.f32.xlu0 %v947
        %v986 = vpop.xlane.xlu0 %985
        %987 = vadd.xlane.f32.xlu0 %v950
        %v988 = vpop.xlane.xlu0 %987
        %989 = vadd.xlane.f32.xlu0 %v955
        %v990 = vpop.xlane.xlu0 %989
        %991 = vadd.xlane.f32.xlu0 %v958
        %v992 = vpop.xlane.xlu0 %991
        %v993 = vmul.f32 %v962, 0.015625
        %v994 = vmul.f32 %v964, 0.015625
        %v995 = vmul.f32 %v966, 0.015625
        %v996 = vmul.f32 %v968, 0.015625
        %v997 = vmul.f32 %v970, 0.015625
        %v998 = vmul.f32 %v972, 0.015625
        %v999 = vmul.f32 %v974, 0.015625
        %v1000 = vmul.f32 %v976, 0.015625
        %v1001 = vmul.f32 %v978, 0.015625
        %v1002 = vmul.f32 %v980, 0.015625
        %v1003 = vmul.f32 %v982, 0.015625
        %v1004 = vmul.f32 %v984, 0.015625
        %v1005 = vmul.f32 %v986, 0.015625
        %v1006 = vmul.f32 %v988, 0.015625
        %v1007 = vmul.f32 %v990, 0.015625
        %v1008 = vmul.f32 %v992, 0.015625
        %v1009 = vlaneseq
        %v1010 = vand.u32 %v1009, 127
        %vm1011 = vcmp.lt.s32.totalorder %v1010, 64
        %v1012 = vsel %vm1011, 1, 0
        %v1013 = vcvt.s32.f32 %v1012
        %v1014 = vsub.f32 %v899, %v993
        %v1015 = vsub.f32 %v902, %v994
        %v1016 = vsub.f32 %v907, %v995
        %v1017 = vsub.f32 %v910, %v996
        %v1018 = vsub.f32 %v915, %v997
        %v1019 = vsub.f32 %v918, %v998
        %v1020 = vsub.f32 %v923, %v999
        %v1021 = vsub.f32 %v926, %v1000
        %v1022 = vsub.f32 %v931, %v1001
        %v1023 = vsub.f32 %v934, %v1002
        %v1024 = vsub.f32 %v939, %v1003
        %v1025 = vsub.f32 %v942, %v1004
        %v1026 = vsub.f32 %v947, %v1005
        %v1027 = vsub.f32 %v950, %v1006
        %v1028 = vsub.f32 %v955, %v1007
        %v1029 = vsub.f32 %v958, %v1008
        %v1030 = vmul.f32 %v1014, %v1013
        %v1031 = vmul.f32 %v1015, %v1013
        %v1032 = vmul.f32 %v1016, %v1013
        %v1033 = vmul.f32 %v1017, %v1013
        %v1034 = vmul.f32 %v1018, %v1013
        %v1035 = vmul.f32 %v1019, %v1013
        %v1036 = vmul.f32 %v1020, %v1013
        %v1037 = vmul.f32 %v1021, %v1013
        %v1038 = vmul.f32 %v1022, %v1013
        %v1039 = vmul.f32 %v1023, %v1013
        %v1040 = vmul.f32 %v1024, %v1013
        %v1041 = vmul.f32 %v1025, %v1013
        %v1042 = vmul.f32 %v1026, %v1013
        %v1043 = vmul.f32 %v1027, %v1013
        %v1044 = vmul.f32 %v1028, %v1013
        %v1045 = vmul.f32 %v1029, %v1013
        %v1046 = vmul.f32 %v1030, %v1030
        %v1047 = vmul.f32 %v1031, %v1031
        %v1048 = vmul.f32 %v1032, %v1032
        %v1049 = vmul.f32 %v1033, %v1033
        %v1050 = vmul.f32 %v1034, %v1034
        %v1051 = vmul.f32 %v1035, %v1035
        %v1052 = vmul.f32 %v1036, %v1036
        %v1053 = vmul.f32 %v1037, %v1037
        %v1054 = vmul.f32 %v1038, %v1038
        %v1055 = vmul.f32 %v1039, %v1039
        %v1056 = vmul.f32 %v1040, %v1040
        %v1057 = vmul.f32 %v1041, %v1041
        %v1058 = vmul.f32 %v1042, %v1042
        %v1059 = vmul.f32 %v1043, %v1043
        %v1060 = vmul.f32 %v1044, %v1044
        %v1061 = vmul.f32 %v1045, %v1045
        %1062 = vadd.xlane.f32.xlu0 %v1046
        %v1063 = vpop.xlane.xlu0 %1062
        %1064 = vadd.xlane.f32.xlu0 %v1047
        %v1065 = vpop.xlane.xlu0 %1064
        %1066 = vadd.xlane.f32.xlu0 %v1048
        %v1067 = vpop.xlane.xlu0 %1066
        %1068 = vadd.xlane.f32.xlu0 %v1049
        %v1069 = vpop.xlane.xlu0 %1068
        %1070 = vadd.xlane.f32.xlu0 %v1050
        %v1071 = vpop.xlane.xlu0 %1070
        %1072 = vadd.xlane.f32.xlu0 %v1051
        %v1073 = vpop.xlane.xlu0 %1072
        %1074 = vadd.xlane.f32.xlu0 %v1052
        %v1075 = vpop.xlane.xlu0 %1074
        %1076 = vadd.xlane.f32.xlu0 %v1053
        %v1077 = vpop.xlane.xlu0 %1076
        %1078 = vadd.xlane.f32.xlu0 %v1054
        %v1079 = vpop.xlane.xlu0 %1078
        %1080 = vadd.xlane.f32.xlu0 %v1055
        %v1081 = vpop.xlane.xlu0 %1080
        %1082 = vadd.xlane.f32.xlu0 %v1056
        %v1083 = vpop.xlane.xlu0 %1082
        %1084 = vadd.xlane.f32.xlu0 %v1057
        %v1085 = vpop.xlane.xlu0 %1084
        %1086 = vadd.xlane.f32.xlu0 %v1058
        %v1087 = vpop.xlane.xlu0 %1086
        %1088 = vadd.xlane.f32.xlu0 %v1059
        %v1089 = vpop.xlane.xlu0 %1088
        %1090 = vadd.xlane.f32.xlu0 %v1060
        %v1091 = vpop.xlane.xlu0 %1090
        %1092 = vadd.xlane.f32.xlu0 %v1061
        %v1093 = vpop.xlane.xlu0 %1092
        %v1094 = vmul.f32 %v1063, 0.015625
        %v1095 = vmul.f32 %v1065, 0.015625
        %v1096 = vmul.f32 %v1067, 0.015625
        %v1097 = vmul.f32 %v1069, 0.015625
        %v1098 = vmul.f32 %v1071, 0.015625
        %v1099 = vmul.f32 %v1073, 0.015625
        %v1100 = vmul.f32 %v1075, 0.015625
        %v1101 = vmul.f32 %v1077, 0.015625
        %v1102 = vmul.f32 %v1079, 0.015625
        %v1103 = vmul.f32 %v1081, 0.015625
        %v1104 = vmul.f32 %v1083, 0.015625
        %v1105 = vmul.f32 %v1085, 0.015625
        %v1106 = vmul.f32 %v1087, 0.015625
        %v1107 = vmul.f32 %v1089, 0.015625
        %v1108 = vmul.f32 %v1091, 0.015625
        %v1109 = vmul.f32 %v1093, 0.015625
        %v1110 = vadd.f32 %v1094, 1e-05
        %v1111 = vadd.f32 %v1095, 1e-05
        %v1112 = vadd.f32 %v1096, 1e-05
        %v1113 = vadd.f32 %v1097, 1e-05
        %v1114 = vadd.f32 %v1098, 1e-05
        %v1115 = vadd.f32 %v1099, 1e-05
        %v1116 = vadd.f32 %v1100, 1e-05
        %v1117 = vadd.f32 %v1101, 1e-05
        %v1118 = vadd.f32 %v1102, 1e-05
        %v1119 = vadd.f32 %v1103, 1e-05
        %v1120 = vadd.f32 %v1104, 1e-05
        %v1121 = vadd.f32 %v1105, 1e-05
        %v1122 = vadd.f32 %v1106, 1e-05
        %v1123 = vadd.f32 %v1107, 1e-05
        %v1124 = vadd.f32 %v1108, 1e-05
        %v1125 = vadd.f32 %v1109, 1e-05
        %v1126 = vrsqrt.pop %v1110
        %v1127 = vrsqrt.pop %v1111
        %v1128 = vrsqrt.pop %v1112
        %v1129 = vrsqrt.pop %v1113
        %v1130 = vrsqrt.pop %v1114
        %v1131 = vrsqrt.pop %v1115
        %v1132 = vrsqrt.pop %v1116
        %v1133 = vrsqrt.pop %v1117
        %v1134 = vrsqrt.pop %v1118
        %v1135 = vrsqrt.pop %v1119
        %v1136 = vrsqrt.pop %v1120
        %v1137 = vrsqrt.pop %v1121
        %v1138 = vrsqrt.pop %v1122
        %v1139 = vrsqrt.pop %v1123
        %v1140 = vrsqrt.pop %v1124
        %v1141 = vrsqrt.pop %v1125
        %v1142 = vmul.f32 %v1030, %v1126
        %v1143 = vmul.f32 %v1031, %v1127
        %v1144 = vmul.f32 %v1032, %v1128
        %v1145 = vmul.f32 %v1033, %v1129
        %v1146 = vmul.f32 %v1034, %v1130
        %v1147 = vmul.f32 %v1035, %v1131
        %v1148 = vmul.f32 %v1036, %v1132
        %v1149 = vmul.f32 %v1037, %v1133
        %v1150 = vmul.f32 %v1038, %v1134
        %v1151 = vmul.f32 %v1039, %v1135
        %v1152 = vmul.f32 %v1040, %v1136
        %v1153 = vmul.f32 %v1041, %v1137
        %v1154 = vmul.f32 %v1042, %v1138
        %v1155 = vmul.f32 %v1043, %v1139
        %v1156 = vmul.f32 %v1044, %v1140
        %v1157 = vmul.f32 %v1045, %v1141
        %v1158 = vld [vmem:[%s5] sm:$0x1]
        %v1160 = vlaneseq
        %v1161 = vshrl.u32 %v1160, 7
        %v1162 = vsub.s32 0, %v1161
        %v1163 = vrot.slane %v1158, %v1162
        %v1165 = vmul.f32 %v1142, %v1163
        %v1166 = vmul.f32 %v1143, %v1163
        %v1167 = vmul.f32 %v1144, %v1163
        %v1168 = vmul.f32 %v1145, %v1163
        %v1169 = vmul.f32 %v1146, %v1163
        %v1170 = vmul.f32 %v1147, %v1163
        %v1171 = vmul.f32 %v1148, %v1163
        %v1172 = vmul.f32 %v1149, %v1163
        %v1173 = vmul.f32 %v1150, %v1163
        %v1174 = vmul.f32 %v1151, %v1163
        %v1175 = vmul.f32 %v1152, %v1163
        %v1176 = vmul.f32 %v1153, %v1163
        %v1177 = vmul.f32 %v1154, %v1163
        %v1178 = vmul.f32 %v1155, %v1163
        %v1179 = vmul.f32 %v1156, %v1163
        %v1180 = vmul.f32 %v1157, %v1163
        %v1181 = vld [vmem:[%s6] sm:$0x1]
        %v1183 = vlaneseq
        %v1184 = vshrl.u32 %v1183, 7
        %v1185 = vsub.s32 0, %v1184
        %v1186 = vrot.slane %v1181, %v1185
        %v1188 = vadd.f32 %v1165, %v1186
        %v1189 = vadd.f32 %v1166, %v1186
        %v1190 = vadd.f32 %v1167, %v1186
        %v1191 = vadd.f32 %v1168, %v1186
        %v1192 = vadd.f32 %v1169, %v1186
        %v1193 = vadd.f32 %v1170, %v1186
        %v1194 = vadd.f32 %v1171, %v1186
        %v1195 = vadd.f32 %v1172, %v1186
        %v1196 = vadd.f32 %v1173, %v1186
        %v1197 = vadd.f32 %v1174, %v1186
        %v1198 = vadd.f32 %v1175, %v1186
        %v1199 = vadd.f32 %v1176, %v1186
        %v1200 = vadd.f32 %v1177, %v1186
        %v1201 = vadd.f32 %v1178, %v1186
        %v1202 = vadd.f32 %v1179, %v1186
        %v1203 = vadd.f32 %v1180, %v1186
        %v1204 = vadd.f32 %v1188, %v1189
        %v1205 = vrot.slane %v1204, 4
        %v1206 = vadd.f32 %v1204, %v1205
        %v1207 = vrot.slane %v1206, 2
        %v1208 = vadd.f32 %v1206, %v1207
        %v1209 = vrot.slane %v1208, 1
        %v1210 = vadd.f32 %v1208, %v1209
        %v1211 = vadd.f32 %v1190, %v1191
        %v1212 = vrot.slane %v1211, 4
        %v1213 = vadd.f32 %v1211, %v1212
        %v1214 = vrot.slane %v1213, 2
        %v1215 = vadd.f32 %v1213, %v1214
        %v1216 = vrot.slane %v1215, 1
        %v1217 = vadd.f32 %v1215, %v1216
        %v1218 = vadd.f32 %v1192, %v1193
        %v1219 = vrot.slane %v1218, 4
        %v1220 = vadd.f32 %v1218, %v1219
        %v1221 = vrot.slane %v1220, 2
        %v1222 = vadd.f32 %v1220, %v1221
        %v1223 = vrot.slane %v1222, 1
        %v1224 = vadd.f32 %v1222, %v1223
        %v1225 = vadd.f32 %v1194, %v1195
        %v1226 = vrot.slane %v1225, 4
        %v1227 = vadd.f32 %v1225, %v1226
        %v1228 = vrot.slane %v1227, 2
        %v1229 = vadd.f32 %v1227, %v1228
        %v1230 = vrot.slane %v1229, 1
        %v1231 = vadd.f32 %v1229, %v1230
        %v1232 = vadd.f32 %v1196, %v1197
        %v1233 = vrot.slane %v1232, 4
        %v1234 = vadd.f32 %v1232, %v1233
        %v1235 = vrot.slane %v1234, 2
        %v1236 = vadd.f32 %v1234, %v1235
        %v1237 = vrot.slane %v1236, 1
        %v1238 = vadd.f32 %v1236, %v1237
        %v1239 = vadd.f32 %v1198, %v1199
        %v1240 = vrot.slane %v1239, 4
        %v1241 = vadd.f32 %v1239, %v1240
        %v1242 = vrot.slane %v1241, 2
        %v1243 = vadd.f32 %v1241, %v1242
        %v1244 = vrot.slane %v1243, 1
        %v1245 = vadd.f32 %v1243, %v1244
        %v1246 = vadd.f32 %v1200, %v1201
        %v1247 = vrot.slane %v1246, 4
        %v1248 = vadd.f32 %v1246, %v1247
        %v1249 = vrot.slane %v1248, 2
        %v1250 = vadd.f32 %v1248, %v1249
        %v1251 = vrot.slane %v1250, 1
        %v1252 = vadd.f32 %v1250, %v1251
        %v1253 = vadd.f32 %v1202, %v1203
        %v1254 = vrot.slane %v1253, 4
        %v1255 = vadd.f32 %v1253, %v1254
        %v1256 = vrot.slane %v1255, 2
        %v1257 = vadd.f32 %v1255, %v1256
        %v1258 = vrot.slane %v1257, 1
        %v1259 = vadd.f32 %v1257, %v1258
        %v1260 = vmul.f32 %v1210, 0.0625
        %v1261 = vmul.f32 %v1217, 0.0625
        %v1262 = vmul.f32 %v1224, 0.0625
        %v1263 = vmul.f32 %v1231, 0.0625
        %v1264 = vmul.f32 %v1238, 0.0625
        %v1265 = vmul.f32 %v1245, 0.0625
        %v1266 = vmul.f32 %v1252, 0.0625
        %v1267 = vmul.f32 %v1259, 0.0625
        %vm1276 = vcmask 1041409
        %v1277 = vsel %vm1276, %v1261, %v1260
        %vm1278 = vcmask 1042434
        %v1279 = vsel %vm1278, %v1262, %v1277
        %vm1280 = vcmask 1043459
        %v1281 = vsel %vm1280, %v1263, %v1279
        %vm1282 = vcmask 1044484
        %v1283 = vsel %vm1282, %v1264, %v1281
        %vm1284 = vcmask 1045509
        %v1285 = vsel %vm1284, %v1265, %v1283
        %vm1286 = vcmask 1046534
        %v1287 = vsel %vm1286, %v1266, %v1285
        %vm1288 = vcmask 1047559
        %v1289 = vsel %vm1288, %v1267, %v1287
        %1291 = vst [vmem:[%s520] sm:$0xff] %v1289
        %v1292 = vpack.c.bf16 %v1260, %v1260
        %v1293 = vpack.c.bf16 %v1261, %v1261
        %v1294 = vpack.c.bf16 %v1262, %v1262
        %v1295 = vpack.c.bf16 %v1263, %v1263
        %v1296 = vpack.c.bf16 %v1264, %v1264
        %v1297 = vpack.c.bf16 %v1265, %v1265
        %v1298 = vpack.c.bf16 %v1266, %v1266
        %v1299 = vpack.c.bf16 %v1267, %v1267
        %v1300 = vld [vmem:[#allocation8] sm:$0xf]
        %v1301 = vld [vmem:[#allocation8 + $0x4] sm:$0xf]
        %v1302 = vld [vmem:[#allocation8 + $0x8] sm:$0xf]
        %v1303 = vld [vmem:[#allocation8 + $0xc] sm:$0xf]
        %v1304 = vld [vmem:[#allocation8 + $0x10] sm:$0xf]
        %v1305 = vld [vmem:[#allocation8 + $0x14] sm:$0xf]
        %v1306 = vld [vmem:[#allocation8 + $0x18] sm:$0xf]
        %v1307 = vld [vmem:[#allocation8 + $0x1c] sm:$0xf]
        %v1308 = vld [vmem:[#allocation8 + $0x20] sm:$0xf]
        %v1309 = vld [vmem:[#allocation8 + $0x24] sm:$0xf]
        %v1310 = vld [vmem:[#allocation8 + $0x28] sm:$0xf]
        %v1311 = vld [vmem:[#allocation8 + $0x2c] sm:$0xf]
        %v1312 = vld [vmem:[#allocation8 + $0x30] sm:$0xf]
        %v1313 = vld [vmem:[#allocation8 + $0x34] sm:$0xf]
        %v1314 = vld [vmem:[#allocation8 + $0x38] sm:$0xf]
        %v1315 = vld [vmem:[#allocation8 + $0x3c] sm:$0xf]
        %v1316 = vld [vmem:[%s8] sm:$0x1]
        %v1318 = vlaneseq
        %v1319 = vshrl.u32 %v1318, 7
        %v1320 = vsub.s32 0, %v1319
        %v1321 = vrot.slane %v1316, %v1320
        %v1331 = vunpack.c.l.b16 %v1292
        %v1332 = vunpack.c.l.b16 %v1293
        %v1333 = vunpack.c.l.b16 %v1294
        %v1334 = vunpack.c.l.b16 %v1295
        %v1335 = vunpack.c.l.b16 %v1296
        %v1336 = vunpack.c.l.b16 %v1297
        %v1337 = vunpack.c.l.b16 %v1298
        %v1338 = vunpack.c.l.b16 %v1299
        %v1339 = vsel %vm1276, %v1332, %v1331
        %v1340 = vsel %vm1278, %v1333, %v1339
        %v1341 = vsel %vm1280, %v1334, %v1340
        %v1342 = vsel %vm1282, %v1335, %v1341
        %v1343 = vsel %vm1284, %v1336, %v1342
        %v1344 = vsel %vm1286, %v1337, %v1343
        %v1345 = vsel %vm1288, %v1338, %v1344
        %v1346 = vpack.c.b16 %v1345, %v1345
        %v1364 = vunpack.c.l.b16 %v1300
        %v1365 = vunpack.c.l.b16 %v1301
        %v1366 = vunpack.c.l.b16 %v1302
        %v1367 = vunpack.c.l.b16 %v1303
        %v1368 = vunpack.c.l.b16 %v1304
        %v1369 = vunpack.c.l.b16 %v1305
        %v1370 = vunpack.c.l.b16 %v1306
        %v1371 = vunpack.c.l.b16 %v1307
        %v1372 = vunpack.c.l.b16 %v1308
        %v1373 = vunpack.c.l.b16 %v1309
        %v1374 = vunpack.c.l.b16 %v1310
        %v1375 = vunpack.c.l.b16 %v1311
        %v1376 = vunpack.c.l.b16 %v1312
        %v1377 = vunpack.c.l.b16 %v1313
        %v1378 = vunpack.c.l.b16 %v1314
        %v1379 = vunpack.c.l.b16 %v1315
        %v1380 = vpack.c.b16 %v1365, %v1364
        %v1381 = vpack.c.b16 %v1367, %v1366
        %v1382 = vpack.c.b16 %v1369, %v1368
        %v1383 = vpack.c.b16 %v1371, %v1370
        %v1384 = vpack.c.b16 %v1373, %v1372
        %v1385 = vpack.c.b16 %v1375, %v1374
        %v1386 = vpack.c.b16 %v1377, %v1376
        %v1387 = vpack.c.b16 %v1379, %v1378
        %1396 = vmatprep.subr.bf16.mxu0 0
        %1397 = vmatpush1.bf16.msra.mxu0 %v1387
        %1398 = vmatprep.subr.bf16.mxu0 0
        %1399 = vmatpush1.bf16.msra.mxu0 %v1386
        %1400 = vmatprep.subr.bf16.mxu0 0
        %1401 = vmatpush1.bf16.msra.mxu0 %v1385
        %1402 = vmatprep.subr.bf16.mxu0 0
        %1403 = vmatpush1.bf16.msra.mxu0 %v1384
        %1404 = vmatprep.subr.bf16.mxu0 0
        %1405 = vmatpush1.bf16.msra.mxu0 %v1383
        %1406 = vmatprep.subr.bf16.mxu0 0
        %1407 = vmatpush1.bf16.msra.mxu0 %v1382
        %1408 = vmatprep.subr.bf16.mxu0 0
        %1409 = vmatpush1.bf16.msra.mxu0 %v1381
        %1410 = vmatprep.subr.bf16.mxu0 0
        %1411 = vmatpush1.bf16.msra.mxu0 %v1380
        %1412 = vmatprep.subr.bf16.mxu0 0
        %1413 = vmatpush2.bf16.msra.mxu0 0
        %1414 = vmatprep.subr.bf16.mxu0 0
        %1415 = vmatpush2.bf16.msra.mxu0 0
        %1416 = vmatprep.subr.bf16.mxu0 0
        %1417 = vmatpush2.bf16.msra.mxu0 0
        %1418 = vmatprep.subr.bf16.mxu0 0
        %1419 = vmatpush2.bf16.msra.mxu0 0
        %1420 = vmatprep.subr.bf16.mxu0 0
        %1421 = vmatpush2.bf16.msra.mxu0 0
        %1422 = vmatprep.subr.bf16.mxu0 0
        %1423 = vmatpush2.bf16.msra.mxu0 0
        %1424 = vmatprep.subr.bf16.mxu0 0
        %1425 = vmatpush2.bf16.msra.mxu0 0
        %1426 = vmatprep.subr.bf16.mxu0 0
        %1427 = vmatpush2.bf16.msra.mxu0 0
        %1428 = vmatprep.mubr.bf16.mxu0 0
        %1429 = vmatmul.mubr.bf16.gmra.mxu0 %v1346
        %v1430 = vpop.f32.mrf.mxu0
        %v1431 = vadd.f32 %v1321, %v1430
        %v1432 = vpop.f32.mrf.mxu0
        %v1433 = vpop.f32.mrf.mxu0
        %v1434 = vpop.f32.mrf.mxu0
        %1435 = vdwg.mxu0
        %vm1436 = vcmp.ge.s32.totalorder %v1010, 32
        %vm1437 = vmand %vm1436, %vm1011
        %v1438 = vtanh.pop %v1431
        %v1439 = vmax.f32 %v1431, 0.0
        %v1440 = vsel %vm1437, %v1438, %v1439
        %1441 = vst [vmem:[%s534] sm:$0xff] %v1440
        %v1442 = vpack.c.bf16 %v1440, %v1440
        %v1443 = vld [vmem:[#allocation10] sm:$0xf]
        %v1444 = vld [vmem:[#allocation10 + $0x4] sm:$0xf]
        %v1445 = vld [vmem:[#allocation10 + $0x8] sm:$0xf]
        %v1446 = vld [vmem:[#allocation10 + $0xc] sm:$0xf]
        %v1447 = vld [vmem:[#allocation10 + $0x10] sm:$0xf]
        %v1448 = vld [vmem:[#allocation10 + $0x14] sm:$0xf]
        %v1449 = vld [vmem:[#allocation10 + $0x18] sm:$0xf]
        %v1450 = vld [vmem:[#allocation10 + $0x1c] sm:$0xf]
        %v1451 = vld [vmem:[#allocation10 + $0x20] sm:$0xf]
        %v1452 = vld [vmem:[#allocation10 + $0x24] sm:$0xf]
        %v1453 = vld [vmem:[#allocation10 + $0x28] sm:$0xf]
        %v1454 = vld [vmem:[#allocation10 + $0x2c] sm:$0xf]
        %v1455 = vld [vmem:[#allocation10 + $0x30] sm:$0xf]
        %v1456 = vld [vmem:[#allocation10 + $0x34] sm:$0xf]
        %v1457 = vld [vmem:[#allocation10 + $0x38] sm:$0xf]
        %v1458 = vld [vmem:[#allocation10 + $0x3c] sm:$0xf]
        %v1459 = vld [vmem:[%s10] sm:$0x1]
        %v1461 = vlaneseq
        %v1462 = vshrl.u32 %v1461, 7
        %v1463 = vsub.s32 0, %v1462
        %v1464 = vrot.slane %v1459, %v1463
        %v1482 = vunpack.c.l.b16 %v1443
        %v1483 = vunpack.c.l.b16 %v1444
        %v1484 = vunpack.c.l.b16 %v1445
        %v1485 = vunpack.c.l.b16 %v1446
        %v1486 = vunpack.c.l.b16 %v1447
        %v1487 = vunpack.c.l.b16 %v1448
        %v1488 = vunpack.c.l.b16 %v1449
        %v1489 = vunpack.c.l.b16 %v1450
        %v1490 = vunpack.c.l.b16 %v1451
        %v1491 = vunpack.c.l.b16 %v1452
        %v1492 = vunpack.c.l.b16 %v1453
        %v1493 = vunpack.c.l.b16 %v1454
        %v1494 = vunpack.c.l.b16 %v1455
        %v1495 = vunpack.c.l.b16 %v1456
        %v1496 = vunpack.c.l.b16 %v1457
        %v1497 = vunpack.c.l.b16 %v1458
        %v1498 = vpack.c.b16 %v1483, %v1482
        %v1499 = vpack.c.b16 %v1485, %v1484
        %v1500 = vpack.c.b16 %v1487, %v1486
        %v1501 = vpack.c.b16 %v1489, %v1488
        %v1502 = vpack.c.b16 %v1491, %v1490
        %v1503 = vpack.c.b16 %v1493, %v1492
        %v1504 = vpack.c.b16 %v1495, %v1494
        %v1505 = vpack.c.b16 %v1497, %v1496
        %1514 = vmatprep.subr.bf16.mxu0 0
        %1515 = vmatpush1.bf16.msra.mxu0 %v1505
        %1516 = vmatprep.subr.bf16.mxu0 0
        %1517 = vmatpush1.bf16.msra.mxu0 %v1504
        %1518 = vmatprep.subr.bf16.mxu0 0
        %1519 = vmatpush1.bf16.msra.mxu0 %v1503
        %1520 = vmatprep.subr.bf16.mxu0 0
        %1521 = vmatpush1.bf16.msra.mxu0 %v1502
        %1522 = vmatprep.subr.bf16.mxu0 0
        %1523 = vmatpush1.bf16.msra.mxu0 %v1501
        %1524 = vmatprep.subr.bf16.mxu0 0
        %1525 = vmatpush1.bf16.msra.mxu0 %v1500
        %1526 = vmatprep.subr.bf16.mxu0 0
        %1527 = vmatpush1.bf16.msra.mxu0 %v1499
        %1528 = vmatprep.subr.bf16.mxu0 0
        %1529 = vmatpush1.bf16.msra.mxu0 %v1498
        %1530 = vmatprep.subr.bf16.mxu0 0
        %1531 = vmatpush2.bf16.msra.mxu0 0
        %1532 = vmatprep.subr.bf16.mxu0 0
        %1533 = vmatpush2.bf16.msra.mxu0 0
        %1534 = vmatprep.subr.bf16.mxu0 0
        %1535 = vmatpush2.bf16.msra.mxu0 0
        %1536 = vmatprep.subr.bf16.mxu0 0
        %1537 = vmatpush2.bf16.msra.mxu0 0
        %1538 = vmatprep.subr.bf16.mxu0 0
        %1539 = vmatpush2.bf16.msra.mxu0 0
        %1540 = vmatprep.subr.bf16.mxu0 0
        %1541 = vmatpush2.bf16.msra.mxu0 0
        %1542 = vmatprep.subr.bf16.mxu0 0
        %1543 = vmatpush2.bf16.msra.mxu0 0
        %1544 = vmatprep.subr.bf16.mxu0 0
        %1545 = vmatpush2.bf16.msra.mxu0 0
        %1546 = vmatprep.mubr.bf16.mxu0 0
        %1547 = vmatmul.mubr.bf16.gmra.mxu0 %v1442
        %v1548 = vpop.f32.mrf.mxu0
        %v1549 = vadd.f32 %v1464, %v1548
        %v1550 = vpop.f32.mrf.mxu0
        %v1551 = vpop.f32.mrf.mxu0
        %v1552 = vpop.f32.mrf.mxu0
        %1553 = vdwg.mxu0
        %1554 = vst [vmem:[%s527] sm:$0xff] %v1549
        %s1555 = sand.u32 %s280, 1
        %s1556 = scalar_lea.sflag [#allocation4], %s1555
        %s1557 = sand.u32 %s280, 1
        %s1558 = smul.addr %s1557, 8
        %s1559 = scalar_lea.vmem [#allocation11], %s1558
        %s1560 = sand.u32 %s36, 1
        %s1561 = scalar_lea.sflag [#allocation13], %s1560
        %s1562 = sand.u32 %s306, 1
        %s1563 = smul.addr %s1562, 8
        %s1564 = scalar_lea.vmem [#allocation12], %s1563
        %s1565 = sand.u32 %s36, 1
        %s1566 = scalar_lea.sflag [#allocation13], %s1565
        %s1567 = sand.u32 %s332, 1
        %s1568 = smul.addr %s1567, 8
        %s1569 = scalar_lea.vmem [#allocation14], %s1568
        // Predicated region
        $region85: #{tpu_custom_call.1} parent=63 // pred_check
          %p1570 = pneg %p290
        $region86: #{tpu_custom_call.1} parent=63 // pred_check_branch
          %1572 = sbr.rel (%p1570) target = $region88
        $region87: #{tpu_custom_call.1} parent=63 // pred_region
          %s1574 = ssub.s32 128, 128
          %1575 = vsyncadd %s1556, %s1574
          %s1576 = smul.addr %s36, 128
          %s1577 = scalar_lea.hbm %s11, %s1576
          %s1579 = sshll.u32 %s1559, 4
          %s1580 = int_to_ptr.vmem [resolvable:$true] %s1579
          %1582 = dma.vmem_to_hbm [thread:$0]  %s1580, 128, %s1577, %s1556
        $region88: #{tpu_custom_call.1} parent=63 // pred_fallthru
          _
        // Predicated region
        $region89: #{tpu_custom_call.1} parent=63 // pred_check
          %p1583 = pneg %p316
        $region90: #{tpu_custom_call.1} parent=63 // pred_check_branch
          %1585 = sbr.rel (%p1583) target = $region92
        $region91: #{tpu_custom_call.1} parent=63 // pred_region
          %s1587 = ssub.s32 128, 128
          %1588 = vsyncadd %s1561, %s1587
          %s1589 = smul.addr %s36, 128
          %s1590 = scalar_lea.hbm %s12, %s1589
          %s1592 = sshll.u32 %s1564, 4
          %s1593 = int_to_ptr.vmem [resolvable:$true] %s1592
          %1595 = dma.vmem_to_hbm [thread:$0]  %s1593, 128, %s1590, %s1561
        $region92: #{tpu_custom_call.1} parent=63 // pred_fallthru
          _
        // Predicated region
        $region93: #{tpu_custom_call.1} parent=63 // pred_check
          %p1596 = pneg %p342
        $region94: #{tpu_custom_call.1} parent=63 // pred_check_branch
          %1598 = sbr.rel (%p1596) target = $region96
        $region95: #{tpu_custom_call.1} parent=63 // pred_region
          %s1600 = ssub.s32 128, 128
          %1601 = vsyncadd %s1566, %s1600
          %s1602 = smul.addr %s36, 128
          %s1603 = scalar_lea.hbm %s13, %s1602
          %s1605 = sshll.u32 %s1569, 4
          %s1606 = int_to_ptr.vmem [resolvable:$true] %s1605
          %1608 = dma.vmem_to_hbm [thread:$0]  %s1606, 128, %s1603, %s1566
        $region96: #{tpu_custom_call.1} parent=63 // pred_fallthru
          _
      $region64: #{tpu_custom_call.1} parent=5 // pred_fallthru
        _
      %p1609 = scmp.le.s32.totalorder 2, %s31
      // Predicated region
      $region97: #{tpu_custom_call.1} parent=5 // pred_check
        %p1610 = pneg %p1609
      $region98: #{tpu_custom_call.1} parent=5 // pred_check_branch
        %1612 = sbr.rel (%p1610) target = $region100
      $region99: #{tpu_custom_call.1} parent=5 // pred_region
        %s1613 = ssub.s32 %s31, 2
        // Predicated region
        $region101: #{tpu_custom_call.1} parent=99 // pred_check
          %p1614 = pneg %p296
        $region102: #{tpu_custom_call.1} parent=99 // pred_check_branch
          %1616 = sbr.rel (%p1614) target = $region104
        $region103: #{tpu_custom_call.1} parent=99 // pred_region
          %s1617 = sand.u32 %s281, 1
          %s1618 = scalar_lea.sflag [#allocation4], %s1617
          %s1619 = sand.u32 %s281, 1
          %s1620 = smul.addr %s1619, 8
          %s1621 = scalar_lea.vmem [#allocation11], %s1620
          %1622 = dma.done %s1618, 128
        $region104: #{tpu_custom_call.1} parent=99 // pred_fallthru
          _
        // Predicated region
        $region105: #{tpu_custom_call.1} parent=99 // pred_check
          %p1623 = pneg %p322
        $region106: #{tpu_custom_call.1} parent=99 // pred_check_branch
          %1625 = sbr.rel (%p1623) target = $region108
        $region107: #{tpu_custom_call.1} parent=99 // pred_region
          %s1626 = sand.u32 %s37, 1
          %s1627 = scalar_lea.sflag [#allocation13], %s1626
          %s1628 = sand.u32 %s307, 1
          %s1629 = smul.addr %s1628, 8
          %s1630 = scalar_lea.vmem [#allocation12], %s1629
          %1631 = dma.done %s1627, 128
        $region108: #{tpu_custom_call.1} parent=99 // pred_fallthru
          _
        // Predicated region
        $region109: #{tpu_custom_call.1} parent=99 // pred_check
          %p1632 = pneg %p348
        $region110: #{tpu_custom_call.1} parent=99 // pred_check_branch
          %1634 = sbr.rel (%p1632) target = $region112
        $region111: #{tpu_custom_call.1} parent=99 // pred_region
          %s1635 = sand.u32 %s37, 1
          %s1636 = scalar_lea.sflag [#allocation13], %s1635
          %s1637 = sand.u32 %s333, 1
          %s1638 = smul.addr %s1637, 8
          %s1639 = scalar_lea.vmem [#allocation14], %s1638
          %1640 = dma.done %s1636, 128
        $region112: #{tpu_custom_call.1} parent=99 // pred_fallthru
          _
      $region100: #{tpu_custom_call.1} parent=5 // pred_fallthru
        _
    $region6: #{tpu_custom_call.1} parent=1 // loop_footer
      %s35 = sadd.s32 1, %s31
    $region7: #{tpu_custom_call.1} parent=1 // loop_footer_branch
      %30 = sbr.rel target = $region3
    $region8: #{tpu_custom_call.1} parent=1 // loop_exit
      _
    %1641 = vsyncpa [#allocation3], 1
    %s1642 = scalar_lea.sflag [#allocation3], 1
    %1643 = vsyncpa %s1642, 1
    %1644 = vsyncpa [#allocation6], 1
    %1645 = vsyncpa [#allocation9], 1
    %1646 = vsyncpa [#allocation4], 1
    %s1647 = scalar_lea.sflag [#allocation4], 1
    %1648 = vsyncpa %s1647, 1
    %1649 = vsyncpa [#allocation13], 1
    %s1650 = scalar_lea.sflag [#allocation13], 1
    %1651 = vsyncpa %s1650, 1

// kernel: tpu_custom_call.1
$region0: #{tpu_custom_call.1}
  #allocation0 [shape = 'u32[]', space=smem, size = 0x4, offset = 0x4, fixed_abs, tag = 'smem constant byte address 0x4 - core index']
  #allocation1 [shape = 'u32[144,128]{1,0:T(1,128)}', space=vmem, size = 0x12000, scoped, tag = 'internal scratch']
  %s0 = inlined_call_operand.hbm [shape: bf16[256,128], index: 0, kind: input, shape index: {}]
  %s1 = inlined_call_operand.hbm [shape: bf16[128,128], index: 1, kind: input, shape index: {}]
  %s2 = inlined_call_operand.vmem [shape: f32[1,128], index: 2, kind: input, shape index: {}]
  %s3 = inlined_call_operand.hbm [shape: bf16[128,128], index: 3, kind: input, shape index: {}]
  %s4 = inlined_call_operand.vmem [shape: f32[1,128], index: 4, kind: input, shape index: {}]
  %s5 = inlined_call_operand.vmem [shape: f32[1,128], index: 5, kind: input, shape index: {}]
  %s6 = inlined_call_operand.vmem [shape: f32[1,128], index: 6, kind: input, shape index: {}]
  %s7 = inlined_call_operand.hbm [shape: bf16[128,128], index: 7, kind: input, shape index: {}]
  %s8 = inlined_call_operand.vmem [shape: f32[1,128], index: 8, kind: input, shape index: {}]
  %s9 = inlined_call_operand.hbm [shape: bf16[128,128], index: 9, kind: input, shape index: {}]
  %s10 = inlined_call_operand.vmem [shape: f32[1,128], index: 10, kind: input, shape index: {}]
  %s11 = inlined_call_operand.hbm [shape: f32[16,128], index: 11, kind: output, shape index: {0}]
  %s12 = inlined_call_operand.hbm [shape: f32[16,128], index: 12, kind: output, shape index: {1}]
  %s13 = inlined_call_operand.hbm [shape: f32[16,128], index: 13, kind: output, shape index: {2}]
  %14 = xla_tuple %s11, %s12, %s13
  %s15 = sld [smem:[#allocation0]]
  $region113: #{tpu_custom_call.1} parent=0
    _
  %s17 = ssub.s32 1, %s15
  %s18 = scalar_select 0, %s17, %s15
  $region1: #{tpu_custom_call.1} parent=0
    #allocation2 [shape = 'u8[65536]{0}', space=vmem, size = 0x10000, scoped, tag = 'input window, operand 0']
    #allocation3 [shape = 's32[2]{0}', space=sflag, size = 0x8, scoped, tag = 'scoped memory for tpu_custom_call.1']
    #allocation4 [shape = 's32[2]{0}', space=sflag, size = 0x8, scoped, tag = 'scoped memory for tpu_custom_call.1']
    #allocation5 [shape = 'u8[32768]{0}', space=vmem, size = 0x8000, scoped, tag = 'input window, operand 1, single buffered']
    #allocation6 [shape = 's32[1]{0}', space=sflag, size = 0x4, scoped, tag = 'scoped memory for tpu_custom_call.1']
    #allocation7 [shape = 'u8[32768]{0}', space=vmem, size = 0x8000, scoped, tag = 'input window, operand 3, single buffered']
    #allocation8 [shape = 'u8[32768]{0}', space=vmem, size = 0x8000, scoped, tag = 'input window, operand 7, single buffered']
    #allocation9 [shape = 's32[1]{0}', space=sflag, size = 0x4, scoped, tag = 'scoped memory for tpu_custom_call.1']
    #allocation10 [shape = 'u8[32768]{0}', space=vmem, size = 0x8000, scoped, tag = 'input window, operand 9, single buffered']
    #allocation11 [shape = 'u8[8192]{0}', space=vmem, size = 0x2000, scoped, tag = 'output window, operand 0']
    #allocation12 [shape = 'u8[8192]{0}', space=vmem, size = 0x2000, scoped, tag = 'output window, operand 1']
    #allocation13 [shape = 's32[2]{0}', space=sflag, size = 0x8, scoped, tag = 'scoped memory for tpu_custom_call.1']
    #allocation14 [shape = 'u8[8192]{0}', space=vmem, size = 0x2000, scoped, tag = 'output window, operand 2']
    %19 = vsyncpa [#allocation3], 0
    %s20 = scalar_lea.sflag [#allocation3], 1
    %21 = vsyncpa %s20, 0
    %22 = vsyncpa [#allocation6], 0
    %23 = vsyncpa [#allocation9], 0
    %24 = vsyncpa [#allocation4], 0
    %s25 = scalar_lea.sflag [#allocation4], 1
    %26 = vsyncpa %s25, 0
    %27 = vsyncpa [#allocation13], 0
    %s28 = scalar_lea.sflag [#allocation13], 1
    %29 = vsyncpa %s28, 0
    loop: start=0, step=1, limit=4
    $region2: #{tpu_custom_call.1} parent=1 // loop_pre_header
      _
    $region3: #{tpu_custom_call.1} parent=1 // loop_header
      %s31 = sphi 0, %s35
      %p32 = scmp.ge.s32.totalorder %s31, 4
      %s41 = sphi 0, %s43
      %s44 = sphi 0, %s41
      %s45 = sphi 0, %s44
      %s61 = sphi 0, %s45
      %s65 = sphi 0, %s65
      %s67 = sphi 0, %s65
      %s68 = sphi 0, %s67
      %s82 = sphi 0, %s68
      %s86 = sphi 0, %s86
      %s88 = sphi 0, %s86
      %s89 = sphi 0, %s88
      %s103 = sphi 0, %s89
      %s107 = sphi 0, %s107
      %s109 = sphi 0, %s107
      %s110 = sphi 0, %s109
      %s124 = sphi 0, %s110
      %s128 = sphi 0, %s128
      %s130 = sphi 0, %s128
      %s131 = sphi 0, %s130
      %s145 = sphi 0, %s131
      %s149 = sphi 0, %s149
      %s151 = sphi 0, %s149
      %s152 = sphi 0, %s151
      %s166 = sphi 0, %s152
      %s170 = sphi 0, %s170
      %s172 = sphi 0, %s170
      %s173 = sphi 0, %s172
      %s187 = sphi 0, %s173
      %s191 = sphi 0, %s191
      %s193 = sphi 0, %s191
      %s194 = sphi 0, %s193
      %s208 = sphi 0, %s194
      %s212 = sphi 0, %s212
      %s214 = sphi 0, %s212
      %s215 = sphi 0, %s214
      %s229 = sphi 0, %s215
      %s233 = sphi 0, %s233
      %s235 = sphi 0, %s233
      %s236 = sphi 0, %s235
      %s250 = sphi 0, %s236
      %s254 = sphi 0, %s254
      %s256 = sphi 0, %s254
      %s257 = sphi 0, %s256
      %s271 = sphi 0, %s257
      %s277 = sphi 0, %s279
      %s280 = sphi 0, %s277
      %s281 = sphi 0, %s280
      %s297 = sphi 0, %s281
      %s303 = sphi 0, %s305
      %s306 = sphi 0, %s303
      %s307 = sphi 0, %s306
      %s323 = sphi 0, %s307
      %s329 = sphi 0, %s331
      %s332 = sphi 0, %s329
      %s333 = sphi 0, %s332
      %s349 = sphi 0, %s333
    $region4: #{tpu_custom_call.1} parent=1 // loop_header_branch
      %34 = sbr.rel (%p32) target = $region8
    $region5: #{tpu_custom_call.1} parent=1 // loop_body
      %s36 = ssub.s32 %s31, 1
      %s37 = ssub.s32 %s31, 2
      %s38 = sadd.s32 %s31, 1
      %s39 = ssub.s32 %s31, %s38
      %p40 = scmp.eq.s32.totalorder %s39, 0
      %s42 = sadd.s32 %s41, 1
      %s43 = scalar_select %p40, %s41, %s42
      %p46 = pneg %p40
      %p47 = scmp.eq.s32.totalorder %s31, 1
      %p48 = por %p46, %p47
      %p49 = scmp.ne.s32.totalorder %s41, %s44
      %p50 = scmp.eq.s32.totalorder %s31, 0
      %p51 = por %p49, %p50
      %p52 = scmp.ne.s32.totalorder %s41, %s44
      %p53 = scmp.eq.s32.totalorder %s36, 1
      %p54 = por %p52, %p53
      %p55 = scmp.ne.s32.totalorder %s44, %s45
      %p56 = scmp.eq.s32.totalorder %s36, 0
      %p57 = por %p55, %p56
      %p58 = scmp.ne.s32.totalorder %s44, %s45
      %p59 = scmp.eq.s32.totalorder %s37, 1
      %p60 = por %p58, %p59
      %p62 = scmp.ne.s32.totalorder %s45, %s61
      %p63 = scmp.eq.s32.totalorder %s37, 0
      %p64 = por %p62, %p63
      %s66 = sadd.s32 %s65, 1
      %p69 = scmp.eq.s32.totalorder %s31, 1
      %p70 = scmp.ne.s32.totalorder %s65, %s67
      %p71 = scmp.eq.s32.totalorder %s31, 0
      %p72 = por %p70, %p71
      %p73 = scmp.ne.s32.totalorder %s65, %s67
      %p74 = scmp.eq.s32.totalorder %s36, 1
      %p75 = por %p73, %p74
      %p76 = scmp.ne.s32.totalorder %s67, %s68
      %p77 = scmp.eq.s32.totalorder %s36, 0
      %p78 = por %p76, %p77
      %p79 = scmp.ne.s32.totalorder %s67, %s68
      %p80 = scmp.eq.s32.totalorder %s37, 1
      %p81 = por %p79, %p80
      %p83 = scmp.ne.s32.totalorder %s68, %s82
      %p84 = scmp.eq.s32.totalorder %s37, 0
      %p85 = por %p83, %p84
      %s87 = sadd.s32 %s86, 1
      %p90 = scmp.eq.s32.totalorder %s31, 1
      %p91 = scmp.ne.s32.totalorder %s86, %s88
      %p92 = scmp.eq.s32.totalorder %s31, 0
      %p93 = por %p91, %p92
      %p94 = scmp.ne.s32.totalorder %s86, %s88
      %p95 = scmp.eq.s32.totalorder %s36, 1
      %p96 = por %p94, %p95
      %p97 = scmp.ne.s32.totalorder %s88, %s89
      %p98 = scmp.eq.s32.totalorder %s36, 0
      %p99 = por %p97, %p98
      %p100 = scmp.ne.s32.totalorder %s88, %s89
      %p101 = scmp.eq.s32.totalorder %s37, 1
      %p102 = por %p100, %p101
      %p104 = scmp.ne.s32.totalorder %s89, %s103
      %p105 = scmp.eq.s32.totalorder %s37, 0
      %p106 = por %p104, %p105
      %s108 = sadd.s32 %s107, 1
      %p111 = scmp.eq.s32.totalorder %s31, 1
      %p112 = scmp.ne.s32.totalorder %s107, %s109
      %p113 = scmp.eq.s32.totalorder %s31, 0
      %p114 = por %p112, %p113
      %p115 = scmp.ne.s32.totalorder %s107, %s109
      %p116 = scmp.eq.s32.totalorder %s36, 1
      %p117 = por %p115, %p116
      %p118 = scmp.ne.s32.totalorder %s109, %s110
      %p119 = scmp.eq.s32.totalorder %s36, 0
      %p120 = por %p118, %p119
      %p121 = scmp.ne.s32.totalorder %s109, %s110
      %p122 = scmp.eq.s32.totalorder %s37, 1
      %p123 = por %p121, %p122
      %p125 = scmp.ne.s32.totalorder %s110, %s124
      %p126 = scmp.eq.s32.totalorder %s37, 0
      %p127 = por %p125, %p126
      %s129 = sadd.s32 %s128, 1
      %p132 = scmp.eq.s32.totalorder %s31, 1
      %p133 = scmp.ne.s32.totalorder %s128, %s130
      %p134 = scmp.eq.s32.totalorder %s31, 0
      %p135 = por %p133, %p134
      %p136 = scmp.ne.s32.totalorder %s128, %s130
      %p137 = scmp.eq.s32.totalorder %s36, 1
      %p138 = por %p136, %p137
      %p139 = scmp.ne.s32.totalorder %s130, %s131
      %p140 = scmp.eq.s32.totalorder %s36, 0
      %p141 = por %p139, %p140
      %p142 = scmp.ne.s32.totalorder %s130, %s131
      %p143 = scmp.eq.s32.totalorder %s37, 1
      %p144 = por %p142, %p143
      %p146 = scmp.ne.s32.totalorder %s131, %s145
      %p147 = scmp.eq.s32.totalorder %s37, 0
      %p148 = por %p146, %p147
      %s150 = sadd.s32 %s149, 1
      %p153 = scmp.eq.s32.totalorder %s31, 1
      %p154 = scmp.ne.s32.totalorder %s149, %s151
      %p155 = scmp.eq.s32.totalorder %s31, 0
      %p156 = por %p154, %p155
      %p157 = scmp.ne.s32.totalorder %s149, %s151
      %p158 = scmp.eq.s32.totalorder %s36, 1
      %p159 = por %p157, %p158
      %p160 = scmp.ne.s32.totalorder %s151, %s152
      %p161 = scmp.eq.s32.totalorder %s36, 0
      %p162 = por %p160, %p161
      %p163 = scmp.ne.s32.totalorder %s151, %s152
      %p164 = scmp.eq.s32.totalorder %s37, 1
      %p165 = por %p163, %p164
      %p167 = scmp.ne.s32.totalorder %s152, %s166
      %p168 = scmp.eq.s32.totalorder %s37, 0
      %p169 = por %p167, %p168
      %s171 = sadd.s32 %s170, 1
      %p174 = scmp.eq.s32.totalorder %s31, 1
      %p175 = scmp.ne.s32.totalorder %s170, %s172
      %p176 = scmp.eq.s32.totalorder %s31, 0
      %p177 = por %p175, %p176
      %p178 = scmp.ne.s32.totalorder %s170, %s172
      %p179 = scmp.eq.s32.totalorder %s36, 1
      %p180 = por %p178, %p179
      %p181 = scmp.ne.s32.totalorder %s172, %s173
      %p182 = scmp.eq.s32.totalorder %s36, 0
      %p183 = por %p181, %p182
      %p184 = scmp.ne.s32.totalorder %s172, %s173
      %p185 = scmp.eq.s32.totalorder %s37, 1
      %p186 = por %p184, %p185
      %p188 = scmp.ne.s32.totalorder %s173, %s187
      %p189 = scmp.eq.s32.totalorder %s37, 0
      %p190 = por %p188, %p189
      %s192 = sadd.s32 %s191, 1
      %p195 = scmp.eq.s32.totalorder %s31, 1
      %p196 = scmp.ne.s32.totalorder %s191, %s193
      %p197 = scmp.eq.s32.totalorder %s31, 0
      %p198 = por %p196, %p197
      %p199 = scmp.ne.s32.totalorder %s191, %s193
      %p200 = scmp.eq.s32.totalorder %s36, 1
      %p201 = por %p199, %p200
      %p202 = scmp.ne.s32.totalorder %s193, %s194
      %p203 = scmp.eq.s32.totalorder %s36, 0
      %p204 = por %p202, %p203
      %p205 = scmp.ne.s32.totalorder %s193, %s194
      %p206 = scmp.eq.s32.totalorder %s37, 1
      %p207 = por %p205, %p206
      %p209 = scmp.ne.s32.totalorder %s194, %s208
      %p210 = scmp.eq.s32.totalorder %s37, 0
      %p211 = por %p209, %p210
      %s213 = sadd.s32 %s212, 1
      %p216 = scmp.eq.s32.totalorder %s31, 1
      %p217 = scmp.ne.s32.totalorder %s212, %s214
      %p218 = scmp.eq.s32.totalorder %s31, 0
      %p219 = por %p217, %p218
      %p220 = scmp.ne.s32.totalorder %s212, %s214
      %p221 = scmp.eq.s32.totalorder %s36, 1
      %p222 = por %p220, %p221
      %p223 = scmp.ne.s32.totalorder %s214, %s215
      %p224 = scmp.eq.s32.totalorder %s36, 0
      %p225 = por %p223, %p224
      %p226 = scmp.ne.s32.totalorder %s214, %s215
      %p227 = scmp.eq.s32.totalorder %s37, 1
      %p228 = por %p226, %p227
      %p230 = scmp.ne.s32.totalorder %s215, %s229
      %p231 = scmp.eq.s32.totalorder %s37, 0
      %p232 = por %p230, %p231
      %s234 = sadd.s32 %s233, 1
      %p237 = scmp.eq.s32.totalorder %s31, 1
      %p238 = scmp.ne.s32.totalorder %s233, %s235
      %p239 = scmp.eq.s32.totalorder %s31, 0
      %p240 = por %p238, %p239
      %p241 = scmp.ne.s32.totalorder %s233, %s235
      %p242 = scmp.eq.s32.totalorder %s36, 1
      %p243 = por %p241, %p242
      %p244 = scmp.ne.s32.totalorder %s235, %s236
      %p245 = scmp.eq.s32.totalorder %s36, 0
      %p246 = por %p244, %p245
      %p247 = scmp.ne.s32.totalorder %s235, %s236
      %p248 = scmp.eq.s32.totalorder %s37, 1
      %p249 = por %p247, %p248
      %p251 = scmp.ne.s32.totalorder %s236, %s250
      %p252 = scmp.eq.s32.totalorder %s37, 0
      %p253 = por %p251, %p252
      %s255 = sadd.s32 %s254, 1
      %p258 = scmp.eq.s32.totalorder %s31, 1
      %p259 = scmp.ne.s32.totalorder %s254, %s256
      %p260 = scmp.eq.s32.totalorder %s31, 0
      %p261 = por %p259, %p260
      %p262 = scmp.ne.s32.totalorder %s254, %s256
      %p263 = scmp.eq.s32.totalorder %s36, 1
      %p264 = por %p262, %p263
      %p265 = scmp.ne.s32.totalorder %s256, %s257
      %p266 = scmp.eq.s32.totalorder %s36, 0
      %p267 = por %p265, %p266
      %p268 = scmp.ne.s32.totalorder %s256, %s257
      %p269 = scmp.eq.s32.totalorder %s37, 1
      %p270 = por %p268, %p269
      %p272 = scmp.ne.s32.totalorder %s257, %s271
      %p273 = scmp.eq.s32.totalorder %s37, 0
      %p274 = por %p272, %p273
      %s275 = ssub.s32 %s31, %s38
      %p276 = scmp.eq.s32.totalorder %s275, 0
      %s278 = sadd.s32 %s277, 1
      %s279 = scalar_select %p276, %s277, %s278
      %p282 = pneg %p276
      %p283 = scmp.eq.s32.totalorder %s31, 1
      %p284 = por %p282, %p283
      %p285 = scmp.ne.s32.totalorder %s277, %s280
      %p286 = scmp.eq.s32.totalorder %s31, 0
      %p287 = por %p285, %p286
      %p288 = scmp.ne.s32.totalorder %s277, %s280
      %p289 = scmp.eq.s32.totalorder %s36, 1
      %p290 = por %p288, %p289
      %p291 = scmp.ne.s32.totalorder %s280, %s281
      %p292 = scmp.eq.s32.totalorder %s36, 0
      %p293 = por %p291, %p292
      %p294 = scmp.ne.s32.totalorder %s280, %s281
      %p295 = scmp.eq.s32.totalorder %s37, 1
      %p296 = por %p294, %p295
      %p298 = scmp.ne.s32.totalorder %s281, %s297
      %p299 = scmp.eq.s32.totalorder %s37, 0
      %p300 = por %p298, %p299
      %s301 = ssub.s32 %s31, %s38
      %p302 = scmp.eq.s32.totalorder %s301, 0
      %s304 = sadd.s32 %s303, 1
      %s305 = scalar_select %p302, %s303, %s304
      %p308 = pneg %p302
      %p309 = scmp.eq.s32.totalorder %s31, 1
      %p310 = por %p308, %p309
      %p311 = scmp.ne.s32.totalorder %s303, %s306
      %p312 = scmp.eq.s32.totalorder %s31, 0
      %p313 = por %p311, %p312
      %p314 = scmp.ne.s32.totalorder %s303, %s306
      %p315 = scmp.eq.s32.totalorder %s36, 1
      %p316 = por %p314, %p315
      %p317 = scmp.ne.s32.totalorder %s306, %s307
      %p318 = scmp.eq.s32.totalorder %s36, 0
      %p319 = por %p317, %p318
      %p320 = scmp.ne.s32.totalorder %s306, %s307
      %p321 = scmp.eq.s32.totalorder %s37, 1
      %p322 = por %p320, %p321
      %p324 = scmp.ne.s32.totalorder %s307, %s323
      %p325 = scmp.eq.s32.totalorder %s37, 0
      %p326 = por %p324, %p325
      %s327 = ssub.s32 %s31, %s38
      %p328 = scmp.eq.s32.totalorder %s327, 0
      %s330 = sadd.s32 %s329, 1
      %s331 = scalar_select %p328, %s329, %s330
      %p334 = pneg %p328
      %p335 = scmp.eq.s32.totalorder %s31, 1
      %p336 = por %p334, %p335
      %p337 = scmp.ne.s32.totalorder %s329, %s332
      %p338 = scmp.eq.s32.totalorder %s31, 0
      %p339 = por %p337, %p338
      %p340 = scmp.ne.s32.totalorder %s329, %s332
      %p341 = scmp.eq.s32.totalorder %s36, 1
      %p342 = por %p340, %p341
      %p343 = scmp.ne.s32.totalorder %s332, %s333
      %p344 = scmp.eq.s32.totalorder %s36, 0
      %p345 = por %p343, %p344
      %p346 = scmp.ne.s32.totalorder %s332, %s333
      %p347 = scmp.eq.s32.totalorder %s37, 1
      %p348 = por %p346, %p347
      %p350 = scmp.ne.s32.totalorder %s333, %s349
      %p351 = scmp.eq.s32.totalorder %s37, 0
      %p352 = por %p350, %p351
      %p353 = scmp.le.s32.totalorder 1, %s31
      %p354 = scmp.lt.s32.totalorder %s31, 3
      %p355 = pnand %p353, %p354
      %p356 = pneg %p355
      // Predicated region
      $region9: #{tpu_custom_call.1} parent=5 // pred_check
        _
      $region10: #{tpu_custom_call.1} parent=5 // pred_check_branch
        %358 = sbr.rel (%p355) target = $region12
      $region11: #{tpu_custom_call.1} parent=5 // pred_region
        %s359 = ssub.s32 %s31, 1
        // Predicated region
        $region13: #{tpu_custom_call.1} parent=11 // pred_check
          %p360 = pneg %p78
        $region14: #{tpu_custom_call.1} parent=11 // pred_check_branch
          %362 = sbr.rel (%p360) target = $region16
        $region15: #{tpu_custom_call.1} parent=11 // pred_region
          %s364 = ssub.s32 1024, 1024
          %365 = vsyncadd [#allocation6], %s364
          %s366 = sshll.u32 [#allocation5], 4
          %s367 = int_to_ptr.vmem [resolvable:$true] %s366
          %372 = dma.hbm_to_vmem [thread:$0]  %s1, 1024, %s367, [#allocation6], 64, 64, 4
        $region16: #{tpu_custom_call.1} parent=11 // pred_fallthru
          _
        // Predicated region
        $region17: #{tpu_custom_call.1} parent=11 // pred_check
          %p373 = pneg %p99
        $region18: #{tpu_custom_call.1} parent=11 // pred_check_branch
          %375 = sbr.rel (%p373) target = $region20
        $region19: #{tpu_custom_call.1} parent=11 // pred_region
          _
        $region20: #{tpu_custom_call.1} parent=11 // pred_fallthru
          _
        // Predicated region
        $region21: #{tpu_custom_call.1} parent=11 // pred_check
          %p376 = pneg %p120
        $region22: #{tpu_custom_call.1} parent=11 // pred_check_branch
          %378 = sbr.rel (%p376) target = $region24
        $region23: #{tpu_custom_call.1} parent=11 // pred_region
          %s380 = ssub.s32 1024, 1024
          %381 = vsyncadd [#allocation6], %s380
          %s382 = sshll.u32 [#allocation7], 4
          %s383 = int_to_ptr.vmem [resolvable:$true] %s382
          %388 = dma.hbm_to_vmem [thread:$0]  %s3, 1024, %s383, [#allocation6], 64, 64, 4
        $region24: #{tpu_custom_call.1} parent=11 // pred_fallthru
          _
        // Predicated region
        $region25: #{tpu_custom_call.1} parent=11 // pred_check
          %p389 = pneg %p141
        $region26: #{tpu_custom_call.1} parent=11 // pred_check_branch
          %391 = sbr.rel (%p389) target = $region28
        $region27: #{tpu_custom_call.1} parent=11 // pred_region
          _
        $region28: #{tpu_custom_call.1} parent=11 // pred_fallthru
          _
        // Predicated region
        $region29: #{tpu_custom_call.1} parent=11 // pred_check
          %p392 = pneg %p162
        $region30: #{tpu_custom_call.1} parent=11 // pred_check_branch
          %394 = sbr.rel (%p392) target = $region32
        $region31: #{tpu_custom_call.1} parent=11 // pred_region
          _
        $region32: #{tpu_custom_call.1} parent=11 // pred_fallthru
          _
        // Predicated region
        $region33: #{tpu_custom_call.1} parent=11 // pred_check
          %p395 = pneg %p183
        $region34: #{tpu_custom_call.1} parent=11 // pred_check_branch
          %397 = sbr.rel (%p395) target = $region36
        $region35: #{tpu_custom_call.1} parent=11 // pred_region
          _
        $region36: #{tpu_custom_call.1} parent=11 // pred_fallthru
          _
        // Predicated region
        $region37: #{tpu_custom_call.1} parent=11 // pred_check
          %p398 = pneg %p204
        $region38: #{tpu_custom_call.1} parent=11 // pred_check_branch
          %400 = sbr.rel (%p398) target = $region40
        $region39: #{tpu_custom_call.1} parent=11 // pred_region
          %s402 = ssub.s32 1024, 1024
          %403 = vsyncadd [#allocation9], %s402
          %s404 = sshll.u32 [#allocation8], 4
          %s405 = int_to_ptr.vmem [resolvable:$true] %s404
          %410 = dma.hbm_to_vmem [thread:$0]  %s7, 1024, %s405, [#allocation9], 64, 64, 4
        $region40: #{tpu_custom_call.1} parent=11 // pred_fallthru
          _
        // Predicated region
        $region41: #{tpu_custom_call.1} parent=11 // pred_check
          %p411 = pneg %p225
        $region42: #{tpu_custom_call.1} parent=11 // pred_check_branch
          %413 = sbr.rel (%p411) target = $region44
        $region43: #{tpu_custom_call.1} parent=11 // pred_region
          _
        $region44: #{tpu_custom_call.1} parent=11 // pred_fallthru
          _
        // Predicated region
        $region45: #{tpu_custom_call.1} parent=11 // pred_check
          %p414 = pneg %p246
        $region46: #{tpu_custom_call.1} parent=11 // pred_check_branch
          %416 = sbr.rel (%p414) target = $region48
        $region47: #{tpu_custom_call.1} parent=11 // pred_region
          %s418 = ssub.s32 1024, 1024
          %419 = vsyncadd [#allocation9], %s418
          %s420 = sshll.u32 [#allocation10], 4
          %s421 = int_to_ptr.vmem [resolvable:$true] %s420
          %426 = dma.hbm_to_vmem [thread:$0]  %s9, 1024, %s421, [#allocation9], 64, 64, 4
        $region48: #{tpu_custom_call.1} parent=11 // pred_fallthru
          _
        // Predicated region
        $region49: #{tpu_custom_call.1} parent=11 // pred_check
          %p427 = pneg %p267
        $region50: #{tpu_custom_call.1} parent=11 // pred_check_branch
          %429 = sbr.rel (%p427) target = $region52
        $region51: #{tpu_custom_call.1} parent=11 // pred_region
          _
        $region52: #{tpu_custom_call.1} parent=11 // pred_fallthru
          _
      $region12: #{tpu_custom_call.1} parent=5 // pred_fallthru
        _
      %p430 = scmp.lt.s32.totalorder %s31, 2
      // Predicated region
      $region53: #{tpu_custom_call.1} parent=5 // pred_check
        %p431 = pneg %p430
      $region54: #{tpu_custom_call.1} parent=5 // pred_check_branch
        %433 = sbr.rel (%p431) target = $region56
      $region55: #{tpu_custom_call.1} parent=5 // pred_region
        // Predicated region
        $region57: #{tpu_custom_call.1} parent=55 // pred_check
          %p434 = pneg %p51
        $region58: #{tpu_custom_call.1} parent=55 // pred_check_branch
          %436 = sbr.rel (%p434) target = $region60
        $region59: #{tpu_custom_call.1} parent=55 // pred_region
          %s437 = sand.u32 %s41, 1
          %s438 = scalar_lea.sflag [#allocation3], %s437
          %s439 = sand.u32 %s41, 1
          %s440 = smul.addr %s439, 64
          %s441 = scalar_lea.vmem [#allocation2], %s440
          %s442 = smul.u32 16, %s31
          %s444 = ssub.s32 1024, 1024
          %445 = vsyncadd %s438, %s444
          %s446 = smul.addr %s442, 64
          %s447 = scalar_lea.hbm %s0, %s446
          %s448 = sshll.u32 %s441, 4
          %s449 = int_to_ptr.vmem [resolvable:$true] %s448
          %454 = dma.hbm_to_vmem [thread:$0]  %s447, 1024, %s449, %s438, 64, 64, 4
        $region60: #{tpu_custom_call.1} parent=55 // pred_fallthru
          _
      $region56: #{tpu_custom_call.1} parent=5 // pred_fallthru
        _
      %p455 = scmp.le.s32.totalorder 1, %s31
      %p456 = scmp.lt.s32.totalorder %s31, 3
      %p457 = pnand %p455, %p456
      %p458 = pneg %p457
      // Predicated region
      $region61: #{tpu_custom_call.1} parent=5 // pred_check
        _
      $region62: #{tpu_custom_call.1} parent=5 // pred_check_branch
        %460 = sbr.rel (%p457) target = $region64
      $region63: #{tpu_custom_call.1} parent=5 // pred_region
        %s461 = ssub.s32 %s31, 1
        %s462 = sand.u32 %s44, 1
        %s463 = scalar_lea.sflag [#allocation3], %s462
        %s464 = sand.u32 %s44, 1
        %s465 = smul.addr %s464, 64
        %s466 = scalar_lea.vmem [#allocation2], %s465
        // Predicated region
        $region65: #{tpu_custom_call.1} parent=63 // pred_check
          %p467 = pneg %p57
        $region66: #{tpu_custom_call.1} parent=63 // pred_check_branch
          %469 = sbr.rel (%p467) target = $region68
        $region67: #{tpu_custom_call.1} parent=63 // pred_region
          %470 = dma.done %s463, 1024
        $region68: #{tpu_custom_call.1} parent=63 // pred_fallthru
          _
        // Predicated region
        $region69: #{tpu_custom_call.1} parent=63 // pred_check
          %p471 = pneg %p78
        $region70: #{tpu_custom_call.1} parent=63 // pred_check_branch
          %473 = sbr.rel (%p471) target = $region72
        $region71: #{tpu_custom_call.1} parent=63 // pred_region
          %474 = dma.done [#allocation6], 1024
        $region72: #{tpu_custom_call.1} parent=63 // pred_fallthru
          _
        // Predicated region
        $region73: #{tpu_custom_call.1} parent=63 // pred_check
          %p475 = pneg %p120
        $region74: #{tpu_custom_call.1} parent=63 // pred_check_branch
          %477 = sbr.rel (%p475) target = $region76
        $region75: #{tpu_custom_call.1} parent=63 // pred_region
          %478 = dma.done [#allocation6], 1024
        $region76: #{tpu_custom_call.1} parent=63 // pred_fallthru
          _
        // Predicated region
        $region77: #{tpu_custom_call.1} parent=63 // pred_check
          %p479 = pneg %p204
        $region78: #{tpu_custom_call.1} parent=63 // pred_check_branch
          %481 = sbr.rel (%p479) target = $region80
        $region79: #{tpu_custom_call.1} parent=63 // pred_region
          %482 = dma.done [#allocation9], 1024
        $region80: #{tpu_custom_call.1} parent=63 // pred_fallthru
          _
        // Predicated region
        $region81: #{tpu_custom_call.1} parent=63 // pred_check
          %p483 = pneg %p246
        $region82: #{tpu_custom_call.1} parent=63 // pred_check_branch
          %485 = sbr.rel (%p483) target = $region84
        $region83: #{tpu_custom_call.1} parent=63 // pred_region
          %486 = dma.done [#allocation9], 1024
        $region84: #{tpu_custom_call.1} parent=63 // pred_fallthru
          _
        %s487 = sand.u32 %s44, 1
        %s488 = scalar_lea.sflag [#allocation3], %s487
        %s489 = sand.u32 %s44, 1
        %s490 = smul.addr %s489, 64
        %s491 = scalar_lea.vmem [#allocation2], %s490
        %p492 = pneg %p57
        %p493 = pneg %p54
        %p494 = pneg %p78
        %p495 = pneg %p75
        %p496 = pneg %p99
        %p497 = pneg %p96
        %p498 = pneg %p120
        %p499 = pneg %p117
        %p500 = pneg %p141
        %p501 = pneg %p138
        %p502 = pneg %p162
        %p503 = pneg %p159
        %p504 = pneg %p183
        %p505 = pneg %p180
        %p506 = pneg %p204
        %p507 = pneg %p201
        %p508 = pneg %p225
        %p509 = pneg %p222
        %p510 = pneg %p246
        %p511 = pneg %p243
        %p512 = pneg %p267
        %p513 = pneg %p264
        %p514 = pneg %p293
        %p515 = pneg %p290
        %s516 = sand.u32 %s280, 1
        %s517 = scalar_lea.sflag [#allocation4], %s516
        %s518 = sand.u32 %s280, 1
        %s519 = smul.addr %s518, 8
        %s520 = scalar_lea.vmem [#allocation11], %s519
        %p521 = pneg %p319
        %p522 = pneg %p316
        %s523 = sand.u32 %s36, 1
        %s524 = scalar_lea.sflag [#allocation13], %s523
        %s525 = sand.u32 %s306, 1
        %s526 = smul.addr %s525, 8
        %s527 = scalar_lea.vmem [#allocation12], %s526
        %p528 = pneg %p345
        %p529 = pneg %p342
        %s530 = sand.u32 %s36, 1
        %s531 = scalar_lea.sflag [#allocation13], %s530
        %s532 = sand.u32 %s332, 1
        %s533 = smul.addr %s532, 8
        %s534 = scalar_lea.vmem [#allocation14], %s533
        %s535 = smul.u32 16, %s36
        %v537 = vld [vmem:[%s466] sm:$0xf]
        %v538 = vld [vmem:[%s466 + $0x4] sm:$0xf]
        %v539 = vld [vmem:[%s466 + $0x8] sm:$0xf]
        %v540 = vld [vmem:[%s466 + $0xc] sm:$0xf]
        %v541 = vld [vmem:[%s466 + $0x10] sm:$0xf]
        %v542 = vld [vmem:[%s466 + $0x14] sm:$0xf]
        %v543 = vld [vmem:[%s466 + $0x18] sm:$0xf]
        %v544 = vld [vmem:[%s466 + $0x1c] sm:$0xf]
        %v545 = vld [vmem:[%s466 + $0x20] sm:$0xf]
        %v546 = vld [vmem:[%s466 + $0x24] sm:$0xf]
        %v547 = vld [vmem:[%s466 + $0x28] sm:$0xf]
        %v548 = vld [vmem:[%s466 + $0x2c] sm:$0xf]
        %v549 = vld [vmem:[%s466 + $0x30] sm:$0xf]
        %v550 = vld [vmem:[%s466 + $0x34] sm:$0xf]
        %v551 = vld [vmem:[%s466 + $0x38] sm:$0xf]
        %v552 = vld [vmem:[%s466 + $0x3c] sm:$0xf]
        %v553 = vld [vmem:[#allocation5] sm:$0xf]
        %v554 = vld [vmem:[#allocation5 + $0x4] sm:$0xf]
        %v555 = vld [vmem:[#allocation5 + $0x8] sm:$0xf]
        %v556 = vld [vmem:[#allocation5 + $0xc] sm:$0xf]
        %v557 = vld [vmem:[#allocation5 + $0x10] sm:$0xf]
        %v558 = vld [vmem:[#allocation5 + $0x14] sm:$0xf]
        %v559 = vld [vmem:[#allocation5 + $0x18] sm:$0xf]
        %v560 = vld [vmem:[#allocation5 + $0x1c] sm:$0xf]
        %v561 = vld [vmem:[#allocation5 + $0x20] sm:$0xf]
        %v562 = vld [vmem:[#allocation5 + $0x24] sm:$0xf]
        %v563 = vld [vmem:[#allocation5 + $0x28] sm:$0xf]
        %v564 = vld [vmem:[#allocation5 + $0x2c] sm:$0xf]
        %v565 = vld [vmem:[#allocation5 + $0x30] sm:$0xf]
        %v566 = vld [vmem:[#allocation5 + $0x34] sm:$0xf]
        %v567 = vld [vmem:[#allocation5 + $0x38] sm:$0xf]
        %v568 = vld [vmem:[#allocation5 + $0x3c] sm:$0xf]
        %v569 = vld [vmem:[%s2] sm:$0x1]
        %v571 = vlaneseq
        %v572 = vshrl.u32 %v571, 7
        %v573 = vsub.s32 0, %v572
        %v574 = vrot.slane %v569, %v573
        %v592 = vunpack.c.l.b16 %v537
        %v593 = vunpack.c.l.b16 %v538
        %v594 = vunpack.c.l.b16 %v539
        %v595 = vunpack.c.l.b16 %v540
        %v596 = vunpack.c.l.b16 %v541
        %v597 = vunpack.c.l.b16 %v542
        %v598 = vunpack.c.l.b16 %v543
        %v599 = vunpack.c.l.b16 %v544
        %v600 = vunpack.c.l.b16 %v545
        %v601 = vunpack.c.l.b16 %v546
        %v602 = vunpack.c.l.b16 %v547
        %v603 = vunpack.c.l.b16 %v548
        %v604 = vunpack.c.l.b16 %v549
        %v605 = vunpack.c.l.b16 %v550
        %v606 = vunpack.c.l.b16 %v551
        %v607 = vunpack.c.l.b16 %v552
        %v608 = vpack.c.b16 %v593, %v592
        %v609 = vpack.c.b16 %v595, %v594
        %v610 = vpack.c.b16 %v597, %v596
        %v611 = vpack.c.b16 %v599, %v598
        %v612 = vpack.c.b16 %v601, %v600
        %v613 = vpack.c.b16 %v603, %v602
        %v614 = vpack.c.b16 %v605, %v604
        %v615 = vpack.c.b16 %v607, %v606
        %v640 = vunpack.c.l.b16 %v553
        %v641 = vunpack.c.l.b16 %v554
        %v642 = vunpack.c.l.b16 %v555
        %v643 = vunpack.c.l.b16 %v556
        %v644 = vunpack.c.l.b16 %v557
        %v645 = vunpack.c.l.b16 %v558
        %v646 = vunpack.c.l.b16 %v559
        %v647 = vunpack.c.l.b16 %v560
        %v648 = vunpack.c.l.b16 %v561
        %v649 = vunpack.c.l.b16 %v562
        %v650 = vunpack.c.l.b16 %v563
        %v651 = vunpack.c.l.b16 %v564
        %v652 = vunpack.c.l.b16 %v565
        %v653 = vunpack.c.l.b16 %v566
        %v654 = vunpack.c.l.b16 %v567
        %v655 = vunpack.c.l.b16 %v568
        %v656 = vpack.c.b16 %v641, %v640
        %v657 = vpack.c.b16 %v643, %v642
        %v658 = vpack.c.b16 %v645, %v644
        %v659 = vpack.c.b16 %v647, %v646
        %v660 = vpack.c.b16 %v649, %v648
        %v661 = vpack.c.b16 %v651, %v650
        %v662 = vpack.c.b16 %v653, %v652
        %v663 = vpack.c.b16 %v655, %v654
        %672 = vmatprep.subr.bf16.mxu0 0
        %673 = vmatpush1.bf16.msra.mxu0 %v663
        %674 = vmatprep.subr.bf16.mxu0 0
        %675 = vmatpush1.bf16.msra.mxu0 %v662
        %676 = vmatprep.subr.bf16.mxu0 0
        %677 = vmatpush1.bf16.msra.mxu0 %v661
        %678 = vmatprep.subr.bf16.mxu0 0
        %679 = vmatpush1.bf16.msra.mxu0 %v660
        %680 = vmatprep.subr.bf16.mxu0 0
        %681 = vmatpush1.bf16.msra.mxu0 %v659
        %682 = vmatprep.subr.bf16.mxu0 0
        %683 = vmatpush1.bf16.msra.mxu0 %v658
        %684 = vmatprep.subr.bf16.mxu0 0
        %685 = vmatpush1.bf16.msra.mxu0 %v657
        %686 = vmatprep.subr.bf16.mxu0 0
        %687 = vmatpush1.bf16.msra.mxu0 %v656
        %688 = vmatprep.subr.bf16.mxu0 0
        %689 = vmatpush2.bf16.msra.mxu0 0
        %690 = vmatprep.subr.bf16.mxu0 0
        %691 = vmatpush2.bf16.msra.mxu0 0
        %692 = vmatprep.subr.bf16.mxu0 0
        %693 = vmatpush2.bf16.msra.mxu0 0
        %694 = vmatprep.subr.bf16.mxu0 0
        %695 = vmatpush2.bf16.msra.mxu0 0
        %696 = vmatprep.subr.bf16.mxu0 0
        %697 = vmatpush2.bf16.msra.mxu0 0
        %698 = vmatprep.subr.bf16.mxu0 0
        %699 = vmatpush2.bf16.msra.mxu0 0
        %700 = vmatprep.subr.bf16.mxu0 0
        %701 = vmatpush2.bf16.msra.mxu0 0
        %702 = vmatprep.subr.bf16.mxu0 0
        %703 = vmatpush2.bf16.msra.mxu0 0
        %704 = vmatprep.mubr.bf16.mxu0 0
        %705 = vmatmul.mubr.bf16.gmra.mxu0 %v608
        %v706 = vpop.f32.mrf.mxu0
        %v707 = vadd.f32 %v574, %v706
        %v708 = vpop.f32.mrf.mxu0
        %v709 = vpop.f32.mrf.mxu0
        %v710 = vadd.f32 %v574, %v709
        %v711 = vpop.f32.mrf.mxu0
        %712 = vmatprep.mubr.bf16.mxu0 0
        %713 = vmatmul.mubr.bf16.gmra.mxu0 %v609
        %v714 = vpop.f32.mrf.mxu0
        %v715 = vadd.f32 %v574, %v714
        %v716 = vpop.f32.mrf.mxu0
        %v717 = vpop.f32.mrf.mxu0
        %v718 = vadd.f32 %v574, %v717
        %v719 = vpop.f32.mrf.mxu0
        %720 = vmatprep.mubr.bf16.mxu0 0
        %721 = vmatmul.mubr.bf16.gmra.mxu0 %v610
        %v722 = vpop.f32.mrf.mxu0
        %v723 = vadd.f32 %v574, %v722
        %v724 = vpop.f32.mrf.mxu0
        %v725 = vpop.f32.mrf.mxu0
        %v726 = vadd.f32 %v574, %v725
        %v727 = vpop.f32.mrf.mxu0
        %728 = vmatprep.mubr.bf16.mxu0 0
        %729 = vmatmul.mubr.bf16.gmra.mxu0 %v611
        %v730 = vpop.f32.mrf.mxu0
        %v731 = vadd.f32 %v574, %v730
        %v732 = vpop.f32.mrf.mxu0
        %v733 = vpop.f32.mrf.mxu0
        %v734 = vadd.f32 %v574, %v733
        %v735 = vpop.f32.mrf.mxu0
        %736 = vmatprep.mubr.bf16.mxu0 0
        %737 = vmatmul.mubr.bf16.gmra.mxu0 %v612
        %v738 = vpop.f32.mrf.mxu0
        %v739 = vadd.f32 %v574, %v738
        %v740 = vpop.f32.mrf.mxu0
        %v741 = vpop.f32.mrf.mxu0
        %v742 = vadd.f32 %v574, %v741
        %v743 = vpop.f32.mrf.mxu0
        %744 = vmatprep.mubr.bf16.mxu0 0
        %745 = vmatmul.mubr.bf16.gmra.mxu0 %v613
        %v746 = vpop.f32.mrf.mxu0
        %v747 = vadd.f32 %v574, %v746
        %v748 = vpop.f32.mrf.mxu0
        %v749 = vpop.f32.mrf.mxu0
        %v750 = vadd.f32 %v574, %v749
        %v751 = vpop.f32.mrf.mxu0
        %752 = vmatprep.mubr.bf16.mxu0 0
        %753 = vmatmul.mubr.bf16.gmra.mxu0 %v614
        %v754 = vpop.f32.mrf.mxu0
        %v755 = vadd.f32 %v574, %v754
        %v756 = vpop.f32.mrf.mxu0
        %v757 = vpop.f32.mrf.mxu0
        %v758 = vadd.f32 %v574, %v757
        %v759 = vpop.f32.mrf.mxu0
        %760 = vmatprep.mubr.bf16.mxu0 0
        %761 = vmatmul.mubr.bf16.gmra.mxu0 %v615
        %v762 = vpop.f32.mrf.mxu0
        %v763 = vadd.f32 %v574, %v762
        %v764 = vpop.f32.mrf.mxu0
        %v765 = vpop.f32.mrf.mxu0
        %v766 = vadd.f32 %v574, %v765
        %v767 = vpop.f32.mrf.mxu0
        %768 = vdwg.mxu0
        %v769 = vmax.f32 %v707, 0.0
        %v770 = vmax.f32 %v710, 0.0
        %v771 = vmax.f32 %v715, 0.0
        %v772 = vmax.f32 %v718, 0.0
        %v773 = vmax.f32 %v723, 0.0
        %v774 = vmax.f32 %v726, 0.0
        %v775 = vmax.f32 %v731, 0.0
        %v776 = vmax.f32 %v734, 0.0
        %v777 = vmax.f32 %v739, 0.0
        %v778 = vmax.f32 %v742, 0.0
        %v779 = vmax.f32 %v747, 0.0
        %v780 = vmax.f32 %v750, 0.0
        %v781 = vmax.f32 %v755, 0.0
        %v782 = vmax.f32 %v758, 0.0
        %v783 = vmax.f32 %v763, 0.0
        %v784 = vmax.f32 %v766, 0.0
        %v785 = vpack.c.bf16 %v770, %v769
        %v786 = vpack.c.bf16 %v772, %v771
        %v787 = vpack.c.bf16 %v774, %v773
        %v788 = vpack.c.bf16 %v776, %v775
        %v789 = vpack.c.bf16 %v778, %v777
        %v790 = vpack.c.bf16 %v780, %v779
        %v791 = vpack.c.bf16 %v782, %v781
        %v792 = vpack.c.bf16 %v784, %v783
        %v793 = vld [vmem:[#allocation7] sm:$0xf]
        %v794 = vld [vmem:[#allocation7 + $0x4] sm:$0xf]
        %v795 = vld [vmem:[#allocation7 + $0x8] sm:$0xf]
        %v796 = vld [vmem:[#allocation7 + $0xc] sm:$0xf]
        %v797 = vld [vmem:[#allocation7 + $0x10] sm:$0xf]
        %v798 = vld [vmem:[#allocation7 + $0x14] sm:$0xf]
        %v799 = vld [vmem:[#allocation7 + $0x18] sm:$0xf]
        %v800 = vld [vmem:[#allocation7 + $0x1c] sm:$0xf]
        %v801 = vld [vmem:[#allocation7 + $0x20] sm:$0xf]
        %v802 = vld [vmem:[#allocation7 + $0x24] sm:$0xf]
        %v803 = vld [vmem:[#allocation7 + $0x28] sm:$0xf]
        %v804 = vld [vmem:[#allocation7 + $0x2c] sm:$0xf]
        %v805 = vld [vmem:[#allocation7 + $0x30] sm:$0xf]
        %v806 = vld [vmem:[#allocation7 + $0x34] sm:$0xf]
        %v807 = vld [vmem:[#allocation7 + $0x38] sm:$0xf]
        %v808 = vld [vmem:[#allocation7 + $0x3c] sm:$0xf]
        %v809 = vld [vmem:[%s4] sm:$0x1]
        %v811 = vlaneseq
        %v812 = vshrl.u32 %v811, 7
        %v813 = vsub.s32 0, %v812
        %v814 = vrot.slane %v809, %v813
        %v832 = vunpack.c.l.b16 %v793
        %v833 = vunpack.c.l.b16 %v794
        %v834 = vunpack.c.l.b16 %v795
        %v835 = vunpack.c.l.b16 %v796
        %v836 = vunpack.c.l.b16 %v797
        %v837 = vunpack.c.l.b16 %v798
        %v838 = vunpack.c.l.b16 %v799
        %v839 = vunpack.c.l.b16 %v800
        %v840 = vunpack.c.l.b16 %v801
        %v841 = vunpack.c.l.b16 %v802
        %v842 = vunpack.c.l.b16 %v803
        %v843 = vunpack.c.l.b16 %v804
        %v844 = vunpack.c.l.b16 %v805
        %v845 = vunpack.c.l.b16 %v806
        %v846 = vunpack.c.l.b16 %v807
        %v847 = vunpack.c.l.b16 %v808
        %v848 = vpack.c.b16 %v833, %v832
        %v849 = vpack.c.b16 %v835, %v834
        %v850 = vpack.c.b16 %v837, %v836
        %v851 = vpack.c.b16 %v839, %v838
        %v852 = vpack.c.b16 %v841, %v840
        %v853 = vpack.c.b16 %v843, %v842
        %v854 = vpack.c.b16 %v845, %v844
        %v855 = vpack.c.b16 %v847, %v846
        %864 = vmatprep.subr.bf16.mxu0 0
        %865 = vmatpush1.bf16.msra.mxu0 %v855
        %866 = vmatprep.subr.bf16.mxu0 0
        %867 = vmatpush1.bf16.msra.mxu0 %v854
        %868 = vmatprep.subr.bf16.mxu0 0
        %869 = vmatpush1.bf16.msra.mxu0 %v853
        %870 = vmatprep.subr.bf16.mxu0 0
        %871 = vmatpush1.bf16.msra.mxu0 %v852
        %872 = vmatprep.subr.bf16.mxu0 0
        %873 = vmatpush1.bf16.msra.mxu0 %v851
        %874 = vmatprep.subr.bf16.mxu0 0
        %875 = vmatpush1.bf16.msra.mxu0 %v850
        %876 = vmatprep.subr.bf16.mxu0 0
        %877 = vmatpush1.bf16.msra.mxu0 %v849
        %878 = vmatprep.subr.bf16.mxu0 0
        %879 = vmatpush1.bf16.msra.mxu0 %v848
        %880 = vmatprep.subr.bf16.mxu0 0
        %881 = vmatpush2.bf16.msra.mxu0 0
        %882 = vmatprep.subr.bf16.mxu0 0
        %883 = vmatpush2.bf16.msra.mxu0 0
        %884 = vmatprep.subr.bf16.mxu0 0
        %885 = vmatpush2.bf16.msra.mxu0 0
        %886 = vmatprep.subr.bf16.mxu0 0
        %887 = vmatpush2.bf16.msra.mxu0 0
        %888 = vmatprep.subr.bf16.mxu0 0
        %889 = vmatpush2.bf16.msra.mxu0 0
        %890 = vmatprep.subr.bf16.mxu0 0
        %891 = vmatpush2.bf16.msra.mxu0 0
        %892 = vmatprep.subr.bf16.mxu0 0
        %893 = vmatpush2.bf16.msra.mxu0 0
        %894 = vmatprep.subr.bf16.mxu0 0
        %895 = vmatpush2.bf16.msra.mxu0 0
        %896 = vmatprep.mubr.bf16.mxu0 0
        %897 = vmatmul.mubr.bf16.gmra.mxu0 %v785
        %v898 = vpop.f32.mrf.mxu0
        %v899 = vadd.f32 %v814, %v898
        %v900 = vpop.f32.mrf.mxu0
        %v901 = vpop.f32.mrf.mxu0
        %v902 = vadd.f32 %v814, %v901
        %v903 = vpop.f32.mrf.mxu0
        %904 = vmatprep.mubr.bf16.mxu0 0
        %905 = vmatmul.mubr.bf16.gmra.mxu0 %v786
        %v906 = vpop.f32.mrf.mxu0
        %v907 = vadd.f32 %v814, %v906
        %v908 = vpop.f32.mrf.mxu0
        %v909 = vpop.f32.mrf.mxu0
        %v910 = vadd.f32 %v814, %v909
        %v911 = vpop.f32.mrf.mxu0
        %912 = vmatprep.mubr.bf16.mxu0 0
        %913 = vmatmul.mubr.bf16.gmra.mxu0 %v787
        %v914 = vpop.f32.mrf.mxu0
        %v915 = vadd.f32 %v814, %v914
        %v916 = vpop.f32.mrf.mxu0
        %v917 = vpop.f32.mrf.mxu0
        %v918 = vadd.f32 %v814, %v917
        %v919 = vpop.f32.mrf.mxu0
        %920 = vmatprep.mubr.bf16.mxu0 0
        %921 = vmatmul.mubr.bf16.gmra.mxu0 %v788
        %v922 = vpop.f32.mrf.mxu0
        %v923 = vadd.f32 %v814, %v922
        %v924 = vpop.f32.mrf.mxu0
        %v925 = vpop.f32.mrf.mxu0
        %v926 = vadd.f32 %v814, %v925
        %v927 = vpop.f32.mrf.mxu0
        %928 = vmatprep.mubr.bf16.mxu0 0
        %929 = vmatmul.mubr.bf16.gmra.mxu0 %v789
        %v930 = vpop.f32.mrf.mxu0
        %v931 = vadd.f32 %v814, %v930
        %v932 = vpop.f32.mrf.mxu0
        %v933 = vpop.f32.mrf.mxu0
        %v934 = vadd.f32 %v814, %v933
        %v935 = vpop.f32.mrf.mxu0
        %936 = vmatprep.mubr.bf16.mxu0 0
        %937 = vmatmul.mubr.bf16.gmra.mxu0 %v790
        %v938 = vpop.f32.mrf.mxu0
        %v939 = vadd.f32 %v814, %v938
        %v940 = vpop.f32.mrf.mxu0
        %v941 = vpop.f32.mrf.mxu0
        %v942 = vadd.f32 %v814, %v941
        %v943 = vpop.f32.mrf.mxu0
        %944 = vmatprep.mubr.bf16.mxu0 0
        %945 = vmatmul.mubr.bf16.gmra.mxu0 %v791
        %v946 = vpop.f32.mrf.mxu0
        %v947 = vadd.f32 %v814, %v946
        %v948 = vpop.f32.mrf.mxu0
        %v949 = vpop.f32.mrf.mxu0
        %v950 = vadd.f32 %v814, %v949
        %v951 = vpop.f32.mrf.mxu0
        %952 = vmatprep.mubr.bf16.mxu0 0
        %953 = vmatmul.mubr.bf16.gmra.mxu0 %v792
        %v954 = vpop.f32.mrf.mxu0
        %v955 = vadd.f32 %v814, %v954
        %v956 = vpop.f32.mrf.mxu0
        %v957 = vpop.f32.mrf.mxu0
        %v958 = vadd.f32 %v814, %v957
        %v959 = vpop.f32.mrf.mxu0
        %960 = vdwg.mxu0
        %961 = vadd.xlane.f32.xlu0 %v899
        %v962 = vpop.xlane.xlu0 %961
        %963 = vadd.xlane.f32.xlu0 %v902
        %v964 = vpop.xlane.xlu0 %963
        %965 = vadd.xlane.f32.xlu0 %v907
        %v966 = vpop.xlane.xlu0 %965
        %967 = vadd.xlane.f32.xlu0 %v910
        %v968 = vpop.xlane.xlu0 %967
        %969 = vadd.xlane.f32.xlu0 %v915
        %v970 = vpop.xlane.xlu0 %969
        %971 = vadd.xlane.f32.xlu0 %v918
        %v972 = vpop.xlane.xlu0 %971
        %973 = vadd.xlane.f32.xlu0 %v923
        %v974 = vpop.xlane.xlu0 %973
        %975 = vadd.xlane.f32.xlu0 %v926
        %v976 = vpop.xlane.xlu0 %975
        %977 = vadd.xlane.f32.xlu0 %v931
        %v978 = vpop.xlane.xlu0 %977
        %979 = vadd.xlane.f32.xlu0 %v934
        %v980 = vpop.xlane.xlu0 %979
        %981 = vadd.xlane.f32.xlu0 %v939
        %v982 = vpop.xlane.xlu0 %981
        %983 = vadd.xlane.f32.xlu0 %v942
        %v984 = vpop.xlane.xlu0 %983
        %985 = vadd.xlane.f32.xlu0 %v947
        %v986 = vpop.xlane.xlu0 %985
        %987 = vadd.xlane.f32.xlu0 %v950
        %v988 = vpop.xlane.xlu0 %987
        %989 = vadd.xlane.f32.xlu0 %v955
        %v990 = vpop.xlane.xlu0 %989
        %991 = vadd.xlane.f32.xlu0 %v958
        %v992 = vpop.xlane.xlu0 %991
        %v993 = vmul.f32 %v962, 0.015625
        %v994 = vmul.f32 %v964, 0.015625
        %v995 = vmul.f32 %v966, 0.015625
        %v996 = vmul.f32 %v968, 0.015625
        %v997 = vmul.f32 %v970, 0.015625
        %v998 = vmul.f32 %v972, 0.015625
        %v999 = vmul.f32 %v974, 0.015625
        %v1000 = vmul.f32 %v976, 0.015625
        %v1001 = vmul.f32 %v978, 0.015625
        %v1002 = vmul.f32 %v980, 0.015625
        %v1003 = vmul.f32 %v982, 0.015625
        %v1004 = vmul.f32 %v984, 0.015625
        %v1005 = vmul.f32 %v986, 0.015625
        %v1006 = vmul.f32 %v988, 0.015625
        %v1007 = vmul.f32 %v990, 0.015625
        %v1008 = vmul.f32 %v992, 0.015625
        %v1009 = vlaneseq
        %v1010 = vand.u32 %v1009, 127
        %vm1011 = vcmp.lt.s32.totalorder %v1010, 64
        %v1012 = vsel %vm1011, 1, 0
        %v1013 = vcvt.s32.f32 %v1012
        %v1014 = vsub.f32 %v899, %v993
        %v1015 = vsub.f32 %v902, %v994
        %v1016 = vsub.f32 %v907, %v995
        %v1017 = vsub.f32 %v910, %v996
        %v1018 = vsub.f32 %v915, %v997
        %v1019 = vsub.f32 %v918, %v998
        %v1020 = vsub.f32 %v923, %v999
        %v1021 = vsub.f32 %v926, %v1000
        %v1022 = vsub.f32 %v931, %v1001
        %v1023 = vsub.f32 %v934, %v1002
        %v1024 = vsub.f32 %v939, %v1003
        %v1025 = vsub.f32 %v942, %v1004
        %v1026 = vsub.f32 %v947, %v1005
        %v1027 = vsub.f32 %v950, %v1006
        %v1028 = vsub.f32 %v955, %v1007
        %v1029 = vsub.f32 %v958, %v1008
        %v1030 = vmul.f32 %v1014, %v1013
        %v1031 = vmul.f32 %v1015, %v1013
        %v1032 = vmul.f32 %v1016, %v1013
        %v1033 = vmul.f32 %v1017, %v1013
        %v1034 = vmul.f32 %v1018, %v1013
        %v1035 = vmul.f32 %v1019, %v1013
        %v1036 = vmul.f32 %v1020, %v1013
        %v1037 = vmul.f32 %v1021, %v1013
        %v1038 = vmul.f32 %v1022, %v1013
        %v1039 = vmul.f32 %v1023, %v1013
        %v1040 = vmul.f32 %v1024, %v1013
        %v1041 = vmul.f32 %v1025, %v1013
        %v1042 = vmul.f32 %v1026, %v1013
        %v1043 = vmul.f32 %v1027, %v1013
        %v1044 = vmul.f32 %v1028, %v1013
        %v1045 = vmul.f32 %v1029, %v1013
        %v1046 = vmul.f32 %v1030, %v1030
        %v1047 = vmul.f32 %v1031, %v1031
        %v1048 = vmul.f32 %v1032, %v1032
        %v1049 = vmul.f32 %v1033, %v1033
        %v1050 = vmul.f32 %v1034, %v1034
        %v1051 = vmul.f32 %v1035, %v1035
        %v1052 = vmul.f32 %v1036, %v1036
        %v1053 = vmul.f32 %v1037, %v1037
        %v1054 = vmul.f32 %v1038, %v1038
        %v1055 = vmul.f32 %v1039, %v1039
        %v1056 = vmul.f32 %v1040, %v1040
        %v1057 = vmul.f32 %v1041, %v1041
        %v1058 = vmul.f32 %v1042, %v1042
        %v1059 = vmul.f32 %v1043, %v1043
        %v1060 = vmul.f32 %v1044, %v1044
        %v1061 = vmul.f32 %v1045, %v1045
        %1062 = vadd.xlane.f32.xlu0 %v1046
        %v1063 = vpop.xlane.xlu0 %1062
        %1064 = vadd.xlane.f32.xlu0 %v1047
        %v1065 = vpop.xlane.xlu0 %1064
        %1066 = vadd.xlane.f32.xlu0 %v1048
        %v1067 = vpop.xlane.xlu0 %1066
        %1068 = vadd.xlane.f32.xlu0 %v1049
        %v1069 = vpop.xlane.xlu0 %1068
        %1070 = vadd.xlane.f32.xlu0 %v1050
        %v1071 = vpop.xlane.xlu0 %1070
        %1072 = vadd.xlane.f32.xlu0 %v1051
        %v1073 = vpop.xlane.xlu0 %1072
        %1074 = vadd.xlane.f32.xlu0 %v1052
        %v1075 = vpop.xlane.xlu0 %1074
        %1076 = vadd.xlane.f32.xlu0 %v1053
        %v1077 = vpop.xlane.xlu0 %1076
        %1078 = vadd.xlane.f32.xlu0 %v1054
        %v1079 = vpop.xlane.xlu0 %1078
        %1080 = vadd.xlane.f32.xlu0 %v1055
        %v1081 = vpop.xlane.xlu0 %1080
        %1082 = vadd.xlane.f32.xlu0 %v1056
        %v1083 = vpop.xlane.xlu0 %1082
        %1084 = vadd.xlane.f32.xlu0 %v1057
        %v1085 = vpop.xlane.xlu0 %1084
        %1086 = vadd.xlane.f32.xlu0 %v1058
        %v1087 = vpop.xlane.xlu0 %1086
        %1088 = vadd.xlane.f32.xlu0 %v1059
        %v1089 = vpop.xlane.xlu0 %1088
        %1090 = vadd.xlane.f32.xlu0 %v1060
        %v1091 = vpop.xlane.xlu0 %1090
        %1092 = vadd.xlane.f32.xlu0 %v1061
        %v1093 = vpop.xlane.xlu0 %1092
        %v1094 = vmul.f32 %v1063, 0.015625
        %v1095 = vmul.f32 %v1065, 0.015625
        %v1096 = vmul.f32 %v1067, 0.015625
        %v1097 = vmul.f32 %v1069, 0.015625
        %v1098 = vmul.f32 %v1071, 0.015625
        %v1099 = vmul.f32 %v1073, 0.015625
        %v1100 = vmul.f32 %v1075, 0.015625
        %v1101 = vmul.f32 %v1077, 0.015625
        %v1102 = vmul.f32 %v1079, 0.015625
        %v1103 = vmul.f32 %v1081, 0.015625
        %v1104 = vmul.f32 %v1083, 0.015625
        %v1105 = vmul.f32 %v1085, 0.015625
        %v1106 = vmul.f32 %v1087, 0.015625
        %v1107 = vmul.f32 %v1089, 0.015625
        %v1108 = vmul.f32 %v1091, 0.015625
        %v1109 = vmul.f32 %v1093, 0.015625
        %v1110 = vadd.f32 %v1094, 1e-05
        %v1111 = vadd.f32 %v1095, 1e-05
        %v1112 = vadd.f32 %v1096, 1e-05
        %v1113 = vadd.f32 %v1097, 1e-05
        %v1114 = vadd.f32 %v1098, 1e-05
        %v1115 = vadd.f32 %v1099, 1e-05
        %v1116 = vadd.f32 %v1100, 1e-05
        %v1117 = vadd.f32 %v1101, 1e-05
        %v1118 = vadd.f32 %v1102, 1e-05
        %v1119 = vadd.f32 %v1103, 1e-05
        %v1120 = vadd.f32 %v1104, 1e-05
        %v1121 = vadd.f32 %v1105, 1e-05
        %v1122 = vadd.f32 %v1106, 1e-05
        %v1123 = vadd.f32 %v1107, 1e-05
        %v1124 = vadd.f32 %v1108, 1e-05
        %v1125 = vadd.f32 %v1109, 1e-05
        %v1126 = vrsqrt.pop %v1110
        %v1127 = vrsqrt.pop %v1111
        %v1128 = vrsqrt.pop %v1112
        %v1129 = vrsqrt.pop %v1113
        %v1130 = vrsqrt.pop %v1114
        %v1131 = vrsqrt.pop %v1115
        %v1132 = vrsqrt.pop %v1116
        %v1133 = vrsqrt.pop %v1117
        %v1134 = vrsqrt.pop %v1118
        %v1135 = vrsqrt.pop %v1119
        %v1136 = vrsqrt.pop %v1120
        %v1137 = vrsqrt.pop %v1121
        %v1138 = vrsqrt.pop %v1122
        %v1139 = vrsqrt.pop %v1123
        %v1140 = vrsqrt.pop %v1124
        %v1141 = vrsqrt.pop %v1125
        %v1142 = vmul.f32 %v1030, %v1126
        %v1143 = vmul.f32 %v1031, %v1127
        %v1144 = vmul.f32 %v1032, %v1128
        %v1145 = vmul.f32 %v1033, %v1129
        %v1146 = vmul.f32 %v1034, %v1130
        %v1147 = vmul.f32 %v1035, %v1131
        %v1148 = vmul.f32 %v1036, %v1132
        %v1149 = vmul.f32 %v1037, %v1133
        %v1150 = vmul.f32 %v1038, %v1134
        %v1151 = vmul.f32 %v1039, %v1135
        %v1152 = vmul.f32 %v1040, %v1136
        %v1153 = vmul.f32 %v1041, %v1137
        %v1154 = vmul.f32 %v1042, %v1138
        %v1155 = vmul.f32 %v1043, %v1139
        %v1156 = vmul.f32 %v1044, %v1140
        %v1157 = vmul.f32 %v1045, %v1141
        %v1158 = vld [vmem:[%s5] sm:$0x1]
        %v1160 = vlaneseq
        %v1161 = vshrl.u32 %v1160, 7
        %v1162 = vsub.s32 0, %v1161
        %v1163 = vrot.slane %v1158, %v1162
        %v1165 = vmul.f32 %v1142, %v1163
        %v1166 = vmul.f32 %v1143, %v1163
        %v1167 = vmul.f32 %v1144, %v1163
        %v1168 = vmul.f32 %v1145, %v1163
        %v1169 = vmul.f32 %v1146, %v1163
        %v1170 = vmul.f32 %v1147, %v1163
        %v1171 = vmul.f32 %v1148, %v1163
        %v1172 = vmul.f32 %v1149, %v1163
        %v1173 = vmul.f32 %v1150, %v1163
        %v1174 = vmul.f32 %v1151, %v1163
        %v1175 = vmul.f32 %v1152, %v1163
        %v1176 = vmul.f32 %v1153, %v1163
        %v1177 = vmul.f32 %v1154, %v1163
        %v1178 = vmul.f32 %v1155, %v1163
        %v1179 = vmul.f32 %v1156, %v1163
        %v1180 = vmul.f32 %v1157, %v1163
        %v1181 = vld [vmem:[%s6] sm:$0x1]
        %v1183 = vlaneseq
        %v1184 = vshrl.u32 %v1183, 7
        %v1185 = vsub.s32 0, %v1184
        %v1186 = vrot.slane %v1181, %v1185
        %v1188 = vadd.f32 %v1165, %v1186
        %v1189 = vadd.f32 %v1166, %v1186
        %v1190 = vadd.f32 %v1167, %v1186
        %v1191 = vadd.f32 %v1168, %v1186
        %v1192 = vadd.f32 %v1169, %v1186
        %v1193 = vadd.f32 %v1170, %v1186
        %v1194 = vadd.f32 %v1171, %v1186
        %v1195 = vadd.f32 %v1172, %v1186
        %v1196 = vadd.f32 %v1173, %v1186
        %v1197 = vadd.f32 %v1174, %v1186
        %v1198 = vadd.f32 %v1175, %v1186
        %v1199 = vadd.f32 %v1176, %v1186
        %v1200 = vadd.f32 %v1177, %v1186
        %v1201 = vadd.f32 %v1178, %v1186
        %v1202 = vadd.f32 %v1179, %v1186
        %v1203 = vadd.f32 %v1180, %v1186
        %v1204 = vadd.f32 %v1188, %v1189
        %v1205 = vrot.slane %v1204, 4
        %v1206 = vadd.f32 %v1204, %v1205
        %v1207 = vrot.slane %v1206, 2
        %v1208 = vadd.f32 %v1206, %v1207
        %v1209 = vrot.slane %v1208, 1
        %v1210 = vadd.f32 %v1208, %v1209
        %v1211 = vadd.f32 %v1190, %v1191
        %v1212 = vrot.slane %v1211, 4
        %v1213 = vadd.f32 %v1211, %v1212
        %v1214 = vrot.slane %v1213, 2
        %v1215 = vadd.f32 %v1213, %v1214
        %v1216 = vrot.slane %v1215, 1
        %v1217 = vadd.f32 %v1215, %v1216
        %v1218 = vadd.f32 %v1192, %v1193
        %v1219 = vrot.slane %v1218, 4
        %v1220 = vadd.f32 %v1218, %v1219
        %v1221 = vrot.slane %v1220, 2
        %v1222 = vadd.f32 %v1220, %v1221
        %v1223 = vrot.slane %v1222, 1
        %v1224 = vadd.f32 %v1222, %v1223
        %v1225 = vadd.f32 %v1194, %v1195
        %v1226 = vrot.slane %v1225, 4
        %v1227 = vadd.f32 %v1225, %v1226
        %v1228 = vrot.slane %v1227, 2
        %v1229 = vadd.f32 %v1227, %v1228
        %v1230 = vrot.slane %v1229, 1
        %v1231 = vadd.f32 %v1229, %v1230
        %v1232 = vadd.f32 %v1196, %v1197
        %v1233 = vrot.slane %v1232, 4
        %v1234 = vadd.f32 %v1232, %v1233
        %v1235 = vrot.slane %v1234, 2
        %v1236 = vadd.f32 %v1234, %v1235
        %v1237 = vrot.slane %v1236, 1
        %v1238 = vadd.f32 %v1236, %v1237
        %v1239 = vadd.f32 %v1198, %v1199
        %v1240 = vrot.slane %v1239, 4
        %v1241 = vadd.f32 %v1239, %v1240
        %v1242 = vrot.slane %v1241, 2
        %v1243 = vadd.f32 %v1241, %v1242
        %v1244 = vrot.slane %v1243, 1
        %v1245 = vadd.f32 %v1243, %v1244
        %v1246 = vadd.f32 %v1200, %v1201
        %v1247 = vrot.slane %v1246, 4
        %v1248 = vadd.f32 %v1246, %v1247
        %v1249 = vrot.slane %v1248, 2
        %v1250 = vadd.f32 %v1248, %v1249
        %v1251 = vrot.slane %v1250, 1
        %v1252 = vadd.f32 %v1250, %v1251
        %v1253 = vadd.f32 %v1202, %v1203
        %v1254 = vrot.slane %v1253, 4
        %v1255 = vadd.f32 %v1253, %v1254
        %v1256 = vrot.slane %v1255, 2
        %v1257 = vadd.f32 %v1255, %v1256
        %v1258 = vrot.slane %v1257, 1
        %v1259 = vadd.f32 %v1257, %v1258
        %v1260 = vmul.f32 %v1210, 0.0625
        %v1261 = vmul.f32 %v1217, 0.0625
        %v1262 = vmul.f32 %v1224, 0.0625
        %v1263 = vmul.f32 %v1231, 0.0625
        %v1264 = vmul.f32 %v1238, 0.0625
        %v1265 = vmul.f32 %v1245, 0.0625
        %v1266 = vmul.f32 %v1252, 0.0625
        %v1267 = vmul.f32 %v1259, 0.0625
        %vm1276 = vcmask 1041409
        %v1277 = vsel %vm1276, %v1261, %v1260
        %vm1278 = vcmask 1042434
        %v1279 = vsel %vm1278, %v1262, %v1277
        %vm1280 = vcmask 1043459
        %v1281 = vsel %vm1280, %v1263, %v1279
        %vm1282 = vcmask 1044484
        %v1283 = vsel %vm1282, %v1264, %v1281
        %vm1284 = vcmask 1045509
        %v1285 = vsel %vm1284, %v1265, %v1283
        %vm1286 = vcmask 1046534
        %v1287 = vsel %vm1286, %v1266, %v1285
        %vm1288 = vcmask 1047559
        %v1289 = vsel %vm1288, %v1267, %v1287
        %1291 = vst [vmem:[%s520] sm:$0xff] %v1289
        %v1292 = vpack.c.bf16 %v1260, %v1260
        %v1293 = vpack.c.bf16 %v1261, %v1261
        %v1294 = vpack.c.bf16 %v1262, %v1262
        %v1295 = vpack.c.bf16 %v1263, %v1263
        %v1296 = vpack.c.bf16 %v1264, %v1264
        %v1297 = vpack.c.bf16 %v1265, %v1265
        %v1298 = vpack.c.bf16 %v1266, %v1266
        %v1299 = vpack.c.bf16 %v1267, %v1267
        %v1300 = vld [vmem:[#allocation8] sm:$0xf]
        %v1301 = vld [vmem:[#allocation8 + $0x4] sm:$0xf]
        %v1302 = vld [vmem:[#allocation8 + $0x8] sm:$0xf]
        %v1303 = vld [vmem:[#allocation8 + $0xc] sm:$0xf]
        %v1304 = vld [vmem:[#allocation8 + $0x10] sm:$0xf]
        %v1305 = vld [vmem:[#allocation8 + $0x14] sm:$0xf]
        %v1306 = vld [vmem:[#allocation8 + $0x18] sm:$0xf]
        %v1307 = vld [vmem:[#allocation8 + $0x1c] sm:$0xf]
        %v1308 = vld [vmem:[#allocation8 + $0x20] sm:$0xf]
        %v1309 = vld [vmem:[#allocation8 + $0x24] sm:$0xf]
        %v1310 = vld [vmem:[#allocation8 + $0x28] sm:$0xf]
        %v1311 = vld [vmem:[#allocation8 + $0x2c] sm:$0xf]
        %v1312 = vld [vmem:[#allocation8 + $0x30] sm:$0xf]
        %v1313 = vld [vmem:[#allocation8 + $0x34] sm:$0xf]
        %v1314 = vld [vmem:[#allocation8 + $0x38] sm:$0xf]
        %v1315 = vld [vmem:[#allocation8 + $0x3c] sm:$0xf]
        %v1316 = vld [vmem:[%s8] sm:$0x1]
        %v1318 = vlaneseq
        %v1319 = vshrl.u32 %v1318, 7
        %v1320 = vsub.s32 0, %v1319
        %v1321 = vrot.slane %v1316, %v1320
        %v1331 = vunpack.c.l.b16 %v1292
        %v1332 = vunpack.c.l.b16 %v1293
        %v1333 = vunpack.c.l.b16 %v1294
        %v1334 = vunpack.c.l.b16 %v1295
        %v1335 = vunpack.c.l.b16 %v1296
        %v1336 = vunpack.c.l.b16 %v1297
        %v1337 = vunpack.c.l.b16 %v1298
        %v1338 = vunpack.c.l.b16 %v1299
        %v1339 = vsel %vm1276, %v1332, %v1331
        %v1340 = vsel %vm1278, %v1333, %v1339
        %v1341 = vsel %vm1280, %v1334, %v1340
        %v1342 = vsel %vm1282, %v1335, %v1341
        %v1343 = vsel %vm1284, %v1336, %v1342
        %v1344 = vsel %vm1286, %v1337, %v1343
        %v1345 = vsel %vm1288, %v1338, %v1344
        %v1346 = vpack.c.b16 %v1345, %v1345
        %v1364 = vunpack.c.l.b16 %v1300
        %v1365 = vunpack.c.l.b16 %v1301
        %v1366 = vunpack.c.l.b16 %v1302
        %v1367 = vunpack.c.l.b16 %v1303
        %v1368 = vunpack.c.l.b16 %v1304
        %v1369 = vunpack.c.l.b16 %v1305
        %v1370 = vunpack.c.l.b16 %v1306
        %v1371 = vunpack.c.l.b16 %v1307
        %v1372 = vunpack.c.l.b16 %v1308
        %v1373 = vunpack.c.l.b16 %v1309
        %v1374 = vunpack.c.l.b16 %v1310
        %v1375 = vunpack.c.l.b16 %v1311
        %v1376 = vunpack.c.l.b16 %v1312
        %v1377 = vunpack.c.l.b16 %v1313
        %v1378 = vunpack.c.l.b16 %v1314
        %v1379 = vunpack.c.l.b16 %v1315
        %v1380 = vpack.c.b16 %v1365, %v1364
        %v1381 = vpack.c.b16 %v1367, %v1366
        %v1382 = vpack.c.b16 %v1369, %v1368
        %v1383 = vpack.c.b16 %v1371, %v1370
        %v1384 = vpack.c.b16 %v1373, %v1372
        %v1385 = vpack.c.b16 %v1375, %v1374
        %v1386 = vpack.c.b16 %v1377, %v1376
        %v1387 = vpack.c.b16 %v1379, %v1378
        %1396 = vmatprep.subr.bf16.mxu0 0
        %1397 = vmatpush1.bf16.msra.mxu0 %v1387
        %1398 = vmatprep.subr.bf16.mxu0 0
        %1399 = vmatpush1.bf16.msra.mxu0 %v1386
        %1400 = vmatprep.subr.bf16.mxu0 0
        %1401 = vmatpush1.bf16.msra.mxu0 %v1385
        %1402 = vmatprep.subr.bf16.mxu0 0
        %1403 = vmatpush1.bf16.msra.mxu0 %v1384
        %1404 = vmatprep.subr.bf16.mxu0 0
        %1405 = vmatpush1.bf16.msra.mxu0 %v1383
        %1406 = vmatprep.subr.bf16.mxu0 0
        %1407 = vmatpush1.bf16.msra.mxu0 %v1382
        %1408 = vmatprep.subr.bf16.mxu0 0
        %1409 = vmatpush1.bf16.msra.mxu0 %v1381
        %1410 = vmatprep.subr.bf16.mxu0 0
        %1411 = vmatpush1.bf16.msra.mxu0 %v1380
        %1412 = vmatprep.subr.bf16.mxu0 0
        %1413 = vmatpush2.bf16.msra.mxu0 0
        %1414 = vmatprep.subr.bf16.mxu0 0
        %1415 = vmatpush2.bf16.msra.mxu0 0
        %1416 = vmatprep.subr.bf16.mxu0 0
        %1417 = vmatpush2.bf16.msra.mxu0 0
        %1418 = vmatprep.subr.bf16.mxu0 0
        %1419 = vmatpush2.bf16.msra.mxu0 0
        %1420 = vmatprep.subr.bf16.mxu0 0
        %1421 = vmatpush2.bf16.msra.mxu0 0
        %1422 = vmatprep.subr.bf16.mxu0 0
        %1423 = vmatpush2.bf16.msra.mxu0 0
        %1424 = vmatprep.subr.bf16.mxu0 0
        %1425 = vmatpush2.bf16.msra.mxu0 0
        %1426 = vmatprep.subr.bf16.mxu0 0
        %1427 = vmatpush2.bf16.msra.mxu0 0
        %1428 = vmatprep.mubr.bf16.mxu0 0
        %1429 = vmatmul.mubr.bf16.gmra.mxu0 %v1346
        %v1430 = vpop.f32.mrf.mxu0
        %v1431 = vadd.f32 %v1321, %v1430
        %v1432 = vpop.f32.mrf.mxu0
        %v1433 = vpop.f32.mrf.mxu0
        %v1434 = vpop.f32.mrf.mxu0
        %1435 = vdwg.mxu0
        %vm1436 = vcmp.ge.s32.totalorder %v1010, 32
        %vm1437 = vmand %vm1436, %vm1011
        %v1438 = vtanh.pop %v1431
        %v1439 = vmax.f32 %v1431, 0.0
        %v1440 = vsel %vm1437, %v1438, %v1439
        %1441 = vst [vmem:[%s534] sm:$0xff] %v1440
        %v1442 = vpack.c.bf16 %v1440, %v1440
        %v1443 = vld [vmem:[#allocation10] sm:$0xf]
        %v1444 = vld [vmem:[#allocation10 + $0x4] sm:$0xf]
        %v1445 = vld [vmem:[#allocation10 + $0x8] sm:$0xf]
        %v1446 = vld [vmem:[#allocation10 + $0xc] sm:$0xf]
        %v1447 = vld [vmem:[#allocation10 + $0x10] sm:$0xf]
        %v1448 = vld [vmem:[#allocation10 + $0x14] sm:$0xf]
        %v1449 = vld [vmem:[#allocation10 + $0x18] sm:$0xf]
        %v1450 = vld [vmem:[#allocation10 + $0x1c] sm:$0xf]
        %v1451 = vld [vmem:[#allocation10 + $0x20] sm:$0xf]
        %v1452 = vld [vmem:[#allocation10 + $0x24] sm:$0xf]
        %v1453 = vld [vmem:[#allocation10 + $0x28] sm:$0xf]
        %v1454 = vld [vmem:[#allocation10 + $0x2c] sm:$0xf]
        %v1455 = vld [vmem:[#allocation10 + $0x30] sm:$0xf]
        %v1456 = vld [vmem:[#allocation10 + $0x34] sm:$0xf]
        %v1457 = vld [vmem:[#allocation10 + $0x38] sm:$0xf]
        %v1458 = vld [vmem:[#allocation10 + $0x3c] sm:$0xf]
        %v1459 = vld [vmem:[%s10] sm:$0x1]
        %v1461 = vlaneseq
        %v1462 = vshrl.u32 %v1461, 7
        %v1463 = vsub.s32 0, %v1462
        %v1464 = vrot.slane %v1459, %v1463
        %v1482 = vunpack.c.l.b16 %v1443
        %v1483 = vunpack.c.l.b16 %v1444
        %v1484 = vunpack.c.l.b16 %v1445
        %v1485 = vunpack.c.l.b16 %v1446
        %v1486 = vunpack.c.l.b16 %v1447
        %v1487 = vunpack.c.l.b16 %v1448
        %v1488 = vunpack.c.l.b16 %v1449
        %v1489 = vunpack.c.l.b16 %v1450
        %v1490 = vunpack.c.l.b16 %v1451
        %v1491 = vunpack.c.l.b16 %v1452
        %v1492 = vunpack.c.l.b16 %v1453
        %v1493 = vunpack.c.l.b16 %v1454
        %v1494 = vunpack.c.l.b16 %v1455
        %v1495 = vunpack.c.l.b16 %v1456
        %v1496 = vunpack.c.l.b16 %v1457
        %v1497 = vunpack.c.l.b16 %v1458
        %v1498 = vpack.c.b16 %v1483, %v1482
        %v1499 = vpack.c.b16 %v1485, %v1484
        %v1500 = vpack.c.b16 %v1487, %v1486
        %v1501 = vpack.c.b16 %v1489, %v1488
        %v1502 = vpack.c.b16 %v1491, %v1490
        %v1503 = vpack.c.b16 %v1493, %v1492
        %v1504 = vpack.c.b16 %v1495, %v1494
        %v1505 = vpack.c.b16 %v1497, %v1496
        %1514 = vmatprep.subr.bf16.mxu0 0
        %1515 = vmatpush1.bf16.msra.mxu0 %v1505
        %1516 = vmatprep.subr.bf16.mxu0 0
        %1517 = vmatpush1.bf16.msra.mxu0 %v1504
        %1518 = vmatprep.subr.bf16.mxu0 0
        %1519 = vmatpush1.bf16.msra.mxu0 %v1503
        %1520 = vmatprep.subr.bf16.mxu0 0
        %1521 = vmatpush1.bf16.msra.mxu0 %v1502
        %1522 = vmatprep.subr.bf16.mxu0 0
        %1523 = vmatpush1.bf16.msra.mxu0 %v1501
        %1524 = vmatprep.subr.bf16.mxu0 0
        %1525 = vmatpush1.bf16.msra.mxu0 %v1500
        %1526 = vmatprep.subr.bf16.mxu0 0
        %1527 = vmatpush1.bf16.msra.mxu0 %v1499
        %1528 = vmatprep.subr.bf16.mxu0 0
        %1529 = vmatpush1.bf16.msra.mxu0 %v1498
        %1530 = vmatprep.subr.bf16.mxu0 0
        %1531 = vmatpush2.bf16.msra.mxu0 0
        %1532 = vmatprep.subr.bf16.mxu0 0
        %1533 = vmatpush2.bf16.msra.mxu0 0
        %1534 = vmatprep.subr.bf16.mxu0 0
        %1535 = vmatpush2.bf16.msra.mxu0 0
        %1536 = vmatprep.subr.bf16.mxu0 0
        %1537 = vmatpush2.bf16.msra.mxu0 0
        %1538 = vmatprep.subr.bf16.mxu0 0
        %1539 = vmatpush2.bf16.msra.mxu0 0
        %1540 = vmatprep.subr.bf16.mxu0 0
        %1541 = vmatpush2.bf16.msra.mxu0 0
        %1542 = vmatprep.subr.bf16.mxu0 0
        %1543 = vmatpush2.bf16.msra.mxu0 0
        %1544 = vmatprep.subr.bf16.mxu0 0
        %1545 = vmatpush2.bf16.msra.mxu0 0
        %1546 = vmatprep.mubr.bf16.mxu0 0
        %1547 = vmatmul.mubr.bf16.gmra.mxu0 %v1442
        %v1548 = vpop.f32.mrf.mxu0
        %v1549 = vadd.f32 %v1464, %v1548
        %v1550 = vpop.f32.mrf.mxu0
        %v1551 = vpop.f32.mrf.mxu0
        %v1552 = vpop.f32.mrf.mxu0
        %1553 = vdwg.mxu0
        %1554 = vst [vmem:[%s527] sm:$0xff] %v1549
        %s1555 = sand.u32 %s280, 1
        %s1556 = scalar_lea.sflag [#allocation4], %s1555
        %s1557 = sand.u32 %s280, 1
        %s1558 = smul.addr %s1557, 8
        %s1559 = scalar_lea.vmem [#allocation11], %s1558
        %s1560 = sand.u32 %s36, 1
        %s1561 = scalar_lea.sflag [#allocation13], %s1560
        %s1562 = sand.u32 %s306, 1
        %s1563 = smul.addr %s1562, 8
        %s1564 = scalar_lea.vmem [#allocation12], %s1563
        %s1565 = sand.u32 %s36, 1
        %s1566 = scalar_lea.sflag [#allocation13], %s1565
        %s1567 = sand.u32 %s332, 1
        %s1568 = smul.addr %s1567, 8
        %s1569 = scalar_lea.vmem [#allocation14], %s1568
        // Predicated region
        $region85: #{tpu_custom_call.1} parent=63 // pred_check
          %p1570 = pneg %p290
        $region86: #{tpu_custom_call.1} parent=63 // pred_check_branch
          %1572 = sbr.rel (%p1570) target = $region88
        $region87: #{tpu_custom_call.1} parent=63 // pred_region
          %s1574 = ssub.s32 128, 128
          %1575 = vsyncadd %s1556, %s1574
          %s1576 = smul.addr %s36, 128
          %s1577 = scalar_lea.hbm %s11, %s1576
          %s1579 = sshll.u32 %s1559, 4
          %s1580 = int_to_ptr.vmem [resolvable:$true] %s1579
          %1582 = dma.vmem_to_hbm [thread:$0]  %s1580, 128, %s1577, %s1556
        $region88: #{tpu_custom_call.1} parent=63 // pred_fallthru
          _
        // Predicated region
        $region89: #{tpu_custom_call.1} parent=63 // pred_check
          %p1583 = pneg %p316
        $region90: #{tpu_custom_call.1} parent=63 // pred_check_branch
          %1585 = sbr.rel (%p1583) target = $region92
        $region91: #{tpu_custom_call.1} parent=63 // pred_region
          %s1587 = ssub.s32 128, 128
          %1588 = vsyncadd %s1561, %s1587
          %s1589 = smul.addr %s36, 128
          %s1590 = scalar_lea.hbm %s12, %s1589
          %s1592 = sshll.u32 %s1564, 4
          %s1593 = int_to_ptr.vmem [resolvable:$true] %s1592
          %1595 = dma.vmem_to_hbm [thread:$0]  %s1593, 128, %s1590, %s1561
        $region92: #{tpu_custom_call.1} parent=63 // pred_fallthru
          _
        // Predicated region
        $region93: #{tpu_custom_call.1} parent=63 // pred_check
          %p1596 = pneg %p342
        $region94: #{tpu_custom_call.1} parent=63 // pred_check_branch
          %1598 = sbr.rel (%p1596) target = $region96
        $region95: #{tpu_custom_call.1} parent=63 // pred_region
          %s1600 = ssub.s32 128, 128
          %1601 = vsyncadd %s1566, %s1600
          %s1602 = smul.addr %s36, 128
          %s1603 = scalar_lea.hbm %s13, %s1602
          %s1605 = sshll.u32 %s1569, 4
          %s1606 = int_to_ptr.vmem [resolvable:$true] %s1605
          %1608 = dma.vmem_to_hbm [thread:$0]  %s1606, 128, %s1603, %s1566
        $region96: #{tpu_custom_call.1} parent=63 // pred_fallthru
          _
      $region64: #{tpu_custom_call.1} parent=5 // pred_fallthru
        _
      %p1609 = scmp.le.s32.totalorder 2, %s31
      // Predicated region
      $region97: #{tpu_custom_call.1} parent=5 // pred_check
        %p1610 = pneg %p1609
      $region98: #{tpu_custom_call.1} parent=5 // pred_check_branch
        %1612 = sbr.rel (%p1610) target = $region100
      $region99: #{tpu_custom_call.1} parent=5 // pred_region
        %s1613 = ssub.s32 %s31, 2
        // Predicated region
        $region101: #{tpu_custom_call.1} parent=99 // pred_check
          %p1614 = pneg %p296
        $region102: #{tpu_custom_call.1} parent=99 // pred_check_branch
          %1616 = sbr.rel (%p1614) target = $region104
        $region103: #{tpu_custom_call.1} parent=99 // pred_region
          %s1617 = sand.u32 %s281, 1
          %s1618 = scalar_lea.sflag [#allocation4], %s1617
          %s1619 = sand.u32 %s281, 1
          %s1620 = smul.addr %s1619, 8
          %s1621 = scalar_lea.vmem [#allocation11], %s1620
          %1622 = dma.done %s1618, 128
        $region104: #{tpu_custom_call.1} parent=99 // pred_fallthru
          _
        // Predicated region
        $region105: #{tpu_custom_call.1} parent=99 // pred_check
          %p1623 = pneg %p322
        $region106: #{tpu_custom_call.1} parent=99 // pred_check_branch
          %1625 = sbr.rel (%p1623) target = $region108
        $region107: #{tpu_custom_call.1} parent=99 // pred_region
          %s1626 = sand.u32 %s37, 1
          %s1627 = scalar_lea.sflag [#allocation13], %s1626
          %s1628 = sand.u32 %s307, 1
          %s1629 = smul.addr %s1628, 8
          %s1630 = scalar_lea.vmem [#allocation12], %s1629
          %1631 = dma.done %s1627, 128
        $region108: #{tpu_custom_call.1} parent=99 // pred_fallthru
          _
        // Predicated region
        $region109: #{tpu_custom_call.1} parent=99 // pred_check
          %p1632 = pneg %p348
        $region110: #{tpu_custom_call.1} parent=99 // pred_check_branch
          %1634 = sbr.rel (%p1632) target = $region112
        $region111: #{tpu_custom_call.1} parent=99 // pred_region
          %s1635 = sand.u32 %s37, 1
          %s1636 = scalar_lea.sflag [#allocation13], %s1635
          %s1637 = sand.u32 %s333, 1
          %s1638 = smul.addr %s1637, 8
          %s1639 = scalar_lea.vmem [#allocation14], %s1638
          %1640 = dma.done %s1636, 128
        $region112: #{tpu_custom_call.1} parent=99 // pred_fallthru
          _
      $region100: #{tpu_custom_call.1} parent=5 // pred_fallthru
        _
    $region6: #{tpu_custom_call.1} parent=1 // loop_footer
      %s35 = sadd.s32 1, %s31
    $region7: #{tpu_custom_call.1} parent=1 // loop_footer_branch
      %30 = sbr.rel target = $region3
    $region8: #{tpu_custom_call.1} parent=1 // loop_exit
      _
    %1641 = vsyncpa [#allocation3], 1
    %s1642 = scalar_lea.sflag [#allocation3], 1
    %1643 = vsyncpa %s1642, 1
    %1644 = vsyncpa [#allocation6], 1
    %1645 = vsyncpa [#allocation9], 1
    %1646 = vsyncpa [#allocation4], 1
    %s1647 = scalar_lea.sflag [#allocation4], 1
    %1648 = vsyncpa %s1647, 1
    %1649 = vsyncpa [#allocation13], 1
    %s1650 = scalar_lea.sflag [#allocation13], 1
    %1651 = vsyncpa %s1650, 1

</llo_original>
